<compile_context>
chip_gen: v6e
topology: v6e:2x2x1
jax: 0.10.0
libtpu: 0.0.40
codegen_flags: <defaults>
</compile_context>

<pallas_src>
import functools

import jax
import jax.numpy as jnp
from jax.experimental import pallas as pl
from jax.experimental.pallas import tpu as pltpu


def _hardswish(x):
    return x * jnp.clip(x + 3.0, 0.0, 6.0) * (1.0 / 6.0)


def _hardsigmoid(x):
    return jnp.clip(x + 3.0, 0.0, 6.0) * (1.0 / 6.0)


def _shift_rows(v, d):
    """out[r, :] = v[r + d, :], zero fill outside [0, R)."""
    if d == 0:
        return v
    R, L = v.shape
    z = jnp.zeros((abs(d), L), v.dtype)
    if d > 0:
        return jnp.concatenate([v[d:, :], z], axis=0)
    return jnp.concatenate([z, v[:R + d, :]], axis=0)


def _shift_cols(v, d, ch):
    """Shift by d *pixels* along the lane axis of a (rows, Wpix*ch) slab.

    out[r, w*ch + c] = v[r, (w + d)*ch + c], zero fill for out-of-range pixels.
    """
    if d == 0:
        return v
    R, L = v.shape
    n = abs(d) * ch
    z = jnp.zeros((R, n), v.dtype)
    if d > 0:
        return jnp.concatenate([v[:, n:], z], axis=1)
    return jnp.concatenate([z, v[:, :L - n]], axis=1)


def _make_kernel(H, W, H1, W1, Cin, Cout, E, k, stride, se, add, Bb):
    p = k // 2
    Lmid_full = W * E
    Lmid = W1 * E
    inv_hw = 1.0 / float(H1 * W1)

    def dw_conv(v, wfull):
        # v: (rows, Wpix*E) lane-dense; full-resolution 'same' stride-1 depthwise
        # conv computed entirely from register values (shift + multiply-add).
        acc = None
        for dh in range(k):
            vh = _shift_rows(v, dh - p)
            for dw in range(k):
                tap = _shift_cols(vh, dw - p, E)
                t = dh * k + dw
                term = tap * wfull[t:t + 1, :]      # (1, Wpix*E) broadcast row
                acc = term if acc is None else acc + term
        return acc

    def kernel(x_ref,
               wexp_ref, sexp_ref, bexp_ref,
               wdw1_ref, sdw1_ref, bdw1_ref,
               wse1_ref, bse1_ref, wse2_ref, bse2_ref, sw_ref,
               wdw2_ref, sdw2_ref, bdw2_ref,
               wproj_ref, sproj_ref, bproj_ref,
               o_ref):
        # Hoist the depthwise tap weights out of the tap loops (one load per
        # grid step; sliced as register values inside the loops).
        wdw1 = wdw1_ref[...]                        # (k*k, W  * E)
        wdw2 = wdw2_ref[...]                        # (k*k, W1 * E)

        if stride > 1:
            # 0/1 selection matrices: subsample the full-resolution depthwise
            # result with matmuls instead of strided sublane/lane reads.
            ri = jax.lax.broadcasted_iota(jnp.int32, (H1, H), 0)
            ci = jax.lax.broadcasted_iota(jnp.int32, (H1, H), 1)
            row_sel = (ci == ri * stride).astype(jnp.float32)
            mi = jax.lax.broadcasted_iota(jnp.int32, (Lmid_full, Lmid), 0)
            ni = jax.lax.broadcasted_iota(jnp.int32, (Lmid_full, Lmid), 1)
            col_sel = jnp.logical_and(mi // E == (ni // E) * stride,
                                      mi % E == ni % E).astype(jnp.float32)

        for b in range(Bb):                         # static unroll over the block's images
            x2 = x_ref[b, :, :].astype(jnp.float32)            # (H, W*Cin)

            # 1) 1x1 expand conv as a lane-dense block-diagonal matmul + BN + hswish
            y = jnp.dot(x2, wexp_ref[...], preferred_element_type=jnp.float32)
            y = _hardswish(y * sexp_ref[...] + bexp_ref[...])  # (H, W*E)

            # 2) depthwise kxk, stride s + BN + hswish (register-resident taps)
            f = dw_conv(y, wdw1)                               # (H, W*E)
            if stride > 1:
                f = jnp.dot(row_sel, f, preferred_element_type=jnp.float32)
                f = jnp.dot(f, col_sel, preferred_element_type=jnp.float32)
            z = _hardswish(f * sdw1_ref[...] + bdw1_ref[...])  # (H1, W1*E)

            # 3) squeeze-and-excite
            if se:
                pooled = jnp.dot(jnp.sum(z, axis=0, keepdims=True), sw_ref[...],
                                 preferred_element_type=jnp.float32) * inv_hw   # (1, E)
                t = jnp.maximum(
                    jnp.dot(pooled, wse1_ref[...],
                            preferred_element_type=jnp.float32) + bse1_ref[...], 0.0)
                gate = _hardsigmoid(
                    jnp.dot(t, wse2_ref[...],
                            preferred_element_type=jnp.float32) + bse2_ref[...])  # (1, E)
                gate = jnp.concatenate([gate] * W1, axis=1)    # (1, W1*E)
                z = z * gate

            # 4) depthwise kxk, stride 1 + BN + hswish
            u = dw_conv(z, wdw2)                               # (H1, W1*E)
            u = _hardswish(u * sdw2_ref[...] + bdw2_ref[...])

            # 5) 1x1 project conv (block-diagonal matmul) + BN (Identity act)
            out = jnp.dot(u, wproj_ref[...], preferred_element_type=jnp.float32)
            out = out * sproj_ref[...] + bproj_ref[...]        # (H1, W1*Cout)

            if add:
                out = out + x2

            o_ref[b, :, :] = out.astype(o_ref.dtype)

    return kernel


def _pick_images_per_step(N, H, W, Cin, E, Cout, H1, W1):
    # Rough per-image f32 footprint: double-buffered I/O blocks + a few live
    # (H, W*E) intermediates.  Cap at 8 to bound the unrolled loop / vreg use.
    per_image = 4 * (2 * H * W * Cin + 4 * H * W * E + 2 * H1 * W1 * Cout)
    budget = 8 * 1024 * 1024
    b = int(max(1, min(N, 8, budget // max(per_image, 1))))
    while N % b:
        b -= 1
    return b


@functools.partial(
    jax.jit,
    static_argnames=("kernel_size", "stride", "se", "add", "images_per_step"))
def bneck_pallas(x_nchw, params, *, kernel_size, stride, se, add,
                 images_per_step=None):
    N, Cin, H, W = x_nchw.shape
    E = params["w_exp"].shape[1]
    Cout = params["w_proj"].shape[1]
    k = kernel_size
    p = k // 2
    H1 = (H + 2 * p - k) // stride + 1
    W1 = (W + 2 * p - k) // stride + 1

    Bb = images_per_step or _pick_images_per_step(N, H, W, Cin, E, Cout, H1, W1)
    assert N % Bb == 0

    f32 = jnp.float32
    # NCHW -> lane-dense (N, H, W*Cin) slabs (channels innermost on the lane axis).
    x = jnp.transpose(x_nchw, (0, 2, 3, 1)).astype(f32).reshape(N, H, W * Cin)

    tile_w = lambda a: jnp.tile(a.astype(f32), (1, W))
    tile_w1 = lambda a: jnp.tile(a.astype(f32), (1, W1))

    weights = [
        jnp.kron(jnp.eye(W, dtype=f32), params["w_exp"].astype(f32)),   # (W*Cin, W*E)
        tile_w(params["s_exp"]), tile_w(params["b_exp"]),
        tile_w(params["w_dw1"]),                                        # (k*k, W*E)
        tile_w1(params["s_dw1"]), tile_w1(params["b_dw1"]),
        params["w_se1"].astype(f32), params["b_se1"].astype(f32),
        params["w_se2"].astype(f32), params["b_se2"].astype(f32),
        jnp.tile(jnp.eye(E, dtype=f32), (W1, 1)),                       # (W1*E, E) pool matrix
        tile_w1(params["w_dw2"]),                                       # (k*k, W1*E)
        tile_w1(params["s_dw2"]), tile_w1(params["b_dw2"]),
        jnp.kron(jnp.eye(W1, dtype=f32), params["w_proj"].astype(f32)), # (W1*E, W1*Cout)
        tile_w1(params["s_proj"]), tile_w1(params["b_proj"]),
    ]

    kernel = _make_kernel(H, W, H1, W1, Cin, Cout, E, k, stride, se, add, Bb)

    def full_spec(a):
        nd = a.ndim
        return pl.BlockSpec(a.shape, lambda n, _nd=nd: (0,) * _nd)

    in_specs = [pl.BlockSpec((Bb, H, W * Cin), lambda n: (n, 0, 0))]
    in_specs += [full_spec(w) for w in weights]
    out_spec = pl.BlockSpec((Bb, H1, W1 * Cout), lambda n: (n, 0, 0))

    out = pl.pallas_call(
        kernel,
        out_shape=jax.ShapeDtypeStruct((N, H1, W1 * Cout), f32),
        grid_spec=pltpu.PrefetchScalarGridSpec(
            num_scalar_prefetch=0,
            grid=(N // Bb,),
            in_specs=in_specs,
            out_specs=out_spec,
        ),
        compiler_params=pltpu.CompilerParams(
            dimension_semantics=("parallel",),
            vmem_limit_bytes=32 * 1024 * 1024,
        ),
    )(x, *weights)

    out = out.reshape(N, H1, W1, Cout)
    return jnp.transpose(out, (0, 3, 1, 2))  # NHWC -> NCHW


def bneck_reference(x_nchw, p, *, kernel_size, stride, se, add):
    """Pure-JAX reference (same semantics, independent lowering) for validation."""
    k = kernel_size
    pad = k // 2
    hp = jax.lax.Precision.HIGHEST
    x = jnp.transpose(x_nchw, (0, 2, 3, 1)).astype(jnp.float32)

    def dw(y, wf, s):
        E = y.shape[-1]
        wr = wf.reshape(k, k, 1, E)
        return jax.lax.conv_general_dilated(
            y, wr, window_strides=(s, s), padding=[(pad, pad), (pad, pad)],
            dimension_numbers=("NHWC", "HWIO", "NHWC"),
            feature_group_count=E, precision=hp)

    y = _hardswish(jnp.einsum("nhwc,ce->nhwe", x, p["w_exp"], precision=hp)
                   * p["s_exp"] + p["b_exp"])
    y = _hardswish(dw(y, p["w_dw1"], stride) * p["s_dw1"] + p["b_dw1"])
    if se:
        pooled = jnp.mean(y, axis=(1, 2))
        f = jnp.maximum(pooled @ p["w_se1"] + p["b_se1"], 0.0)
        f = _hardsigmoid(f @ p["w_se2"] + p["b_se2"])
        y = y * f[:, None, None, :]
    y = _hardswish(dw(y, p["w_dw2"], 1) * p["s_dw2"] + p["b_dw2"])
    out = (jnp.einsum("nhwe,eo->nhwo", y, p["w_proj"], precision=hp)
           * p["s_proj"] + p["b_proj"])
    if add:
        out = out + x
    return jnp.transpose(out, (0, 3, 1, 2))


def init_params(key, cin, cout, k, exp):
    """Deterministic synthetic parameters (BatchNorm folded to scale/bias)."""
    r = max(exp // 4, 1)
    ks = jax.random.split(key, 12)

    def w(kk, shape, std=0.2):
        return (std * jax.random.normal(kk, shape)).astype(jnp.float32)

    def bn(kk, c):
        k1, k2, k3, k4 = jax.random.split(kk, 4)
        gamma = 1.0 + 0.1 * jax.random.normal(k1, (1, c))
        beta = 0.1 * jax.random.normal(k2, (1, c))
        mean = 0.1 * jax.random.normal(k3, (1, c))
        var = 0.5 + 0.25 * jnp.abs(jax.random.normal(k4, (1, c)))
        scale = gamma / jnp.sqrt(var + 1e-5)
        bias = beta - mean * scale
        return scale.astype(jnp.float32), bias.astype(jnp.float32)

    p = {}
    p["w_exp"] = w(ks[0], (cin, exp))
    p["s_exp"], p["b_exp"] = bn(ks[1], exp)
    p["w_dw1"] = w(ks[2], (k * k, exp))
    p["s_dw1"], p["b_dw1"] = bn(ks[3], exp)
    p["w_se1"] = w(ks[4], (exp, r))
    p["b_se1"] = w(ks[5], (1, r), 0.1)
    p["w_se2"] = w(ks[6], (r, exp))
    p["b_se2"] = w(ks[7], (1, exp), 0.1)
    p["w_dw2"] = w(ks[8], (k * k, exp))
    p["s_dw2"], p["b_dw2"] = bn(ks[9], exp)
    p["w_proj"] = w(ks[10], (exp, cout))
    p["s_proj"], p["b_proj"] = bn(ks[11], cout)
    return p


if __name__ == "__main__":
    # Config consistent with BNeck(in=16, out=16, k=3, exp=32, se=True,
    # act=Hardswish, stride=1)  =>  residual add is active.
    N, Cin, H, W = 2, 16, 16, 16
    Cout, E, k, stride, se = 16, 32, 3, 1, True
    add = (Cin == Cout and stride == 1)

    key = jax.random.PRNGKey(0)
    kx, kp = jax.random.split(key)
    x = jax.random.normal(kx, (N, Cin, H, W), jnp.float32)
    params = init_params(kp, Cin, Cout, k, E)

    out = bneck_pallas(x, params, kernel_size=k, stride=stride, se=se, add=add)
    out = jax.block_until_ready(out)

    ref = bneck_reference(x, params, kernel_size=k, stride=stride, se=se, add=add)
    assert out.shape == ref.shape == (N, Cout, H, W)
    assert bool(jnp.allclose(out, ref, rtol=2e-2, atol=2e-2))

    print("KERNEL_OK")
</pallas_src>

<mosaic_0001>
module attributes {stable_mosaic.version = 11 : i64} {
  func.func @kernel(%arg0: i32, %arg1: memref<2x16x256xf32, #tpu.memory_space<vmem>>, %arg2: memref<256x512xf32, #tpu.memory_space<vmem>>, %arg3: memref<1x512xf32, #tpu.memory_space<vmem>>, %arg4: memref<1x512xf32, #tpu.memory_space<vmem>>, %arg5: memref<9x512xf32, #tpu.memory_space<vmem>>, %arg6: memref<1x512xf32, #tpu.memory_space<vmem>>, %arg7: memref<1x512xf32, #tpu.memory_space<vmem>>, %arg8: memref<32x8xf32, #tpu.memory_space<vmem>>, %arg9: memref<1x8xf32, #tpu.memory_space<vmem>>, %arg10: memref<8x32xf32, #tpu.memory_space<vmem>>, %arg11: memref<1x32xf32, #tpu.memory_space<vmem>>, %arg12: memref<512x32xf32, #tpu.memory_space<vmem>>, %arg13: memref<9x512xf32, #tpu.memory_space<vmem>>, %arg14: memref<1x512xf32, #tpu.memory_space<vmem>>, %arg15: memref<1x512xf32, #tpu.memory_space<vmem>>, %arg16: memref<512x256xf32, #tpu.memory_space<vmem>>, %arg17: memref<1x256xf32, #tpu.memory_space<vmem>>, %arg18: memref<1x256xf32, #tpu.memory_space<vmem>>, %arg19: memref<2x16x256xf32, #tpu.memory_space<vmem>>) attributes {dimension_semantics = [#tpu.dimension_semantics<parallel>], iteration_bounds = array<i64: 1>, scalar_prefetch = 0 : i64, scratch_operands = 0 : i64, tpu.core_type = #tpu.core_type<tc>, window_params = [{transform_indices = @transform_0, window_bounds = array<i64: 2, 16, 256>}, {pipeline_mode = #tpu.pipeline_mode<synchronous>, transform_indices = @transform_1, window_bounds = array<i64: 256, 512>}, {pipeline_mode = #tpu.pipeline_mode<synchronous>, transform_indices = @transform_2, window_bounds = array<i64: 1, 512>}, {pipeline_mode = #tpu.pipeline_mode<synchronous>, transform_indices = @transform_3, window_bounds = array<i64: 1, 512>}, {pipeline_mode = #tpu.pipeline_mode<synchronous>, transform_indices = @transform_4, window_bounds = array<i64: 9, 512>}, {pipeline_mode = #tpu.pipeline_mode<synchronous>, transform_indices = @transform_5, window_bounds = array<i64: 1, 512>}, {pipeline_mode = #tpu.pipeline_mode<synchronous>, transform_indices = @transform_6, window_bounds = array<i64: 1, 512>}, {pipeline_mode = #tpu.pipeline_mode<synchronous>, transform_indices = @transform_7, window_bounds = array<i64: 32, 8>}, {pipeline_mode = #tpu.pipeline_mode<synchronous>, transform_indices = @transform_8, window_bounds = array<i64: 1, 8>}, {pipeline_mode = #tpu.pipeline_mode<synchronous>, transform_indices = @transform_9, window_bounds = array<i64: 8, 32>}, {pipeline_mode = #tpu.pipeline_mode<synchronous>, transform_indices = @transform_10, window_bounds = array<i64: 1, 32>}, {pipeline_mode = #tpu.pipeline_mode<synchronous>, transform_indices = @transform_11, window_bounds = array<i64: 512, 32>}, {pipeline_mode = #tpu.pipeline_mode<synchronous>, transform_indices = @transform_12, window_bounds = array<i64: 9, 512>}, {pipeline_mode = #tpu.pipeline_mode<synchronous>, transform_indices = @transform_13, window_bounds = array<i64: 1, 512>}, {pipeline_mode = #tpu.pipeline_mode<synchronous>, transform_indices = @transform_14, window_bounds = array<i64: 1, 512>}, {pipeline_mode = #tpu.pipeline_mode<synchronous>, transform_indices = @transform_15, window_bounds = array<i64: 512, 256>}, {pipeline_mode = #tpu.pipeline_mode<synchronous>, transform_indices = @transform_16, window_bounds = array<i64: 1, 256>}, {pipeline_mode = #tpu.pipeline_mode<synchronous>, transform_indices = @transform_17, window_bounds = array<i64: 1, 256>}, {transform_indices = @transform_18, window_bounds = array<i64: 2, 16, 256>}]} {
    %c0 = arith.constant 0 : index
    %c0_0 = arith.constant 0 : index
    %0 = vector.load %arg5[%c0, %c0_0] : memref<9x512xf32, #tpu.memory_space<vmem>>, vector<9x512xf32>
    %c0_1 = arith.constant 0 : index
    %c0_2 = arith.constant 0 : index
    %1 = vector.load %arg13[%c0_1, %c0_2] : memref<9x512xf32, #tpu.memory_space<vmem>>, vector<9x512xf32>
    %c0_3 = arith.constant 0 : index
    %c0_4 = arith.constant 0 : index
    %c0_5 = arith.constant 0 : index
    %2 = vector.load %arg1[%c0_3, %c0_4, %c0_5] : memref<2x16x256xf32, #tpu.memory_space<vmem>>, vector<1x16x256xf32>
    %3 = vector.shape_cast %2 : vector<1x16x256xf32> to vector<16x256xf32>
    %c0_6 = arith.constant 0 : index
    %c0_7 = arith.constant 0 : index
    %4 = vector.load %arg2[%c0_6, %c0_7] : memref<256x512xf32, #tpu.memory_space<vmem>>, vector<256x512xf32>
    %cst = arith.constant dense<0.000000e+00> : vector<16x512xf32>
    %5 = tpu.matmul %3, %4, %cst {dimension_numbers = #tpu.dot_dimension_numbers<[1], [0], [0], [1], [0, 0, 1, 1], [], []>} : vector<16x256xf32>, vector<256x512xf32>, vector<16x512xf32> -> vector<16x512xf32>
    %c0_8 = arith.constant 0 : index
    %c0_9 = arith.constant 0 : index
    %6 = vector.load %arg3[%c0_8, %c0_9] : memref<1x512xf32, #tpu.memory_space<vmem>>, vector<1x512xf32>
    %7 = vector.broadcast %6 : vector<1x512xf32> to vector<16x512xf32>
    %8 = arith.mulf %5, %7 : vector<16x512xf32>
    %c0_10 = arith.constant 0 : index
    %c0_11 = arith.constant 0 : index
    %9 = vector.load %arg4[%c0_10, %c0_11] : memref<1x512xf32, #tpu.memory_space<vmem>>, vector<1x512xf32>
    %10 = vector.broadcast %9 : vector<1x512xf32> to vector<16x512xf32>
    %11 = arith.addf %8, %10 : vector<16x512xf32>
    %cst_12 = arith.constant 3.000000e+00 : f32
    %12 = vector.broadcast %cst_12 : f32 to vector<16x512xf32>
    %13 = arith.addf %11, %12 : vector<16x512xf32>
    %cst_13 = arith.constant 0.000000e+00 : f32
    %cst_14 = arith.constant 6.000000e+00 : f32
    %14 = vector.broadcast %cst_13 : f32 to vector<16x512xf32>
    %15 = arith.maximumf %14, %13 : vector<16x512xf32>
    %16 = vector.broadcast %cst_14 : f32 to vector<16x512xf32>
    %17 = arith.minimumf %16, %15 : vector<16x512xf32>
    %18 = arith.mulf %11, %17 : vector<16x512xf32>
    %cst_15 = arith.constant 0.166666672 : f32
    %19 = vector.broadcast %cst_15 : f32 to vector<16x512xf32>
    %20 = arith.mulf %18, %19 : vector<16x512xf32>
    %cst_16 = arith.constant 0.000000e+00 : f32
    %21 = vector.broadcast %cst_16 : f32 to vector<1x512xf32>
    %22 = vector.extract_strided_slice %20 {offsets = [0, 0], sizes = [15, 512], strides = [1, 1]} : vector<16x512xf32> to vector<15x512xf32>
    %23 = tpu.concatenate %21, %22 in 0 : vector<1x512xf32>, vector<15x512xf32> -> vector<16x512xf32>
    %cst_17 = arith.constant 0.000000e+00 : f32
    %24 = vector.broadcast %cst_17 : f32 to vector<16x32xf32>
    %25 = vector.extract_strided_slice %23 {offsets = [0, 0], sizes = [16, 480], strides = [1, 1]} : vector<16x512xf32> to vector<16x480xf32>
    %26 = tpu.concatenate %24, %25 in 1 : vector<16x32xf32>, vector<16x480xf32> -> vector<16x512xf32>
    %27 = vector.extract_strided_slice %0 {offsets = [0, 0], sizes = [1, 512], strides = [1, 1]} : vector<9x512xf32> to vector<1x512xf32>
    %28 = vector.broadcast %27 : vector<1x512xf32> to vector<16x512xf32>
    %29 = arith.mulf %26, %28 : vector<16x512xf32>
    %30 = vector.extract_strided_slice %0 {offsets = [1, 0], sizes = [1, 512], strides = [1, 1]} : vector<9x512xf32> to vector<1x512xf32>
    %31 = vector.broadcast %30 : vector<1x512xf32> to vector<16x512xf32>
    %32 = arith.mulf %23, %31 : vector<16x512xf32>
    %33 = arith.addf %29, %32 : vector<16x512xf32>
    %cst_18 = arith.constant 0.000000e+00 : f32
    %34 = vector.broadcast %cst_18 : f32 to vector<16x32xf32>
    %35 = vector.extract_strided_slice %23 {offsets = [0, 32], sizes = [16, 480], strides = [1, 1]} : vector<16x512xf32> to vector<16x480xf32>
    %36 = tpu.concatenate %35, %34 in 1 : vector<16x480xf32>, vector<16x32xf32> -> vector<16x512xf32>
    %37 = vector.extract_strided_slice %0 {offsets = [2, 0], sizes = [1, 512], strides = [1, 1]} : vector<9x512xf32> to vector<1x512xf32>
    %38 = vector.broadcast %37 : vector<1x512xf32> to vector<16x512xf32>
    %39 = arith.mulf %36, %38 : vector<16x512xf32>
    %40 = arith.addf %33, %39 : vector<16x512xf32>
    %cst_19 = arith.constant 0.000000e+00 : f32
    %41 = vector.broadcast %cst_19 : f32 to vector<16x32xf32>
    %42 = vector.extract_strided_slice %20 {offsets = [0, 0], sizes = [16, 480], strides = [1, 1]} : vector<16x512xf32> to vector<16x480xf32>
    %43 = tpu.concatenate %41, %42 in 1 : vector<16x32xf32>, vector<16x480xf32> -> vector<16x512xf32>
    %44 = vector.extract_strided_slice %0 {offsets = [3, 0], sizes = [1, 512], strides = [1, 1]} : vector<9x512xf32> to vector<1x512xf32>
    %45 = vector.broadcast %44 : vector<1x512xf32> to vector<16x512xf32>
    %46 = arith.mulf %43, %45 : vector<16x512xf32>
    %47 = arith.addf %40, %46 : vector<16x512xf32>
    %48 = vector.extract_strided_slice %0 {offsets = [4, 0], sizes = [1, 512], strides = [1, 1]} : vector<9x512xf32> to vector<1x512xf32>
    %49 = vector.broadcast %48 : vector<1x512xf32> to vector<16x512xf32>
    %50 = arith.mulf %20, %49 : vector<16x512xf32>
    %51 = arith.addf %47, %50 : vector<16x512xf32>
    %cst_20 = arith.constant 0.000000e+00 : f32
    %52 = vector.broadcast %cst_20 : f32 to vector<16x32xf32>
    %53 = vector.extract_strided_slice %20 {offsets = [0, 32], sizes = [16, 480], strides = [1, 1]} : vector<16x512xf32> to vector<16x480xf32>
    %54 = tpu.concatenate %53, %52 in 1 : vector<16x480xf32>, vector<16x32xf32> -> vector<16x512xf32>
    %55 = vector.extract_strided_slice %0 {offsets = [5, 0], sizes = [1, 512], strides = [1, 1]} : vector<9x512xf32> to vector<1x512xf32>
    %56 = vector.broadcast %55 : vector<1x512xf32> to vector<16x512xf32>
    %57 = arith.mulf %54, %56 : vector<16x512xf32>
    %58 = arith.addf %51, %57 : vector<16x512xf32>
    %cst_21 = arith.constant 0.000000e+00 : f32
    %59 = vector.broadcast %cst_21 : f32 to vector<1x512xf32>
    %60 = vector.extract_strided_slice %20 {offsets = [1, 0], sizes = [15, 512], strides = [1, 1]} : vector<16x512xf32> to vector<15x512xf32>
    %61 = tpu.concatenate %60, %59 in 0 : vector<15x512xf32>, vector<1x512xf32> -> vector<16x512xf32>
    %cst_22 = arith.constant 0.000000e+00 : f32
    %62 = vector.broadcast %cst_22 : f32 to vector<16x32xf32>
    %63 = vector.extract_strided_slice %61 {offsets = [0, 0], sizes = [16, 480], strides = [1, 1]} : vector<16x512xf32> to vector<16x480xf32>
    %64 = tpu.concatenate %62, %63 in 1 : vector<16x32xf32>, vector<16x480xf32> -> vector<16x512xf32>
    %65 = vector.extract_strided_slice %0 {offsets = [6, 0], sizes = [1, 512], strides = [1, 1]} : vector<9x512xf32> to vector<1x512xf32>
    %66 = vector.broadcast %65 : vector<1x512xf32> to vector<16x512xf32>
    %67 = arith.mulf %64, %66 : vector<16x512xf32>
    %68 = arith.addf %58, %67 : vector<16x512xf32>
    %69 = vector.extract_strided_slice %0 {offsets = [7, 0], sizes = [1, 512], strides = [1, 1]} : vector<9x512xf32> to vector<1x512xf32>
    %70 = vector.broadcast %69 : vector<1x512xf32> to vector<16x512xf32>
    %71 = arith.mulf %61, %70 : vector<16x512xf32>
    %72 = arith.addf %68, %71 : vector<16x512xf32>
    %cst_23 = arith.constant 0.000000e+00 : f32
    %73 = vector.broadcast %cst_23 : f32 to vector<16x32xf32>
    %74 = vector.extract_strided_slice %61 {offsets = [0, 32], sizes = [16, 480], strides = [1, 1]} : vector<16x512xf32> to vector<16x480xf32>
    %75 = tpu.concatenate %74, %73 in 1 : vector<16x480xf32>, vector<16x32xf32> -> vector<16x512xf32>
    %76 = vector.extract_strided_slice %0 {offsets = [8, 0], sizes = [1, 512], strides = [1, 1]} : vector<9x512xf32> to vector<1x512xf32>
    %77 = vector.broadcast %76 : vector<1x512xf32> to vector<16x512xf32>
    %78 = arith.mulf %75, %77 : vector<16x512xf32>
    %79 = arith.addf %72, %78 : vector<16x512xf32>
    %c0_24 = arith.constant 0 : index
    %c0_25 = arith.constant 0 : index
    %80 = vector.load %arg6[%c0_24, %c0_25] : memref<1x512xf32, #tpu.memory_space<vmem>>, vector<1x512xf32>
    %81 = vector.broadcast %80 : vector<1x512xf32> to vector<16x512xf32>
    %82 = arith.mulf %79, %81 : vector<16x512xf32>
    %c0_26 = arith.constant 0 : index
    %c0_27 = arith.constant 0 : index
    %83 = vector.load %arg7[%c0_26, %c0_27] : memref<1x512xf32, #tpu.memory_space<vmem>>, vector<1x512xf32>
    %84 = vector.broadcast %83 : vector<1x512xf32> to vector<16x512xf32>
    %85 = arith.addf %82, %84 : vector<16x512xf32>
    %cst_28 = arith.constant 3.000000e+00 : f32
    %86 = vector.broadcast %cst_28 : f32 to vector<16x512xf32>
    %87 = arith.addf %85, %86 : vector<16x512xf32>
    %cst_29 = arith.constant 0.000000e+00 : f32
    %cst_30 = arith.constant 6.000000e+00 : f32
    %88 = vector.broadcast %cst_29 : f32 to vector<16x512xf32>
    %89 = arith.maximumf %88, %87 : vector<16x512xf32>
    %90 = vector.broadcast %cst_30 : f32 to vector<16x512xf32>
    %91 = arith.minimumf %90, %89 : vector<16x512xf32>
    %92 = arith.mulf %85, %91 : vector<16x512xf32>
    %cst_31 = arith.constant 0.166666672 : f32
    %93 = vector.broadcast %cst_31 : f32 to vector<16x512xf32>
    %94 = arith.mulf %92, %93 : vector<16x512xf32>
    %cst_32 = arith.constant dense<0.000000e+00> : vector<512xf32>
    %95 = vector.multi_reduction <add>, %94, %cst_32 [0] : vector<16x512xf32> to vector<512xf32>
    %96 = vector.shape_cast %95 : vector<512xf32> to vector<1x512xf32>
    %c0_33 = arith.constant 0 : index
    %c0_34 = arith.constant 0 : index
    %97 = vector.load %arg12[%c0_33, %c0_34] : memref<512x32xf32, #tpu.memory_space<vmem>>, vector<512x32xf32>
    %cst_35 = arith.constant dense<0.000000e+00> : vector<1x32xf32>
    %98 = tpu.matmul %96, %97, %cst_35 {dimension_numbers = #tpu.dot_dimension_numbers<[1], [0], [0], [1], [0, 0, 1, 1], [], []>} : vector<1x512xf32>, vector<512x32xf32>, vector<1x32xf32> -> vector<1x32xf32>
    %cst_36 = arith.constant 3.906250e-03 : f32
    %99 = vector.broadcast %cst_36 : f32 to vector<1x32xf32>
    %100 = arith.mulf %98, %99 : vector<1x32xf32>
    %c0_37 = arith.constant 0 : index
    %c0_38 = arith.constant 0 : index
    %101 = vector.load %arg8[%c0_37, %c0_38] : memref<32x8xf32, #tpu.memory_space<vmem>>, vector<32x8xf32>
    %cst_39 = arith.constant dense<0.000000e+00> : vector<1x8xf32>
    %102 = tpu.matmul %100, %101, %cst_39 {dimension_numbers = #tpu.dot_dimension_numbers<[1], [0], [0], [1], [0, 0, 1, 1], [], []>} : vector<1x32xf32>, vector<32x8xf32>, vector<1x8xf32> -> vector<1x8xf32>
    %c0_40 = arith.constant 0 : index
    %c0_41 = arith.constant 0 : index
    %103 = vector.load %arg9[%c0_40, %c0_41] : memref<1x8xf32, #tpu.memory_space<vmem>>, vector<1x8xf32>
    %104 = arith.addf %102, %103 : vector<1x8xf32>
    %cst_42 = arith.constant 0.000000e+00 : f32
    %105 = vector.broadcast %cst_42 : f32 to vector<1x8xf32>
    %106 = arith.maximumf %104, %105 : vector<1x8xf32>
    %c0_43 = arith.constant 0 : index
    %c0_44 = arith.constant 0 : index
    %107 = vector.load %arg10[%c0_43, %c0_44] : memref<8x32xf32, #tpu.memory_space<vmem>>, vector<8x32xf32>
    %cst_45 = arith.constant dense<0.000000e+00> : vector<1x32xf32>
    %108 = tpu.matmul %106, %107, %cst_45 {dimension_numbers = #tpu.dot_dimension_numbers<[1], [0], [0], [1], [0, 0, 1, 1], [], []>} : vector<1x8xf32>, vector<8x32xf32>, vector<1x32xf32> -> vector<1x32xf32>
    %c0_46 = arith.constant 0 : index
    %c0_47 = arith.constant 0 : index
    %109 = vector.load %arg11[%c0_46, %c0_47] : memref<1x32xf32, #tpu.memory_space<vmem>>, vector<1x32xf32>
    %110 = arith.addf %108, %109 : vector<1x32xf32>
    %cst_48 = arith.constant 3.000000e+00 : f32
    %111 = vector.broadcast %cst_48 : f32 to vector<1x32xf32>
    %112 = arith.addf %110, %111 : vector<1x32xf32>
    %cst_49 = arith.constant 0.000000e+00 : f32
    %cst_50 = arith.constant 6.000000e+00 : f32
    %113 = vector.broadcast %cst_49 : f32 to vector<1x32xf32>
    %114 = arith.maximumf %113, %112 : vector<1x32xf32>
    %115 = vector.broadcast %cst_50 : f32 to vector<1x32xf32>
    %116 = arith.minimumf %115, %114 : vector<1x32xf32>
    %cst_51 = arith.constant 0.166666672 : f32
    %117 = vector.broadcast %cst_51 : f32 to vector<1x32xf32>
    %118 = arith.mulf %116, %117 : vector<1x32xf32>
    %119 = tpu.concatenate %118, %118, %118, %118, %118, %118, %118, %118, %118, %118, %118, %118, %118, %118, %118, %118 in 1 : vector<1x32xf32>, vector<1x32xf32>, vector<1x32xf32>, vector<1x32xf32>, vector<1x32xf32>, vector<1x32xf32>, vector<1x32xf32>, vector<1x32xf32>, vector<1x32xf32>, vector<1x32xf32>, vector<1x32xf32>, vector<1x32xf32>, vector<1x32xf32>, vector<1x32xf32>, vector<1x32xf32>, vector<1x32xf32> -> vector<1x512xf32>
    %120 = vector.broadcast %119 : vector<1x512xf32> to vector<16x512xf32>
    %121 = arith.mulf %94, %120 : vector<16x512xf32>
    %cst_52 = arith.constant 0.000000e+00 : f32
    %122 = vector.broadcast %cst_52 : f32 to vector<1x512xf32>
    %123 = vector.extract_strided_slice %121 {offsets = [0, 0], sizes = [15, 512], strides = [1, 1]} : vector<16x512xf32> to vector<15x512xf32>
    %124 = tpu.concatenate %122, %123 in 0 : vector<1x512xf32>, vector<15x512xf32> -> vector<16x512xf32>
    %cst_53 = arith.constant 0.000000e+00 : f32
    %125 = vector.broadcast %cst_53 : f32 to vector<16x32xf32>
    %126 = vector.extract_strided_slice %124 {offsets = [0, 0], sizes = [16, 480], strides = [1, 1]} : vector<16x512xf32> to vector<16x480xf32>
    %127 = tpu.concatenate %125, %126 in 1 : vector<16x32xf32>, vector<16x480xf32> -> vector<16x512xf32>
    %128 = vector.extract_strided_slice %1 {offsets = [0, 0], sizes = [1, 512], strides = [1, 1]} : vector<9x512xf32> to vector<1x512xf32>
    %129 = vector.broadcast %128 : vector<1x512xf32> to vector<16x512xf32>
    %130 = arith.mulf %127, %129 : vector<16x512xf32>
    %131 = vector.extract_strided_slice %1 {offsets = [1, 0], sizes = [1, 512], strides = [1, 1]} : vector<9x512xf32> to vector<1x512xf32>
    %132 = vector.broadcast %131 : vector<1x512xf32> to vector<16x512xf32>
    %133 = arith.mulf %124, %132 : vector<16x512xf32>
    %134 = arith.addf %130, %133 : vector<16x512xf32>
    %cst_54 = arith.constant 0.000000e+00 : f32
    %135 = vector.broadcast %cst_54 : f32 to vector<16x32xf32>
    %136 = vector.extract_strided_slice %124 {offsets = [0, 32], sizes = [16, 480], strides = [1, 1]} : vector<16x512xf32> to vector<16x480xf32>
    %137 = tpu.concatenate %136, %135 in 1 : vector<16x480xf32>, vector<16x32xf32> -> vector<16x512xf32>
    %138 = vector.extract_strided_slice %1 {offsets = [2, 0], sizes = [1, 512], strides = [1, 1]} : vector<9x512xf32> to vector<1x512xf32>
    %139 = vector.broadcast %138 : vector<1x512xf32> to vector<16x512xf32>
    %140 = arith.mulf %137, %139 : vector<16x512xf32>
    %141 = arith.addf %134, %140 : vector<16x512xf32>
    %cst_55 = arith.constant 0.000000e+00 : f32
    %142 = vector.broadcast %cst_55 : f32 to vector<16x32xf32>
    %143 = vector.extract_strided_slice %121 {offsets = [0, 0], sizes = [16, 480], strides = [1, 1]} : vector<16x512xf32> to vector<16x480xf32>
    %144 = tpu.concatenate %142, %143 in 1 : vector<16x32xf32>, vector<16x480xf32> -> vector<16x512xf32>
    %145 = vector.extract_strided_slice %1 {offsets = [3, 0], sizes = [1, 512], strides = [1, 1]} : vector<9x512xf32> to vector<1x512xf32>
    %146 = vector.broadcast %145 : vector<1x512xf32> to vector<16x512xf32>
    %147 = arith.mulf %144, %146 : vector<16x512xf32>
    %148 = arith.addf %141, %147 : vector<16x512xf32>
    %149 = vector.extract_strided_slice %1 {offsets = [4, 0], sizes = [1, 512], strides = [1, 1]} : vector<9x512xf32> to vector<1x512xf32>
    %150 = vector.broadcast %149 : vector<1x512xf32> to vector<16x512xf32>
    %151 = arith.mulf %121, %150 : vector<16x512xf32>
    %152 = arith.addf %148, %151 : vector<16x512xf32>
    %cst_56 = arith.constant 0.000000e+00 : f32
    %153 = vector.broadcast %cst_56 : f32 to vector<16x32xf32>
    %154 = vector.extract_strided_slice %121 {offsets = [0, 32], sizes = [16, 480], strides = [1, 1]} : vector<16x512xf32> to vector<16x480xf32>
    %155 = tpu.concatenate %154, %153 in 1 : vector<16x480xf32>, vector<16x32xf32> -> vector<16x512xf32>
    %156 = vector.extract_strided_slice %1 {offsets = [5, 0], sizes = [1, 512], strides = [1, 1]} : vector<9x512xf32> to vector<1x512xf32>
    %157 = vector.broadcast %156 : vector<1x512xf32> to vector<16x512xf32>
    %158 = arith.mulf %155, %157 : vector<16x512xf32>
    %159 = arith.addf %152, %158 : vector<16x512xf32>
    %cst_57 = arith.constant 0.000000e+00 : f32
    %160 = vector.broadcast %cst_57 : f32 to vector<1x512xf32>
    %161 = vector.extract_strided_slice %121 {offsets = [1, 0], sizes = [15, 512], strides = [1, 1]} : vector<16x512xf32> to vector<15x512xf32>
    %162 = tpu.concatenate %161, %160 in 0 : vector<15x512xf32>, vector<1x512xf32> -> vector<16x512xf32>
    %cst_58 = arith.constant 0.000000e+00 : f32
    %163 = vector.broadcast %cst_58 : f32 to vector<16x32xf32>
    %164 = vector.extract_strided_slice %162 {offsets = [0, 0], sizes = [16, 480], strides = [1, 1]} : vector<16x512xf32> to vector<16x480xf32>
    %165 = tpu.concatenate %163, %164 in 1 : vector<16x32xf32>, vector<16x480xf32> -> vector<16x512xf32>
    %166 = vector.extract_strided_slice %1 {offsets = [6, 0], sizes = [1, 512], strides = [1, 1]} : vector<9x512xf32> to vector<1x512xf32>
    %167 = vector.broadcast %166 : vector<1x512xf32> to vector<16x512xf32>
    %168 = arith.mulf %165, %167 : vector<16x512xf32>
    %169 = arith.addf %159, %168 : vector<16x512xf32>
    %170 = vector.extract_strided_slice %1 {offsets = [7, 0], sizes = [1, 512], strides = [1, 1]} : vector<9x512xf32> to vector<1x512xf32>
    %171 = vector.broadcast %170 : vector<1x512xf32> to vector<16x512xf32>
    %172 = arith.mulf %162, %171 : vector<16x512xf32>
    %173 = arith.addf %169, %172 : vector<16x512xf32>
    %cst_59 = arith.constant 0.000000e+00 : f32
    %174 = vector.broadcast %cst_59 : f32 to vector<16x32xf32>
    %175 = vector.extract_strided_slice %162 {offsets = [0, 32], sizes = [16, 480], strides = [1, 1]} : vector<16x512xf32> to vector<16x480xf32>
    %176 = tpu.concatenate %175, %174 in 1 : vector<16x480xf32>, vector<16x32xf32> -> vector<16x512xf32>
    %177 = vector.extract_strided_slice %1 {offsets = [8, 0], sizes = [1, 512], strides = [1, 1]} : vector<9x512xf32> to vector<1x512xf32>
    %178 = vector.broadcast %177 : vector<1x512xf32> to vector<16x512xf32>
    %179 = arith.mulf %176, %178 : vector<16x512xf32>
    %180 = arith.addf %173, %179 : vector<16x512xf32>
    %c0_60 = arith.constant 0 : index
    %c0_61 = arith.constant 0 : index
    %181 = vector.load %arg14[%c0_60, %c0_61] : memref<1x512xf32, #tpu.memory_space<vmem>>, vector<1x512xf32>
    %182 = vector.broadcast %181 : vector<1x512xf32> to vector<16x512xf32>
    %183 = arith.mulf %180, %182 : vector<16x512xf32>
    %c0_62 = arith.constant 0 : index
    %c0_63 = arith.constant 0 : index
    %184 = vector.load %arg15[%c0_62, %c0_63] : memref<1x512xf32, #tpu.memory_space<vmem>>, vector<1x512xf32>
    %185 = vector.broadcast %184 : vector<1x512xf32> to vector<16x512xf32>
    %186 = arith.addf %183, %185 : vector<16x512xf32>
    %cst_64 = arith.constant 3.000000e+00 : f32
    %187 = vector.broadcast %cst_64 : f32 to vector<16x512xf32>
    %188 = arith.addf %186, %187 : vector<16x512xf32>
    %cst_65 = arith.constant 0.000000e+00 : f32
    %cst_66 = arith.constant 6.000000e+00 : f32
    %189 = vector.broadcast %cst_65 : f32 to vector<16x512xf32>
    %190 = arith.maximumf %189, %188 : vector<16x512xf32>
    %191 = vector.broadcast %cst_66 : f32 to vector<16x512xf32>
    %192 = arith.minimumf %191, %190 : vector<16x512xf32>
    %193 = arith.mulf %186, %192 : vector<16x512xf32>
    %cst_67 = arith.constant 0.166666672 : f32
    %194 = vector.broadcast %cst_67 : f32 to vector<16x512xf32>
    %195 = arith.mulf %193, %194 : vector<16x512xf32>
    %c0_68 = arith.constant 0 : index
    %c0_69 = arith.constant 0 : index
    %196 = vector.load %arg16[%c0_68, %c0_69] : memref<512x256xf32, #tpu.memory_space<vmem>>, vector<512x256xf32>
    %cst_70 = arith.constant dense<0.000000e+00> : vector<16x256xf32>
    %197 = tpu.matmul %195, %196, %cst_70 {dimension_numbers = #tpu.dot_dimension_numbers<[1], [0], [0], [1], [0, 0, 1, 1], [], []>} : vector<16x512xf32>, vector<512x256xf32>, vector<16x256xf32> -> vector<16x256xf32>
    %c0_71 = arith.constant 0 : index
    %c0_72 = arith.constant 0 : index
    %198 = vector.load %arg17[%c0_71, %c0_72] : memref<1x256xf32, #tpu.memory_space<vmem>>, vector<1x256xf32>
    %199 = vector.broadcast %198 : vector<1x256xf32> to vector<16x256xf32>
    %200 = arith.mulf %197, %199 : vector<16x256xf32>
    %c0_73 = arith.constant 0 : index
    %c0_74 = arith.constant 0 : index
    %201 = vector.load %arg18[%c0_73, %c0_74] : memref<1x256xf32, #tpu.memory_space<vmem>>, vector<1x256xf32>
    %202 = vector.broadcast %201 : vector<1x256xf32> to vector<16x256xf32>
    %203 = arith.addf %200, %202 : vector<16x256xf32>
    %204 = arith.addf %203, %3 : vector<16x256xf32>
    %c0_75 = arith.constant 0 : index
    %c0_76 = arith.constant 0 : index
    %c0_77 = arith.constant 0 : index
    %205 = vector.load %arg19[%c0_75, %c0_76, %c0_77] : memref<2x16x256xf32, #tpu.memory_space<vmem>>, vector<1x16x256xf32>
    %206 = vector.shape_cast %205 : vector<1x16x256xf32> to vector<16x256xf32>
    %207 = vector.shape_cast %204 : vector<16x256xf32> to vector<1x16x256xf32>
    tpu.vector_store %arg19[%c0_75, %c0_76, %c0_77], %207 {strides = array<i32>} : memref<2x16x256xf32, #tpu.memory_space<vmem>>, vector<1x16x256xf32>,
    %c1 = arith.constant 1 : index
    %c0_78 = arith.constant 0 : index
    %c0_79 = arith.constant 0 : index
    %208 = vector.load %arg1[%c1, %c0_78, %c0_79] : memref<2x16x256xf32, #tpu.memory_space<vmem>>, vector<1x16x256xf32>
    %209 = vector.shape_cast %208 : vector<1x16x256xf32> to vector<16x256xf32>
    %c0_80 = arith.constant 0 : index
    %c0_81 = arith.constant 0 : index
    %210 = vector.load %arg2[%c0_80, %c0_81] : memref<256x512xf32, #tpu.memory_space<vmem>>, vector<256x512xf32>
    %cst_82 = arith.constant dense<0.000000e+00> : vector<16x512xf32>
    %211 = tpu.matmul %209, %210, %cst_82 {dimension_numbers = #tpu.dot_dimension_numbers<[1], [0], [0], [1], [0, 0, 1, 1], [], []>} : vector<16x256xf32>, vector<256x512xf32>, vector<16x512xf32> -> vector<16x512xf32>
    %c0_83 = arith.constant 0 : index
    %c0_84 = arith.constant 0 : index
    %212 = vector.load %arg3[%c0_83, %c0_84] : memref<1x512xf32, #tpu.memory_space<vmem>>, vector<1x512xf32>
    %213 = vector.broadcast %212 : vector<1x512xf32> to vector<16x512xf32>
    %214 = arith.mulf %211, %213 : vector<16x512xf32>
    %c0_85 = arith.constant 0 : index
    %c0_86 = arith.constant 0 : index
    %215 = vector.load %arg4[%c0_85, %c0_86] : memref<1x512xf32, #tpu.memory_space<vmem>>, vector<1x512xf32>
    %216 = vector.broadcast %215 : vector<1x512xf32> to vector<16x512xf32>
    %217 = arith.addf %214, %216 : vector<16x512xf32>
    %cst_87 = arith.constant 3.000000e+00 : f32
    %218 = vector.broadcast %cst_87 : f32 to vector<16x512xf32>
    %219 = arith.addf %217, %218 : vector<16x512xf32>
    %cst_88 = arith.constant 0.000000e+00 : f32
    %cst_89 = arith.constant 6.000000e+00 : f32
    %220 = vector.broadcast %cst_88 : f32 to vector<16x512xf32>
    %221 = arith.maximumf %220, %219 : vector<16x512xf32>
    %222 = vector.broadcast %cst_89 : f32 to vector<16x512xf32>
    %223 = arith.minimumf %222, %221 : vector<16x512xf32>
    %224 = arith.mulf %217, %223 : vector<16x512xf32>
    %cst_90 = arith.constant 0.166666672 : f32
    %225 = vector.broadcast %cst_90 : f32 to vector<16x512xf32>
    %226 = arith.mulf %224, %225 : vector<16x512xf32>
    %cst_91 = arith.constant 0.000000e+00 : f32
    %227 = vector.broadcast %cst_91 : f32 to vector<1x512xf32>
    %228 = vector.extract_strided_slice %226 {offsets = [0, 0], sizes = [15, 512], strides = [1, 1]} : vector<16x512xf32> to vector<15x512xf32>
    %229 = tpu.concatenate %227, %228 in 0 : vector<1x512xf32>, vector<15x512xf32> -> vector<16x512xf32>
    %cst_92 = arith.constant 0.000000e+00 : f32
    %230 = vector.broadcast %cst_92 : f32 to vector<16x32xf32>
    %231 = vector.extract_strided_slice %229 {offsets = [0, 0], sizes = [16, 480], strides = [1, 1]} : vector<16x512xf32> to vector<16x480xf32>
    %232 = tpu.concatenate %230, %231 in 1 : vector<16x32xf32>, vector<16x480xf32> -> vector<16x512xf32>
    %233 = vector.extract_strided_slice %0 {offsets = [0, 0], sizes = [1, 512], strides = [1, 1]} : vector<9x512xf32> to vector<1x512xf32>
    %234 = vector.broadcast %233 : vector<1x512xf32> to vector<16x512xf32>
    %235 = arith.mulf %232, %234 : vector<16x512xf32>
    %236 = vector.extract_strided_slice %0 {offsets = [1, 0], sizes = [1, 512], strides = [1, 1]} : vector<9x512xf32> to vector<1x512xf32>
    %237 = vector.broadcast %236 : vector<1x512xf32> to vector<16x512xf32>
    %238 = arith.mulf %229, %237 : vector<16x512xf32>
    %239 = arith.addf %235, %238 : vector<16x512xf32>
    %cst_93 = arith.constant 0.000000e+00 : f32
    %240 = vector.broadcast %cst_93 : f32 to vector<16x32xf32>
    %241 = vector.extract_strided_slice %229 {offsets = [0, 32], sizes = [16, 480], strides = [1, 1]} : vector<16x512xf32> to vector<16x480xf32>
    %242 = tpu.concatenate %241, %240 in 1 : vector<16x480xf32>, vector<16x32xf32> -> vector<16x512xf32>
    %243 = vector.extract_strided_slice %0 {offsets = [2, 0], sizes = [1, 512], strides = [1, 1]} : vector<9x512xf32> to vector<1x512xf32>
    %244 = vector.broadcast %243 : vector<1x512xf32> to vector<16x512xf32>
    %245 = arith.mulf %242, %244 : vector<16x512xf32>
    %246 = arith.addf %239, %245 : vector<16x512xf32>
    %cst_94 = arith.constant 0.000000e+00 : f32
    %247 = vector.broadcast %cst_94 : f32 to vector<16x32xf32>
    %248 = vector.extract_strided_slice %226 {offsets = [0, 0], sizes = [16, 480], strides = [1, 1]} : vector<16x512xf32> to vector<16x480xf32>
    %249 = tpu.concatenate %247, %248 in 1 : vector<16x32xf32>, vector<16x480xf32> -> vector<16x512xf32>
    %250 = vector.extract_strided_slice %0 {offsets = [3, 0], sizes = [1, 512], strides = [1, 1]} : vector<9x512xf32> to vector<1x512xf32>
    %251 = vector.broadcast %250 : vector<1x512xf32> to vector<16x512xf32>
    %252 = arith.mulf %249, %251 : vector<16x512xf32>
    %253 = arith.addf %246, %252 : vector<16x512xf32>
    %254 = vector.extract_strided_slice %0 {offsets = [4, 0], sizes = [1, 512], strides = [1, 1]} : vector<9x512xf32> to vector<1x512xf32>
    %255 = vector.broadcast %254 : vector<1x512xf32> to vector<16x512xf32>
    %256 = arith.mulf %226, %255 : vector<16x512xf32>
    %257 = arith.addf %253, %256 : vector<16x512xf32>
    %cst_95 = arith.constant 0.000000e+00 : f32
    %258 = vector.broadcast %cst_95 : f32 to vector<16x32xf32>
    %259 = vector.extract_strided_slice %226 {offsets = [0, 32], sizes = [16, 480], strides = [1, 1]} : vector<16x512xf32> to vector<16x480xf32>
    %260 = tpu.concatenate %259, %258 in 1 : vector<16x480xf32>, vector<16x32xf32> -> vector<16x512xf32>
    %261 = vector.extract_strided_slice %0 {offsets = [5, 0], sizes = [1, 512], strides = [1, 1]} : vector<9x512xf32> to vector<1x512xf32>
    %262 = vector.broadcast %261 : vector<1x512xf32> to vector<16x512xf32>
    %263 = arith.mulf %260, %262 : vector<16x512xf32>
    %264 = arith.addf %257, %263 : vector<16x512xf32>
    %cst_96 = arith.constant 0.000000e+00 : f32
    %265 = vector.broadcast %cst_96 : f32 to vector<1x512xf32>
    %266 = vector.extract_strided_slice %226 {offsets = [1, 0], sizes = [15, 512], strides = [1, 1]} : vector<16x512xf32> to vector<15x512xf32>
    %267 = tpu.concatenate %266, %265 in 0 : vector<15x512xf32>, vector<1x512xf32> -> vector<16x512xf32>
    %cst_97 = arith.constant 0.000000e+00 : f32
    %268 = vector.broadcast %cst_97 : f32 to vector<16x32xf32>
    %269 = vector.extract_strided_slice %267 {offsets = [0, 0], sizes = [16, 480], strides = [1, 1]} : vector<16x512xf32> to vector<16x480xf32>
    %270 = tpu.concatenate %268, %269 in 1 : vector<16x32xf32>, vector<16x480xf32> -> vector<16x512xf32>
    %271 = vector.extract_strided_slice %0 {offsets = [6, 0], sizes = [1, 512], strides = [1, 1]} : vector<9x512xf32> to vector<1x512xf32>
    %272 = vector.broadcast %271 : vector<1x512xf32> to vector<16x512xf32>
    %273 = arith.mulf %270, %272 : vector<16x512xf32>
    %274 = arith.addf %264, %273 : vector<16x512xf32>
    %275 = vector.extract_strided_slice %0 {offsets = [7, 0], sizes = [1, 512], strides = [1, 1]} : vector<9x512xf32> to vector<1x512xf32>
    %276 = vector.broadcast %275 : vector<1x512xf32> to vector<16x512xf32>
    %277 = arith.mulf %267, %276 : vector<16x512xf32>
    %278 = arith.addf %274, %277 : vector<16x512xf32>
    %cst_98 = arith.constant 0.000000e+00 : f32
    %279 = vector.broadcast %cst_98 : f32 to vector<16x32xf32>
    %280 = vector.extract_strided_slice %267 {offsets = [0, 32], sizes = [16, 480], strides = [1, 1]} : vector<16x512xf32> to vector<16x480xf32>
    %281 = tpu.concatenate %280, %279 in 1 : vector<16x480xf32>, vector<16x32xf32> -> vector<16x512xf32>
    %282 = vector.extract_strided_slice %0 {offsets = [8, 0], sizes = [1, 512], strides = [1, 1]} : vector<9x512xf32> to vector<1x512xf32>
    %283 = vector.broadcast %282 : vector<1x512xf32> to vector<16x512xf32>
    %284 = arith.mulf %281, %283 : vector<16x512xf32>
    %285 = arith.addf %278, %284 : vector<16x512xf32>
    %c0_99 = arith.constant 0 : index
    %c0_100 = arith.constant 0 : index
    %286 = vector.load %arg6[%c0_99, %c0_100] : memref<1x512xf32, #tpu.memory_space<vmem>>, vector<1x512xf32>
    %287 = vector.broadcast %286 : vector<1x512xf32> to vector<16x512xf32>
    %288 = arith.mulf %285, %287 : vector<16x512xf32>
    %c0_101 = arith.constant 0 : index
    %c0_102 = arith.constant 0 : index
    %289 = vector.load %arg7[%c0_101, %c0_102] : memref<1x512xf32, #tpu.memory_space<vmem>>, vector<1x512xf32>
    %290 = vector.broadcast %289 : vector<1x512xf32> to vector<16x512xf32>
    %291 = arith.addf %288, %290 : vector<16x512xf32>
    %cst_103 = arith.constant 3.000000e+00 : f32
    %292 = vector.broadcast %cst_103 : f32 to vector<16x512xf32>
    %293 = arith.addf %291, %292 : vector<16x512xf32>
    %cst_104 = arith.constant 0.000000e+00 : f32
    %cst_105 = arith.constant 6.000000e+00 : f32
    %294 = vector.broadcast %cst_104 : f32 to vector<16x512xf32>
    %295 = arith.maximumf %294, %293 : vector<16x512xf32>
    %296 = vector.broadcast %cst_105 : f32 to vector<16x512xf32>
    %297 = arith.minimumf %296, %295 : vector<16x512xf32>
    %298 = arith.mulf %291, %297 : vector<16x512xf32>
    %cst_106 = arith.constant 0.166666672 : f32
    %299 = vector.broadcast %cst_106 : f32 to vector<16x512xf32>
    %300 = arith.mulf %298, %299 : vector<16x512xf32>
    %cst_107 = arith.constant dense<0.000000e+00> : vector<512xf32>
    %301 = vector.multi_reduction <add>, %300, %cst_107 [0] : vector<16x512xf32> to vector<512xf32>
    %302 = vector.shape_cast %301 : vector<512xf32> to vector<1x512xf32>
    %c0_108 = arith.constant 0 : index
    %c0_109 = arith.constant 0 : index
    %303 = vector.load %arg12[%c0_108, %c0_109] : memref<512x32xf32, #tpu.memory_space<vmem>>, vector<512x32xf32>
    %cst_110 = arith.constant dense<0.000000e+00> : vector<1x32xf32>
    %304 = tpu.matmul %302, %303, %cst_110 {dimension_numbers = #tpu.dot_dimension_numbers<[1], [0], [0], [1], [0, 0, 1, 1], [], []>} : vector<1x512xf32>, vector<512x32xf32>, vector<1x32xf32> -> vector<1x32xf32>
    %cst_111 = arith.constant 3.906250e-03 : f32
    %305 = vector.broadcast %cst_111 : f32 to vector<1x32xf32>
    %306 = arith.mulf %304, %305 : vector<1x32xf32>
    %c0_112 = arith.constant 0 : index
    %c0_113 = arith.constant 0 : index
    %307 = vector.load %arg8[%c0_112, %c0_113] : memref<32x8xf32, #tpu.memory_space<vmem>>, vector<32x8xf32>
    %cst_114 = arith.constant dense<0.000000e+00> : vector<1x8xf32>
    %308 = tpu.matmul %306, %307, %cst_114 {dimension_numbers = #tpu.dot_dimension_numbers<[1], [0], [0], [1], [0, 0, 1, 1], [], []>} : vector<1x32xf32>, vector<32x8xf32>, vector<1x8xf32> -> vector<1x8xf32>
    %c0_115 = arith.constant 0 : index
    %c0_116 = arith.constant 0 : index
    %309 = vector.load %arg9[%c0_115, %c0_116] : memref<1x8xf32, #tpu.memory_space<vmem>>, vector<1x8xf32>
    %310 = arith.addf %308, %309 : vector<1x8xf32>
    %cst_117 = arith.constant 0.000000e+00 : f32
    %311 = vector.broadcast %cst_117 : f32 to vector<1x8xf32>
    %312 = arith.maximumf %310, %311 : vector<1x8xf32>
    %c0_118 = arith.constant 0 : index
    %c0_119 = arith.constant 0 : index
    %313 = vector.load %arg10[%c0_118, %c0_119] : memref<8x32xf32, #tpu.memory_space<vmem>>, vector<8x32xf32>
    %cst_120 = arith.constant dense<0.000000e+00> : vector<1x32xf32>
    %314 = tpu.matmul %312, %313, %cst_120 {dimension_numbers = #tpu.dot_dimension_numbers<[1], [0], [0], [1], [0, 0, 1, 1], [], []>} : vector<1x8xf32>, vector<8x32xf32>, vector<1x32xf32> -> vector<1x32xf32>
    %c0_121 = arith.constant 0 : index
    %c0_122 = arith.constant 0 : index
    %315 = vector.load %arg11[%c0_121, %c0_122] : memref<1x32xf32, #tpu.memory_space<vmem>>, vector<1x32xf32>
    %316 = arith.addf %314, %315 : vector<1x32xf32>
    %cst_123 = arith.constant 3.000000e+00 : f32
    %317 = vector.broadcast %cst_123 : f32 to vector<1x32xf32>
    %318 = arith.addf %316, %317 : vector<1x32xf32>
    %cst_124 = arith.constant 0.000000e+00 : f32
    %cst_125 = arith.constant 6.000000e+00 : f32
    %319 = vector.broadcast %cst_124 : f32 to vector<1x32xf32>
    %320 = arith.maximumf %319, %318 : vector<1x32xf32>
    %321 = vector.broadcast %cst_125 : f32 to vector<1x32xf32>
    %322 = arith.minimumf %321, %320 : vector<1x32xf32>
    %cst_126 = arith.constant 0.166666672 : f32
    %323 = vector.broadcast %cst_126 : f32 to vector<1x32xf32>
    %324 = arith.mulf %322, %323 : vector<1x32xf32>
    %325 = tpu.concatenate %324, %324, %324, %324, %324, %324, %324, %324, %324, %324, %324, %324, %324, %324, %324, %324 in 1 : vector<1x32xf32>, vector<1x32xf32>, vector<1x32xf32>, vector<1x32xf32>, vector<1x32xf32>, vector<1x32xf32>, vector<1x32xf32>, vector<1x32xf32>, vector<1x32xf32>, vector<1x32xf32>, vector<1x32xf32>, vector<1x32xf32>, vector<1x32xf32>, vector<1x32xf32>, vector<1x32xf32>, vector<1x32xf32> -> vector<1x512xf32>
    %326 = vector.broadcast %325 : vector<1x512xf32> to vector<16x512xf32>
    %327 = arith.mulf %300, %326 : vector<16x512xf32>
    %cst_127 = arith.constant 0.000000e+00 : f32
    %328 = vector.broadcast %cst_127 : f32 to vector<1x512xf32>
    %329 = vector.extract_strided_slice %327 {offsets = [0, 0], sizes = [15, 512], strides = [1, 1]} : vector<16x512xf32> to vector<15x512xf32>
    %330 = tpu.concatenate %328, %329 in 0 : vector<1x512xf32>, vector<15x512xf32> -> vector<16x512xf32>
    %cst_128 = arith.constant 0.000000e+00 : f32
    %331 = vector.broadcast %cst_128 : f32 to vector<16x32xf32>
    %332 = vector.extract_strided_slice %330 {offsets = [0, 0], sizes = [16, 480], strides = [1, 1]} : vector<16x512xf32> to vector<16x480xf32>
    %333 = tpu.concatenate %331, %332 in 1 : vector<16x32xf32>, vector<16x480xf32> -> vector<16x512xf32>
    %334 = vector.extract_strided_slice %1 {offsets = [0, 0], sizes = [1, 512], strides = [1, 1]} : vector<9x512xf32> to vector<1x512xf32>
    %335 = vector.broadcast %334 : vector<1x512xf32> to vector<16x512xf32>
    %336 = arith.mulf %333, %335 : vector<16x512xf32>
    %337 = vector.extract_strided_slice %1 {offsets = [1, 0], sizes = [1, 512], strides = [1, 1]} : vector<9x512xf32> to vector<1x512xf32>
    %338 = vector.broadcast %337 : vector<1x512xf32> to vector<16x512xf32>
    %339 = arith.mulf %330, %338 : vector<16x512xf32>
    %340 = arith.addf %336, %339 : vector<16x512xf32>
    %cst_129 = arith.constant 0.000000e+00 : f32
    %341 = vector.broadcast %cst_129 : f32 to vector<16x32xf32>
    %342 = vector.extract_strided_slice %330 {offsets = [0, 32], sizes = [16, 480], strides = [1, 1]} : vector<16x512xf32> to vector<16x480xf32>
    %343 = tpu.concatenate %342, %341 in 1 : vector<16x480xf32>, vector<16x32xf32> -> vector<16x512xf32>
    %344 = vector.extract_strided_slice %1 {offsets = [2, 0], sizes = [1, 512], strides = [1, 1]} : vector<9x512xf32> to vector<1x512xf32>
    %345 = vector.broadcast %344 : vector<1x512xf32> to vector<16x512xf32>
    %346 = arith.mulf %343, %345 : vector<16x512xf32>
    %347 = arith.addf %340, %346 : vector<16x512xf32>
    %cst_130 = arith.constant 0.000000e+00 : f32
    %348 = vector.broadcast %cst_130 : f32 to vector<16x32xf32>
    %349 = vector.extract_strided_slice %327 {offsets = [0, 0], sizes = [16, 480], strides = [1, 1]} : vector<16x512xf32> to vector<16x480xf32>
    %350 = tpu.concatenate %348, %349 in 1 : vector<16x32xf32>, vector<16x480xf32> -> vector<16x512xf32>
    %351 = vector.extract_strided_slice %1 {offsets = [3, 0], sizes = [1, 512], strides = [1, 1]} : vector<9x512xf32> to vector<1x512xf32>
    %352 = vector.broadcast %351 : vector<1x512xf32> to vector<16x512xf32>
    %353 = arith.mulf %350, %352 : vector<16x512xf32>
    %354 = arith.addf %347, %353 : vector<16x512xf32>
    %355 = vector.extract_strided_slice %1 {offsets = [4, 0], sizes = [1, 512], strides = [1, 1]} : vector<9x512xf32> to vector<1x512xf32>
    %356 = vector.broadcast %355 : vector<1x512xf32> to vector<16x512xf32>
    %357 = arith.mulf %327, %356 : vector<16x512xf32>
    %358 = arith.addf %354, %357 : vector<16x512xf32>
    %cst_131 = arith.constant 0.000000e+00 : f32
    %359 = vector.broadcast %cst_131 : f32 to vector<16x32xf32>
    %360 = vector.extract_strided_slice %327 {offsets = [0, 32], sizes = [16, 480], strides = [1, 1]} : vector<16x512xf32> to vector<16x480xf32>
    %361 = tpu.concatenate %360, %359 in 1 : vector<16x480xf32>, vector<16x32xf32> -> vector<16x512xf32>
    %362 = vector.extract_strided_slice %1 {offsets = [5, 0], sizes = [1, 512], strides = [1, 1]} : vector<9x512xf32> to vector<1x512xf32>
    %363 = vector.broadcast %362 : vector<1x512xf32> to vector<16x512xf32>
    %364 = arith.mulf %361, %363 : vector<16x512xf32>
    %365 = arith.addf %358, %364 : vector<16x512xf32>
    %cst_132 = arith.constant 0.000000e+00 : f32
    %366 = vector.broadcast %cst_132 : f32 to vector<1x512xf32>
    %367 = vector.extract_strided_slice %327 {offsets = [1, 0], sizes = [15, 512], strides = [1, 1]} : vector<16x512xf32> to vector<15x512xf32>
    %368 = tpu.concatenate %367, %366 in 0 : vector<15x512xf32>, vector<1x512xf32> -> vector<16x512xf32>
    %cst_133 = arith.constant 0.000000e+00 : f32
    %369 = vector.broadcast %cst_133 : f32 to vector<16x32xf32>
    %370 = vector.extract_strided_slice %368 {offsets = [0, 0], sizes = [16, 480], strides = [1, 1]} : vector<16x512xf32> to vector<16x480xf32>
    %371 = tpu.concatenate %369, %370 in 1 : vector<16x32xf32>, vector<16x480xf32> -> vector<16x512xf32>
    %372 = vector.extract_strided_slice %1 {offsets = [6, 0], sizes = [1, 512], strides = [1, 1]} : vector<9x512xf32> to vector<1x512xf32>
    %373 = vector.broadcast %372 : vector<1x512xf32> to vector<16x512xf32>
    %374 = arith.mulf %371, %373 : vector<16x512xf32>
    %375 = arith.addf %365, %374 : vector<16x512xf32>
    %376 = vector.extract_strided_slice %1 {offsets = [7, 0], sizes = [1, 512], strides = [1, 1]} : vector<9x512xf32> to vector<1x512xf32>
    %377 = vector.broadcast %376 : vector<1x512xf32> to vector<16x512xf32>
    %378 = arith.mulf %368, %377 : vector<16x512xf32>
    %379 = arith.addf %375, %378 : vector<16x512xf32>
    %cst_134 = arith.constant 0.000000e+00 : f32
    %380 = vector.broadcast %cst_134 : f32 to vector<16x32xf32>
    %381 = vector.extract_strided_slice %368 {offsets = [0, 32], sizes = [16, 480], strides = [1, 1]} : vector<16x512xf32> to vector<16x480xf32>
    %382 = tpu.concatenate %381, %380 in 1 : vector<16x480xf32>, vector<16x32xf32> -> vector<16x512xf32>
    %383 = vector.extract_strided_slice %1 {offsets = [8, 0], sizes = [1, 512], strides = [1, 1]} : vector<9x512xf32> to vector<1x512xf32>
    %384 = vector.broadcast %383 : vector<1x512xf32> to vector<16x512xf32>
    %385 = arith.mulf %382, %384 : vector<16x512xf32>
    %386 = arith.addf %379, %385 : vector<16x512xf32>
    %c0_135 = arith.constant 0 : index
    %c0_136 = arith.constant 0 : index
    %387 = vector.load %arg14[%c0_135, %c0_136] : memref<1x512xf32, #tpu.memory_space<vmem>>, vector<1x512xf32>
    %388 = vector.broadcast %387 : vector<1x512xf32> to vector<16x512xf32>
    %389 = arith.mulf %386, %388 : vector<16x512xf32>
    %c0_137 = arith.constant 0 : index
    %c0_138 = arith.constant 0 : index
    %390 = vector.load %arg15[%c0_137, %c0_138] : memref<1x512xf32, #tpu.memory_space<vmem>>, vector<1x512xf32>
    %391 = vector.broadcast %390 : vector<1x512xf32> to vector<16x512xf32>
    %392 = arith.addf %389, %391 : vector<16x512xf32>
    %cst_139 = arith.constant 3.000000e+00 : f32
    %393 = vector.broadcast %cst_139 : f32 to vector<16x512xf32>
    %394 = arith.addf %392, %393 : vector<16x512xf32>
    %cst_140 = arith.constant 0.000000e+00 : f32
    %cst_141 = arith.constant 6.000000e+00 : f32
    %395 = vector.broadcast %cst_140 : f32 to vector<16x512xf32>
    %396 = arith.maximumf %395, %394 : vector<16x512xf32>
    %397 = vector.broadcast %cst_141 : f32 to vector<16x512xf32>
    %398 = arith.minimumf %397, %396 : vector<16x512xf32>
    %399 = arith.mulf %392, %398 : vector<16x512xf32>
    %cst_142 = arith.constant 0.166666672 : f32
    %400 = vector.broadcast %cst_142 : f32 to vector<16x512xf32>
    %401 = arith.mulf %399, %400 : vector<16x512xf32>
    %c0_143 = arith.constant 0 : index
    %c0_144 = arith.constant 0 : index
    %402 = vector.load %arg16[%c0_143, %c0_144] : memref<512x256xf32, #tpu.memory_space<vmem>>, vector<512x256xf32>
    %cst_145 = arith.constant dense<0.000000e+00> : vector<16x256xf32>
    %403 = tpu.matmul %401, %402, %cst_145 {dimension_numbers = #tpu.dot_dimension_numbers<[1], [0], [0], [1], [0, 0, 1, 1], [], []>} : vector<16x512xf32>, vector<512x256xf32>, vector<16x256xf32> -> vector<16x256xf32>
    %c0_146 = arith.constant 0 : index
    %c0_147 = arith.constant 0 : index
    %404 = vector.load %arg17[%c0_146, %c0_147] : memref<1x256xf32, #tpu.memory_space<vmem>>, vector<1x256xf32>
    %405 = vector.broadcast %404 : vector<1x256xf32> to vector<16x256xf32>
    %406 = arith.mulf %403, %405 : vector<16x256xf32>
    %c0_148 = arith.constant 0 : index
    %c0_149 = arith.constant 0 : index
    %407 = vector.load %arg18[%c0_148, %c0_149] : memref<1x256xf32, #tpu.memory_space<vmem>>, vector<1x256xf32>
    %408 = vector.broadcast %407 : vector<1x256xf32> to vector<16x256xf32>
    %409 = arith.addf %406, %408 : vector<16x256xf32>
    %410 = arith.addf %409, %209 : vector<16x256xf32>
    %c1_150 = arith.constant 1 : index
    %c0_151 = arith.constant 0 : index
    %c0_152 = arith.constant 0 : index
    %411 = vector.load %arg19[%c1_150, %c0_151, %c0_152] : memref<2x16x256xf32, #tpu.memory_space<vmem>>, vector<1x16x256xf32>
    %412 = vector.shape_cast %411 : vector<1x16x256xf32> to vector<16x256xf32>
    %413 = vector.shape_cast %410 : vector<16x256xf32> to vector<1x16x256xf32>
    tpu.vector_store %arg19[%c1_150, %c0_151, %c0_152], %413 {strides = array<i32>} : memref<2x16x256xf32, #tpu.memory_space<vmem>>, vector<1x16x256xf32>,
    return
  }
  func.func @transform_0(%arg0: i32) -> (i32, i32, i32) {
    %c0_i32 = arith.constant 0 : i32
    %c0_i32_0 = arith.constant 0 : i32
    %c0_i32_1 = arith.constant 0 : i32
    return %arg0, %c0_i32, %c0_i32_0 : i32, i32, i32
  }
  func.func @transform_1(%arg0: i32) -> (i32, i32) {
    %c0_i32 = arith.constant 0 : i32
    %c0_i32_0 = arith.constant 0 : i32
    %c0_i32_1 = arith.constant 0 : i32
    return %c0_i32, %c0_i32_0 : i32, i32
  }
  func.func @transform_2(%arg0: i32) -> (i32, i32) {
    %c0_i32 = arith.constant 0 : i32
    %c0_i32_0 = arith.constant 0 : i32
    %c0_i32_1 = arith.constant 0 : i32
    return %c0_i32, %c0_i32_0 : i32, i32
  }
  func.func @transform_3(%arg0: i32) -> (i32, i32) {
    %c0_i32 = arith.constant 0 : i32
    %c0_i32_0 = arith.constant 0 : i32
    %c0_i32_1 = arith.constant 0 : i32
    return %c0_i32, %c0_i32_0 : i32, i32
  }
  func.func @transform_4(%arg0: i32) -> (i32, i32) {
    %c0_i32 = arith.constant 0 : i32
    %c0_i32_0 = arith.constant 0 : i32
    %c0_i32_1 = arith.constant 0 : i32
    return %c0_i32, %c0_i32_0 : i32, i32
  }
  func.func @transform_5(%arg0: i32) -> (i32, i32) {
    %c0_i32 = arith.constant 0 : i32
    %c0_i32_0 = arith.constant 0 : i32
    %c0_i32_1 = arith.constant 0 : i32
    return %c0_i32, %c0_i32_0 : i32, i32
  }
  func.func @transform_6(%arg0: i32) -> (i32, i32) {
    %c0_i32 = arith.constant 0 : i32
    %c0_i32_0 = arith.constant 0 : i32
    %c0_i32_1 = arith.constant 0 : i32
    return %c0_i32, %c0_i32_0 : i32, i32
  }
  func.func @transform_7(%arg0: i32) -> (i32, i32) {
    %c0_i32 = arith.constant 0 : i32
    %c0_i32_0 = arith.constant 0 : i32
    %c0_i32_1 = arith.constant 0 : i32
    return %c0_i32, %c0_i32_0 : i32, i32
  }
  func.func @transform_8(%arg0: i32) -> (i32, i32) {
    %c0_i32 = arith.constant 0 : i32
    %c0_i32_0 = arith.constant 0 : i32
    %c0_i32_1 = arith.constant 0 : i32
    return %c0_i32, %c0_i32_0 : i32, i32
  }
  func.func @transform_9(%arg0: i32) -> (i32, i32) {
    %c0_i32 = arith.constant 0 : i32
    %c0_i32_0 = arith.constant 0 : i32
    %c0_i32_1 = arith.constant 0 : i32
    return %c0_i32, %c0_i32_0 : i32, i32
  }
  func.func @transform_10(%arg0: i32) -> (i32, i32) {
    %c0_i32 = arith.constant 0 : i32
    %c0_i32_0 = arith.constant 0 : i32
    %c0_i32_1 = arith.constant 0 : i32
    return %c0_i32, %c0_i32_0 : i32, i32
  }
  func.func @transform_11(%arg0: i32) -> (i32, i32) {
    %c0_i32 = arith.constant 0 : i32
    %c0_i32_0 = arith.constant 0 : i32
    %c0_i32_1 = arith.constant 0 : i32
    return %c0_i32, %c0_i32_0 : i32, i32
  }
  func.func @transform_12(%arg0: i32) -> (i32, i32) {
    %c0_i32 = arith.constant 0 : i32
    %c0_i32_0 = arith.constant 0 : i32
    %c0_i32_1 = arith.constant 0 : i32
    return %c0_i32, %c0_i32_0 : i32, i32
  }
  func.func @transform_13(%arg0: i32) -> (i32, i32) {
    %c0_i32 = arith.constant 0 : i32
    %c0_i32_0 = arith.constant 0 : i32
    %c0_i32_1 = arith.constant 0 : i32
    return %c0_i32, %c0_i32_0 : i32, i32
  }
  func.func @transform_14(%arg0: i32) -> (i32, i32) {
    %c0_i32 = arith.constant 0 : i32
    %c0_i32_0 = arith.constant 0 : i32
    %c0_i32_1 = arith.constant 0 : i32
    return %c0_i32, %c0_i32_0 : i32, i32
  }
  func.func @transform_15(%arg0: i32) -> (i32, i32) {
    %c0_i32 = arith.constant 0 : i32
    %c0_i32_0 = arith.constant 0 : i32
    %c0_i32_1 = arith.constant 0 : i32
    return %c0_i32, %c0_i32_0 : i32, i32
  }
  func.func @transform_16(%arg0: i32) -> (i32, i32) {
    %c0_i32 = arith.constant 0 : i32
    %c0_i32_0 = arith.constant 0 : i32
    %c0_i32_1 = arith.constant 0 : i32
    return %c0_i32, %c0_i32_0 : i32, i32
  }
  func.func @transform_17(%arg0: i32) -> (i32, i32) {
    %c0_i32 = arith.constant 0 : i32
    %c0_i32_0 = arith.constant 0 : i32
    %c0_i32_1 = arith.constant 0 : i32
    return %c0_i32, %c0_i32_0 : i32, i32
  }
  func.func @transform_18(%arg0: i32) -> (i32, i32, i32) {
    %c0_i32 = arith.constant 0 : i32
    %c0_i32_0 = arith.constant 0 : i32
    %c0_i32_1 = arith.constant 0 : i32
    return %arg0, %c0_i32, %c0_i32_0 : i32, i32, i32
  }
}

</mosaic_0001>

<llo_original>
// kernel: tile.69
$region0: #{tile.69}
  %s0 = inlined_call_operand.vmem [shape: f32[9,16,32], index: 0, kind: input, shape index: {}]
  %s1 = inlined_call_operand.vmem [shape: f32[9,512], index: 1, kind: output, shape index: {}]
  %v2 = vld [vmem:[%s0] ss:$4 sm:$0xff]
  %vm3 = vcmask 261120
  %4 = vst.msk [vmem:[%s1] ss:$8 sm:$0xf] %vm3, %v2
  %s5 = scalar_lea.vmem %s1, 4294967265
  %6 = vst.msk [vmem:[%s5] ss:$8 sm:$0xf0] %vm3, %v2
  %s7 = scalar_lea.vmem %s0, 32
  %v8 = vld [vmem:[%s7] ss:$4 sm:$0xff]
  %vm9 = vcmask 261120
  %s10 = scalar_lea.vmem %s1, 2
  %11 = vst.msk [vmem:[%s10] ss:$8 sm:$0xf] %vm9, %v8
  %s12 = scalar_lea.vmem %s1, 4294967267
  %13 = vst.msk [vmem:[%s12] ss:$8 sm:$0xf0] %vm9, %v8
  %s14 = scalar_lea.vmem %s0, 64
  %v15 = vld [vmem:[%s14] ss:$4 sm:$0xff]
  %vm16 = vcmask 261120
  %s17 = scalar_lea.vmem %s1, 4
  %18 = vst.msk [vmem:[%s17] ss:$8 sm:$0xf] %vm16, %v15
  %s19 = scalar_lea.vmem %s1, 4294967269
  %20 = vst.msk [vmem:[%s19] ss:$8 sm:$0xf0] %vm16, %v15
  %s21 = scalar_lea.vmem %s0, 96
  %v22 = vld [vmem:[%s21] ss:$4 sm:$0xff]
  %vm23 = vcmask 261120
  %s24 = scalar_lea.vmem %s1, 6
  %25 = vst.msk [vmem:[%s24] ss:$8 sm:$0xf] %vm23, %v22
  %s26 = scalar_lea.vmem %s1, 4294967271
  %27 = vst.msk [vmem:[%s26] ss:$8 sm:$0xf0] %vm23, %v22
  %s28 = scalar_lea.vmem %s0, 128
  %v29 = vld [vmem:[%s28] ss:$4 sm:$0xf]
  %vm30 = vcmask 261120
  %s31 = scalar_lea.vmem %s1, 32
  %32 = vst.msk [vmem:[%s31] ss:$8 sm:$0xf] %vm30, %v29
  %s33 = scalar_lea.vmem %s0, 3
  %s34 = smov 3
  %v35 = vld [vmem:[%s33] ss:$16 sm:%s34]
  %s36 = scalar_lea.vmem %s0, 3
  %s37 = smov 12
  %v38 = vld [vmem:[%s36] ss:$16 sm:%s37]
  %vm39 = vcmask 1043458
  %v40 = vsel %vm39, %v38, %v35
  %s41 = scalar_lea.vmem %s0, 3
  %s42 = smov 48
  %v43 = vld [vmem:[%s41] ss:$16 sm:%s42]
  %vm44 = vcmask 1045508
  %v45 = vsel %vm44, %v43, %v40
  %s46 = scalar_lea.vmem %s0, 3
  %s47 = smov 192
  %v48 = vld [vmem:[%s46] ss:$16 sm:%s47]
  %vm49 = vcmask 1047558
  %v50 = vsel %vm49, %v48, %v45
  %51 = vrot.lane.b32.xlu0 %v50, 96
  %v52 = vpop.permute.xlu0 %51
  %vm53 = vcmask 1048320
  %54 = vst.msk [vmem:[%s1] sm:$0xff] %vm53, %v52
  %s55 = scalar_lea.vmem %s0, 131
  %s56 = smov 3
  %v57 = vld [vmem:[%s55] ss:$-124 sm:%s56]
  %s58 = scalar_lea.vmem %s0, 4294967287
  %s59 = smov 12
  %v60 = vld [vmem:[%s58] ss:$16 sm:%s59]
  %vm61 = vcmask 1043458
  %v62 = vsel %vm61, %v60, %v57
  %s63 = scalar_lea.vmem %s0, 4294967287
  %s64 = smov 48
  %v65 = vld [vmem:[%s63] ss:$16 sm:%s64]
  %vm66 = vcmask 1045508
  %v67 = vsel %vm66, %v65, %v62
  %s68 = scalar_lea.vmem %s0, 4294967287
  %s69 = smov 192
  %v70 = vld [vmem:[%s68] ss:$16 sm:%s69]
  %vm71 = vcmask 1047558
  %v72 = vsel %vm71, %v70, %v67
  %73 = vrot.lane.b32.xlu0 %v72, 96
  %v74 = vpop.permute.xlu0 %73
  %vm75 = vcmask 1048320
  %s76 = scalar_lea.vmem %s1, 32
  %77 = vst.msk [vmem:[%s76] ss:$-24 sm:$0x3] %vm75, %v74
  %s78 = scalar_lea.vmem %s1, 7
  %79 = vst.msk [vmem:[%s78] sm:$0xfc] %vm75, %v74
  %s80 = scalar_lea.vmem %s0, 135
  %s81 = smov 3
  %v82 = vld [vmem:[%s80] ss:$-16 sm:%s81]
  %s83 = scalar_lea.vmem %s0, 4294967275
  %s84 = smov 12
  %v85 = vld [vmem:[%s83] ss:$16 sm:%s84]
  %vm86 = vcmask 1043458
  %v87 = vsel %vm86, %v85, %v82
  %s88 = scalar_lea.vmem %s0, 4294967275
  %s89 = smov 48
  %v90 = vld [vmem:[%s88] ss:$16 sm:%s89]
  %vm91 = vcmask 1045508
  %v92 = vsel %vm91, %v90, %v87
  %s93 = scalar_lea.vmem %s0, 4294967275
  %s94 = smov 192
  %v95 = vld [vmem:[%s93] ss:$16 sm:%s94]
  %vm96 = vcmask 1047558
  %v97 = vsel %vm96, %v95, %v92
  %98 = vrot.lane.b32.xlu0 %v97, 96
  %v99 = vpop.permute.xlu0 %98
  %vm100 = vcmask 1048320
  %s101 = scalar_lea.vmem %s1, 40
  %102 = vst.msk [vmem:[%s101] ss:$-25 sm:$0x3] %vm100, %v99
  %s103 = scalar_lea.vmem %s1, 14
  %104 = vst.msk [vmem:[%s103] sm:$0xfc] %vm100, %v99
  %s105 = scalar_lea.vmem %s0, 139
  %v106 = vld [vmem:[%s105] sm:$0x1]
  %s107 = scalar_lea.vmem %s0, 91
  %s108 = smov 6
  %v109 = vld [vmem:[%s107] ss:$16 sm:%s108]
  %vm110 = vcmask 1042433
  %v111 = vsel %vm110, %v109, %v106
  %s112 = scalar_lea.vmem %s0, 4294967263
  %s113 = smov 24
  %v114 = vld [vmem:[%s112] ss:$16 sm:%s113]
  %vm115 = vcmask 1044483
  %v116 = vsel %vm115, %v114, %v111
  %s117 = scalar_lea.vmem %s0, 4294967263
  %s118 = smov 96
  %v119 = vld [vmem:[%s117] ss:$16 sm:%s118]
  %vm120 = vcmask 1046533
  %v121 = vsel %vm120, %v119, %v116
  %s122 = scalar_lea.vmem %s0, 72
  %v123 = vld [vmem:[%s122] sm:$0x80]
  %vm124 = vcmask 1047559
  %v125 = vsel %vm124, %v123, %v121
  %126 = vrot.lane.b32.xlu0 %v125, 96
  %v127 = vpop.permute.xlu0 %126
  %vm128 = vcmask 1048320
  %s129 = scalar_lea.vmem %s1, 48
  %130 = vst.msk [vmem:[%s129] ss:$-26 sm:$0x3] %vm128, %v127
  %s131 = scalar_lea.vmem %s1, 21
  %132 = vst.msk [vmem:[%s131] sm:$0xfc] %vm128, %v127
  %s133 = scalar_lea.vmem %s0, 143
  %s134 = smov 3
  %v135 = vld [vmem:[%s133] ss:$-48 sm:%s134]
  %s136 = scalar_lea.vmem %s0, 79
  %s137 = smov 12
  %v138 = vld [vmem:[%s136] ss:$16 sm:%s137]
  %vm139 = vcmask 1043458
  %v140 = vsel %vm139, %v138, %v135
  %141 = vrot.lane.b32.xlu0 %v140, 96
  %v142 = vpop.permute.xlu0 %141
  %vm143 = vcmask 1048320
  %s144 = scalar_lea.vmem %s1, 56
  %145 = vst.msk [vmem:[%s144] ss:$-27 sm:$0x3] %vm143, %v142
  %s146 = scalar_lea.vmem %s1, 28
  %147 = vst.msk [vmem:[%s146] sm:$0xc] %vm143, %v142
  %s148 = scalar_lea.vmem %s0, 2
  %s149 = smov 3
  %v150 = vld [vmem:[%s148] ss:$16 sm:%s149]
  %s151 = scalar_lea.vmem %s0, 2
  %s152 = smov 12
  %v153 = vld [vmem:[%s151] ss:$16 sm:%s152]
  %vm154 = vcmask 1043458
  %v155 = vsel %vm154, %v153, %v150
  %s156 = scalar_lea.vmem %s0, 2
  %s157 = smov 48
  %v158 = vld [vmem:[%s156] ss:$16 sm:%s157]
  %vm159 = vcmask 1045508
  %v160 = vsel %vm159, %v158, %v155
  %s161 = scalar_lea.vmem %s0, 2
  %s162 = smov 192
  %v163 = vld [vmem:[%s161] ss:$16 sm:%s162]
  %vm164 = vcmask 1047558
  %v165 = vsel %vm164, %v163, %v160
  %166 = vrot.lane.b32.xlu0 %v165, 64
  %v167 = vpop.permute.xlu0 %166
  %vm168 = vcmask 785920
  %169 = vst.msk [vmem:[%s1] sm:$0xff] %vm168, %v167
  %s170 = scalar_lea.vmem %s0, 130
  %s171 = smov 3
  %v172 = vld [vmem:[%s170] ss:$-124 sm:%s171]
  %s173 = scalar_lea.vmem %s0, 4294967286
  %s174 = smov 12
  %v175 = vld [vmem:[%s173] ss:$16 sm:%s174]
  %vm176 = vcmask 1043458
  %v177 = vsel %vm176, %v175, %v172
  %s178 = scalar_lea.vmem %s0, 4294967286
  %s179 = smov 48
  %v180 = vld [vmem:[%s178] ss:$16 sm:%s179]
  %vm181 = vcmask 1045508
  %v182 = vsel %vm181, %v180, %v177
  %s183 = scalar_lea.vmem %s0, 4294967286
  %s184 = smov 192
  %v185 = vld [vmem:[%s183] ss:$16 sm:%s184]
  %vm186 = vcmask 1047558
  %v187 = vsel %vm186, %v185, %v182
  %188 = vrot.lane.b32.xlu0 %v187, 64
  %v189 = vpop.permute.xlu0 %188
  %vm190 = vcmask 785920
  %s191 = scalar_lea.vmem %s1, 32
  %192 = vst.msk [vmem:[%s191] ss:$-24 sm:$0x3] %vm190, %v189
  %s193 = scalar_lea.vmem %s1, 7
  %194 = vst.msk [vmem:[%s193] sm:$0xfc] %vm190, %v189
  %s195 = scalar_lea.vmem %s0, 134
  %s196 = smov 3
  %v197 = vld [vmem:[%s195] ss:$-16 sm:%s196]
  %s198 = scalar_lea.vmem %s0, 4294967274
  %s199 = smov 12
  %v200 = vld [vmem:[%s198] ss:$16 sm:%s199]
  %vm201 = vcmask 1043458
  %v202 = vsel %vm201, %v200, %v197
  %s203 = scalar_lea.vmem %s0, 4294967274
  %s204 = smov 48
  %v205 = vld [vmem:[%s203] ss:$16 sm:%s204]
  %vm206 = vcmask 1045508
  %v207 = vsel %vm206, %v205, %v202
  %s208 = scalar_lea.vmem %s0, 4294967274
  %s209 = smov 192
  %v210 = vld [vmem:[%s208] ss:$16 sm:%s209]
  %vm211 = vcmask 1047558
  %v212 = vsel %vm211, %v210, %v207
  %213 = vrot.lane.b32.xlu0 %v212, 64
  %v214 = vpop.permute.xlu0 %213
  %vm215 = vcmask 785920
  %s216 = scalar_lea.vmem %s1, 40
  %217 = vst.msk [vmem:[%s216] ss:$-25 sm:$0x3] %vm215, %v214
  %s218 = scalar_lea.vmem %s1, 14
  %219 = vst.msk [vmem:[%s218] sm:$0xfc] %vm215, %v214
  %s220 = scalar_lea.vmem %s0, 138
  %v221 = vld [vmem:[%s220] sm:$0x1]
  %s222 = scalar_lea.vmem %s0, 90
  %s223 = smov 6
  %v224 = vld [vmem:[%s222] ss:$16 sm:%s223]
  %vm225 = vcmask 1042433
  %v226 = vsel %vm225, %v224, %v221
  %s227 = scalar_lea.vmem %s0, 4294967262
  %s228 = smov 24
  %v229 = vld [vmem:[%s227] ss:$16 sm:%s228]
  %vm230 = vcmask 1044483
  %v231 = vsel %vm230, %v229, %v226
  %s232 = scalar_lea.vmem %s0, 4294967262
  %s233 = smov 96
  %v234 = vld [vmem:[%s232] ss:$16 sm:%s233]
  %vm235 = vcmask 1046533
  %v236 = vsel %vm235, %v234, %v231
  %s237 = scalar_lea.vmem %s0, 71
  %v238 = vld [vmem:[%s237] sm:$0x80]
  %vm239 = vcmask 1047559
  %v240 = vsel %vm239, %v238, %v236
  %241 = vrot.lane.b32.xlu0 %v240, 64
  %v242 = vpop.permute.xlu0 %241
  %vm243 = vcmask 785920
  %s244 = scalar_lea.vmem %s1, 48
  %245 = vst.msk [vmem:[%s244] ss:$-26 sm:$0x3] %vm243, %v242
  %s246 = scalar_lea.vmem %s1, 21
  %247 = vst.msk [vmem:[%s246] sm:$0xfc] %vm243, %v242
  %s248 = scalar_lea.vmem %s0, 142
  %s249 = smov 3
  %v250 = vld [vmem:[%s248] ss:$-48 sm:%s249]
  %s251 = scalar_lea.vmem %s0, 78
  %s252 = smov 12
  %v253 = vld [vmem:[%s251] ss:$16 sm:%s252]
  %vm254 = vcmask 1043458
  %v255 = vsel %vm254, %v253, %v250
  %256 = vrot.lane.b32.xlu0 %v255, 64
  %v257 = vpop.permute.xlu0 %256
  %vm258 = vcmask 785920
  %s259 = scalar_lea.vmem %s1, 56
  %260 = vst.msk [vmem:[%s259] ss:$-27 sm:$0x3] %vm258, %v257
  %s261 = scalar_lea.vmem %s1, 28
  %262 = vst.msk [vmem:[%s261] sm:$0xc] %vm258, %v257
  %s263 = scalar_lea.vmem %s0, 1
  %s264 = smov 3
  %v265 = vld [vmem:[%s263] ss:$16 sm:%s264]
  %s266 = scalar_lea.vmem %s0, 1
  %s267 = smov 12
  %v268 = vld [vmem:[%s266] ss:$16 sm:%s267]
  %vm269 = vcmask 1043458
  %v270 = vsel %vm269, %v268, %v265
  %s271 = scalar_lea.vmem %s0, 1
  %s272 = smov 48
  %v273 = vld [vmem:[%s271] ss:$16 sm:%s272]
  %vm274 = vcmask 1045508
  %v275 = vsel %vm274, %v273, %v270
  %s276 = scalar_lea.vmem %s0, 1
  %s277 = smov 192
  %v278 = vld [vmem:[%s276] ss:$16 sm:%s277]
  %vm279 = vcmask 1047558
  %v280 = vsel %vm279, %v278, %v275
  %281 = vrot.lane.b32.xlu0 %v280, 32
  %v282 = vpop.permute.xlu0 %281
  %vm283 = vcmask 523520
  %284 = vst.msk [vmem:[%s1] sm:$0xff] %vm283, %v282
  %s285 = scalar_lea.vmem %s0, 129
  %s286 = smov 3
  %v287 = vld [vmem:[%s285] ss:$-124 sm:%s286]
  %s288 = scalar_lea.vmem %s0, 4294967285
  %s289 = smov 12
  %v290 = vld [vmem:[%s288] ss:$16 sm:%s289]
  %vm291 = vcmask 1043458
  %v292 = vsel %vm291, %v290, %v287
  %s293 = scalar_lea.vmem %s0, 4294967285
  %s294 = smov 48
  %v295 = vld [vmem:[%s293] ss:$16 sm:%s294]
  %vm296 = vcmask 1045508
  %v297 = vsel %vm296, %v295, %v292
  %s298 = scalar_lea.vmem %s0, 4294967285
  %s299 = smov 192
  %v300 = vld [vmem:[%s298] ss:$16 sm:%s299]
  %vm301 = vcmask 1047558
  %v302 = vsel %vm301, %v300, %v297
  %303 = vrot.lane.b32.xlu0 %v302, 32
  %v304 = vpop.permute.xlu0 %303
  %vm305 = vcmask 523520
  %s306 = scalar_lea.vmem %s1, 32
  %307 = vst.msk [vmem:[%s306] ss:$-24 sm:$0x3] %vm305, %v304
  %s308 = scalar_lea.vmem %s1, 7
  %309 = vst.msk [vmem:[%s308] sm:$0xfc] %vm305, %v304
  %s310 = scalar_lea.vmem %s0, 133
  %s311 = smov 3
  %v312 = vld [vmem:[%s310] ss:$-16 sm:%s311]
  %s313 = scalar_lea.vmem %s0, 4294967273
  %s314 = smov 12
  %v315 = vld [vmem:[%s313] ss:$16 sm:%s314]
  %vm316 = vcmask 1043458
  %v317 = vsel %vm316, %v315, %v312
  %s318 = scalar_lea.vmem %s0, 4294967273
  %s319 = smov 48
  %v320 = vld [vmem:[%s318] ss:$16 sm:%s319]
  %vm321 = vcmask 1045508
  %v322 = vsel %vm321, %v320, %v317
  %s323 = scalar_lea.vmem %s0, 4294967273
  %s324 = smov 192
  %v325 = vld [vmem:[%s323] ss:$16 sm:%s324]
  %vm326 = vcmask 1047558
  %v327 = vsel %vm326, %v325, %v322
  %328 = vrot.lane.b32.xlu0 %v327, 32
  %v329 = vpop.permute.xlu0 %328
  %vm330 = vcmask 523520
  %s331 = scalar_lea.vmem %s1, 40
  %332 = vst.msk [vmem:[%s331] ss:$-25 sm:$0x3] %vm330, %v329
  %s333 = scalar_lea.vmem %s1, 14
  %334 = vst.msk [vmem:[%s333] sm:$0xfc] %vm330, %v329
  %s335 = scalar_lea.vmem %s0, 137
  %v336 = vld [vmem:[%s335] sm:$0x1]
  %s337 = scalar_lea.vmem %s0, 89
  %s338 = smov 6
  %v339 = vld [vmem:[%s337] ss:$16 sm:%s338]
  %vm340 = vcmask 1042433
  %v341 = vsel %vm340, %v339, %v336
  %s342 = scalar_lea.vmem %s0, 4294967261
  %s343 = smov 24
  %v344 = vld [vmem:[%s342] ss:$16 sm:%s343]
  %vm345 = vcmask 1044483
  %v346 = vsel %vm345, %v344, %v341
  %s347 = scalar_lea.vmem %s0, 4294967261
  %s348 = smov 96
  %v349 = vld [vmem:[%s347] ss:$16 sm:%s348]
  %vm350 = vcmask 1046533
  %v351 = vsel %vm350, %v349, %v346
  %s352 = scalar_lea.vmem %s0, 70
  %v353 = vld [vmem:[%s352] sm:$0x80]
  %vm354 = vcmask 1047559
  %v355 = vsel %vm354, %v353, %v351
  %356 = vrot.lane.b32.xlu0 %v355, 32
  %v357 = vpop.permute.xlu0 %356
  %vm358 = vcmask 523520
  %s359 = scalar_lea.vmem %s1, 48
  %360 = vst.msk [vmem:[%s359] ss:$-26 sm:$0x3] %vm358, %v357
  %s361 = scalar_lea.vmem %s1, 21
  %362 = vst.msk [vmem:[%s361] sm:$0xfc] %vm358, %v357
  %s363 = scalar_lea.vmem %s0, 141
  %s364 = smov 3
  %v365 = vld [vmem:[%s363] ss:$-48 sm:%s364]
  %s366 = scalar_lea.vmem %s0, 77
  %s367 = smov 12
  %v368 = vld [vmem:[%s366] ss:$16 sm:%s367]
  %vm369 = vcmask 1043458
  %v370 = vsel %vm369, %v368, %v365
  %371 = vrot.lane.b32.xlu0 %v370, 32
  %v372 = vpop.permute.xlu0 %371
  %vm373 = vcmask 523520
  %s374 = scalar_lea.vmem %s1, 56
  %375 = vst.msk [vmem:[%s374] ss:$-27 sm:$0x3] %vm373, %v372
  %s376 = scalar_lea.vmem %s1, 28
  %377 = vst.msk [vmem:[%s376] sm:$0xc] %vm373, %v372

// kernel: bneck_pallas.1
$region0: #{bneck_pallas.1}
  #allocation0 [shape = 'u32[]', space=smem, size = 0x4, offset = 0x4, fixed_abs, tag = 'smem constant byte address 0x4 - core index']
  #allocation1 [shape = 'u32[144,128]{1,0:T(1,128)}', space=vmem, size = 0x12000, scoped, tag = 'internal scratch']
  %s0 = inlined_call_operand.vmem [shape: f32[2,16,256], index: 0, kind: input, shape index: {}]
  %s1 = inlined_call_operand.vmem [shape: f32[256,512], index: 1, kind: input, shape index: {}]
  %s2 = inlined_call_operand.vmem [shape: f32[1,512], index: 2, kind: input, shape index: {}]
  %s3 = inlined_call_operand.vmem [shape: f32[1,512], index: 3, kind: input, shape index: {}]
  %s4 = inlined_call_operand.vmem [shape: f32[9,512], index: 4, kind: input, shape index: {}]
  %s5 = inlined_call_operand.vmem [shape: f32[1,512], index: 5, kind: input, shape index: {}]
  %s6 = inlined_call_operand.vmem [shape: f32[1,512], index: 6, kind: input, shape index: {}]
  %s7 = inlined_call_operand.vmem [shape: f32[32,8], index: 7, kind: input, shape index: {}]
  %s8 = inlined_call_operand.vmem [shape: f32[1,8], index: 8, kind: input, shape index: {}]
  %s9 = inlined_call_operand.vmem [shape: f32[8,32], index: 9, kind: input, shape index: {}]
  %s10 = inlined_call_operand.vmem [shape: f32[1,32], index: 10, kind: input, shape index: {}]
  %s11 = inlined_call_operand.vmem [shape: f32[512,32], index: 11, kind: input, shape index: {}]
  %s12 = inlined_call_operand.vmem [shape: f32[9,512], index: 12, kind: input, shape index: {}]
  %s13 = inlined_call_operand.vmem [shape: f32[1,512], index: 13, kind: input, shape index: {}]
  %s14 = inlined_call_operand.vmem [shape: f32[1,512], index: 14, kind: input, shape index: {}]
  %s15 = inlined_call_operand.vmem [shape: f32[512,256], index: 15, kind: input, shape index: {}]
  %s16 = inlined_call_operand.vmem [shape: f32[1,256], index: 16, kind: input, shape index: {}]
  %s17 = inlined_call_operand.vmem [shape: f32[1,256], index: 17, kind: input, shape index: {}]
  %s18 = inlined_call_operand.vmem [shape: f32[2,16,256], index: 18, kind: output, shape index: {}]
  %s19 = sld [smem:[#allocation0]]
  $region82: #{bneck_pallas.1} parent=0
    _
  %s21 = ssub.s32 1, %s19
  %s22 = scalar_select 0, %s21, %s19
  // Predicated region
  $region2: #{bneck_pallas.1} parent=0 // pred_check
    _
  $region3: #{bneck_pallas.1} parent=0 // pred_check_branch
    %24 = sbr.rel (0) target = $region5
  $region4: #{bneck_pallas.1} parent=0 // pred_region
    _
  $region5: #{bneck_pallas.1} parent=0 // pred_fallthru
    _
  // Predicated region
  $region6: #{bneck_pallas.1} parent=0 // pred_check
    _
  $region7: #{bneck_pallas.1} parent=0 // pred_check_branch
    %26 = sbr.rel (0) target = $region9
  $region8: #{bneck_pallas.1} parent=0 // pred_region
    _
  $region9: #{bneck_pallas.1} parent=0 // pred_fallthru
    _
  // Predicated region
  $region10: #{bneck_pallas.1} parent=0 // pred_check
    _
  $region11: #{bneck_pallas.1} parent=0 // pred_check_branch
    %28 = sbr.rel (0) target = $region13
  $region12: #{bneck_pallas.1} parent=0 // pred_region
    _
  $region13: #{bneck_pallas.1} parent=0 // pred_fallthru
    _
  // Predicated region
  $region14: #{bneck_pallas.1} parent=0 // pred_check
    _
  $region15: #{bneck_pallas.1} parent=0 // pred_check_branch
    %30 = sbr.rel (0) target = $region17
  $region16: #{bneck_pallas.1} parent=0 // pred_region
    _
  $region17: #{bneck_pallas.1} parent=0 // pred_fallthru
    _
  // Predicated region
  $region18: #{bneck_pallas.1} parent=0 // pred_check
    _
  $region19: #{bneck_pallas.1} parent=0 // pred_check_branch
    %32 = sbr.rel (0) target = $region21
  $region20: #{bneck_pallas.1} parent=0 // pred_region
    _
  $region21: #{bneck_pallas.1} parent=0 // pred_fallthru
    _
  // Predicated region
  $region22: #{bneck_pallas.1} parent=0 // pred_check
    _
  $region23: #{bneck_pallas.1} parent=0 // pred_check_branch
    %34 = sbr.rel (0) target = $region25
  $region24: #{bneck_pallas.1} parent=0 // pred_region
    _
  $region25: #{bneck_pallas.1} parent=0 // pred_fallthru
    _
  // Predicated region
  $region26: #{bneck_pallas.1} parent=0 // pred_check
    _
  $region27: #{bneck_pallas.1} parent=0 // pred_check_branch
    %36 = sbr.rel (0) target = $region29
  $region28: #{bneck_pallas.1} parent=0 // pred_region
    _
  $region29: #{bneck_pallas.1} parent=0 // pred_fallthru
    _
  // Predicated region
  $region30: #{bneck_pallas.1} parent=0 // pred_check
    _
  $region31: #{bneck_pallas.1} parent=0 // pred_check_branch
    %38 = sbr.rel (0) target = $region33
  $region32: #{bneck_pallas.1} parent=0 // pred_region
    _
  $region33: #{bneck_pallas.1} parent=0 // pred_fallthru
    _
  // Predicated region
  $region34: #{bneck_pallas.1} parent=0 // pred_check
    _
  $region35: #{bneck_pallas.1} parent=0 // pred_check_branch
    %40 = sbr.rel (0) target = $region37
  $region36: #{bneck_pallas.1} parent=0 // pred_region
    _
  $region37: #{bneck_pallas.1} parent=0 // pred_fallthru
    _
  // Predicated region
  $region38: #{bneck_pallas.1} parent=0 // pred_check
    _
  $region39: #{bneck_pallas.1} parent=0 // pred_check_branch
    %42 = sbr.rel (0) target = $region41
  $region40: #{bneck_pallas.1} parent=0 // pred_region
    _
  $region41: #{bneck_pallas.1} parent=0 // pred_fallthru
    _
  // Predicated region
  $region42: #{bneck_pallas.1} parent=0 // pred_check
    _
  $region43: #{bneck_pallas.1} parent=0 // pred_check_branch
    %44 = sbr.rel (0) target = $region45
  $region44: #{bneck_pallas.1} parent=0 // pred_region
    _
  $region45: #{bneck_pallas.1} parent=0 // pred_fallthru
    _
  // Predicated region
  $region46: #{bneck_pallas.1} parent=0 // pred_check
    _
  $region47: #{bneck_pallas.1} parent=0 // pred_check_branch
    %46 = sbr.rel (0) target = $region49
  $region48: #{bneck_pallas.1} parent=0 // pred_region
    _
  $region49: #{bneck_pallas.1} parent=0 // pred_fallthru
    _
  // Predicated region
  $region50: #{bneck_pallas.1} parent=0 // pred_check
    _
  $region51: #{bneck_pallas.1} parent=0 // pred_check_branch
    %48 = sbr.rel (0) target = $region53
  $region52: #{bneck_pallas.1} parent=0 // pred_region
    _
  $region53: #{bneck_pallas.1} parent=0 // pred_fallthru
    _
  // Predicated region
  $region54: #{bneck_pallas.1} parent=0 // pred_check
    _
  $region55: #{bneck_pallas.1} parent=0 // pred_check_branch
    %50 = sbr.rel (0) target = $region57
  $region56: #{bneck_pallas.1} parent=0 // pred_region
    _
  $region57: #{bneck_pallas.1} parent=0 // pred_fallthru
    _
  // Predicated region
  $region58: #{bneck_pallas.1} parent=0 // pred_check
    _
  $region59: #{bneck_pallas.1} parent=0 // pred_check_branch
    %52 = sbr.rel (0) target = $region61
  $region60: #{bneck_pallas.1} parent=0 // pred_region
    _
  $region61: #{bneck_pallas.1} parent=0 // pred_fallthru
    _
  // Predicated region
  $region62: #{bneck_pallas.1} parent=0 // pred_check
    _
  $region63: #{bneck_pallas.1} parent=0 // pred_check_branch
    %54 = sbr.rel (0) target = $region65
  $region64: #{bneck_pallas.1} parent=0 // pred_region
    _
  $region65: #{bneck_pallas.1} parent=0 // pred_fallthru
    _
  // Predicated region
  $region66: #{bneck_pallas.1} parent=0 // pred_check
    _
  $region67: #{bneck_pallas.1} parent=0 // pred_check_branch
    %56 = sbr.rel (0) target = $region69
  $region68: #{bneck_pallas.1} parent=0 // pred_region
    _
  $region69: #{bneck_pallas.1} parent=0 // pred_fallthru
    _
  // Predicated region
  $region70: #{bneck_pallas.1} parent=0 // pred_check
    _
  $region71: #{bneck_pallas.1} parent=0 // pred_check_branch
    %58 = sbr.rel (0) target = $region73
  $region72: #{bneck_pallas.1} parent=0 // pred_region
    _
  $region73: #{bneck_pallas.1} parent=0 // pred_fallthru
    _
  %v59 = vld [vmem:[%s4] sm:$0xff]
  %v60 = vld [vmem:[%s4 + $0x8] sm:$0xff]
  %v61 = vld [vmem:[%s4 + $0x10] sm:$0xff]
  %v62 = vld [vmem:[%s4 + $0x18] sm:$0xff]
  %v63 = vld [vmem:[%s4 + $0x20] sm:$0x1]
  %v64 = vld [vmem:[%s4 + $0x28] sm:$0x1]
  %v65 = vld [vmem:[%s4 + $0x30] sm:$0x1]
  %v66 = vld [vmem:[%s4 + $0x38] sm:$0x1]
  %v67 = vld [vmem:[%s12] sm:$0xff]
  %v68 = vld [vmem:[%s12 + $0x8] sm:$0xff]
  %v69 = vld [vmem:[%s12 + $0x10] sm:$0xff]
  %v70 = vld [vmem:[%s12 + $0x18] sm:$0xff]
  %v71 = vld [vmem:[%s12 + $0x20] sm:$0x1]
  %v72 = vld [vmem:[%s12 + $0x28] sm:$0x1]
  %v73 = vld [vmem:[%s12 + $0x30] sm:$0x1]
  %v74 = vld [vmem:[%s12 + $0x38] sm:$0x1]
  %v75 = vld [vmem:[%s0] sm:$0xff]
  %v76 = vld [vmem:[%s0 + $0x8] sm:$0xff]
  %v77 = vld [vmem:[%s0 + $0x10] sm:$0xff]
  %v78 = vld [vmem:[%s0 + $0x18] sm:$0xff]
  %v79 = vld [vmem:[%s1] sm:$0xff]
  %v80 = vld [vmem:[%s1 + $0x8] sm:$0xff]
  %v81 = vld [vmem:[%s1 + $0x10] sm:$0xff]
  %v82 = vld [vmem:[%s1 + $0x18] sm:$0xff]
  %v83 = vld [vmem:[%s1 + $0x20] sm:$0xff]
  %v84 = vld [vmem:[%s1 + $0x28] sm:$0xff]
  %v85 = vld [vmem:[%s1 + $0x30] sm:$0xff]
  %v86 = vld [vmem:[%s1 + $0x38] sm:$0xff]
  %v87 = vld [vmem:[%s1 + $0x40] sm:$0xff]
  %v88 = vld [vmem:[%s1 + $0x48] sm:$0xff]
  %v89 = vld [vmem:[%s1 + $0x50] sm:$0xff]
  %v90 = vld [vmem:[%s1 + $0x58] sm:$0xff]
  %v91 = vld [vmem:[%s1 + $0x60] sm:$0xff]
  %v92 = vld [vmem:[%s1 + $0x68] sm:$0xff]
  %v93 = vld [vmem:[%s1 + $0x70] sm:$0xff]
  %v94 = vld [vmem:[%s1 + $0x78] sm:$0xff]
  %v95 = vld [vmem:[%s1 + $0x80] sm:$0xff]
  %v96 = vld [vmem:[%s1 + $0x88] sm:$0xff]
  %v97 = vld [vmem:[%s1 + $0x90] sm:$0xff]
  %v98 = vld [vmem:[%s1 + $0x98] sm:$0xff]
  %v99 = vld [vmem:[%s1 + $0xa0] sm:$0xff]
  %v100 = vld [vmem:[%s1 + $0xa8] sm:$0xff]
  %v101 = vld [vmem:[%s1 + $0xb0] sm:$0xff]
  %v102 = vld [vmem:[%s1 + $0xb8] sm:$0xff]
  %v103 = vld [vmem:[%s1 + $0xc0] sm:$0xff]
  %v104 = vld [vmem:[%s1 + $0xc8] sm:$0xff]
  %v105 = vld [vmem:[%s1 + $0xd0] sm:$0xff]
  %v106 = vld [vmem:[%s1 + $0xd8] sm:$0xff]
  %v107 = vld [vmem:[%s1 + $0xe0] sm:$0xff]
  %v108 = vld [vmem:[%s1 + $0xe8] sm:$0xff]
  %v109 = vld [vmem:[%s1 + $0xf0] sm:$0xff]
  %v110 = vld [vmem:[%s1 + $0xf8] sm:$0xff]
  %v111 = vld [vmem:[%s1 + $0x100] sm:$0xff]
  %v112 = vld [vmem:[%s1 + $0x108] sm:$0xff]
  %v113 = vld [vmem:[%s1 + $0x110] sm:$0xff]
  %v114 = vld [vmem:[%s1 + $0x118] sm:$0xff]
  %v115 = vld [vmem:[%s1 + $0x120] sm:$0xff]
  %v116 = vld [vmem:[%s1 + $0x128] sm:$0xff]
  %v117 = vld [vmem:[%s1 + $0x130] sm:$0xff]
  %v118 = vld [vmem:[%s1 + $0x138] sm:$0xff]
  %v119 = vld [vmem:[%s1 + $0x140] sm:$0xff]
  %v120 = vld [vmem:[%s1 + $0x148] sm:$0xff]
  %v121 = vld [vmem:[%s1 + $0x150] sm:$0xff]
  %v122 = vld [vmem:[%s1 + $0x158] sm:$0xff]
  %v123 = vld [vmem:[%s1 + $0x160] sm:$0xff]
  %v124 = vld [vmem:[%s1 + $0x168] sm:$0xff]
  %v125 = vld [vmem:[%s1 + $0x170] sm:$0xff]
  %v126 = vld [vmem:[%s1 + $0x178] sm:$0xff]
  %v127 = vld [vmem:[%s1 + $0x180] sm:$0xff]
  %v128 = vld [vmem:[%s1 + $0x188] sm:$0xff]
  %v129 = vld [vmem:[%s1 + $0x190] sm:$0xff]
  %v130 = vld [vmem:[%s1 + $0x198] sm:$0xff]
  %v131 = vld [vmem:[%s1 + $0x1a0] sm:$0xff]
  %v132 = vld [vmem:[%s1 + $0x1a8] sm:$0xff]
  %v133 = vld [vmem:[%s1 + $0x1b0] sm:$0xff]
  %v134 = vld [vmem:[%s1 + $0x1b8] sm:$0xff]
  %v135 = vld [vmem:[%s1 + $0x1c0] sm:$0xff]
  %v136 = vld [vmem:[%s1 + $0x1c8] sm:$0xff]
  %v137 = vld [vmem:[%s1 + $0x1d0] sm:$0xff]
  %v138 = vld [vmem:[%s1 + $0x1d8] sm:$0xff]
  %v139 = vld [vmem:[%s1 + $0x1e0] sm:$0xff]
  %v140 = vld [vmem:[%s1 + $0x1e8] sm:$0xff]
  %v141 = vld [vmem:[%s1 + $0x1f0] sm:$0xff]
  %v142 = vld [vmem:[%s1 + $0x1f8] sm:$0xff]
  %v143 = vld [vmem:[%s1 + $0x200] sm:$0xff]
  %v144 = vld [vmem:[%s1 + $0x208] sm:$0xff]
  %v145 = vld [vmem:[%s1 + $0x210] sm:$0xff]
  %v146 = vld [vmem:[%s1 + $0x218] sm:$0xff]
  %v147 = vld [vmem:[%s1 + $0x220] sm:$0xff]
  %v148 = vld [vmem:[%s1 + $0x228] sm:$0xff]
  %v149 = vld [vmem:[%s1 + $0x230] sm:$0xff]
  %v150 = vld [vmem:[%s1 + $0x238] sm:$0xff]
  %v151 = vld [vmem:[%s1 + $0x240] sm:$0xff]
  %v152 = vld [vmem:[%s1 + $0x248] sm:$0xff]
  %v153 = vld [vmem:[%s1 + $0x250] sm:$0xff]
  %v154 = vld [vmem:[%s1 + $0x258] sm:$0xff]
  %v155 = vld [vmem:[%s1 + $0x260] sm:$0xff]
  %v156 = vld [vmem:[%s1 + $0x268] sm:$0xff]
  %v157 = vld [vmem:[%s1 + $0x270] sm:$0xff]
  %v158 = vld [vmem:[%s1 + $0x278] sm:$0xff]
  %v159 = vld [vmem:[%s1 + $0x280] sm:$0xff]
  %v160 = vld [vmem:[%s1 + $0x288] sm:$0xff]
  %v161 = vld [vmem:[%s1 + $0x290] sm:$0xff]
  %v162 = vld [vmem:[%s1 + $0x298] sm:$0xff]
  %v163 = vld [vmem:[%s1 + $0x2a0] sm:$0xff]
  %v164 = vld [vmem:[%s1 + $0x2a8] sm:$0xff]
  %v165 = vld [vmem:[%s1 + $0x2b0] sm:$0xff]
  %v166 = vld [vmem:[%s1 + $0x2b8] sm:$0xff]
  %v167 = vld [vmem:[%s1 + $0x2c0] sm:$0xff]
  %v168 = vld [vmem:[%s1 + $0x2c8] sm:$0xff]
  %v169 = vld [vmem:[%s1 + $0x2d0] sm:$0xff]
  %v170 = vld [vmem:[%s1 + $0x2d8] sm:$0xff]
  %v171 = vld [vmem:[%s1 + $0x2e0] sm:$0xff]
  %v172 = vld [vmem:[%s1 + $0x2e8] sm:$0xff]
  %v173 = vld [vmem:[%s1 + $0x2f0] sm:$0xff]
  %v174 = vld [vmem:[%s1 + $0x2f8] sm:$0xff]
  %v175 = vld [vmem:[%s1 + $0x300] sm:$0xff]
  %v176 = vld [vmem:[%s1 + $0x308] sm:$0xff]
  %v177 = vld [vmem:[%s1 + $0x310] sm:$0xff]
  %v178 = vld [vmem:[%s1 + $0x318] sm:$0xff]
  %v179 = vld [vmem:[%s1 + $0x320] sm:$0xff]
  %v180 = vld [vmem:[%s1 + $0x328] sm:$0xff]
  %v181 = vld [vmem:[%s1 + $0x330] sm:$0xff]
  %v182 = vld [vmem:[%s1 + $0x338] sm:$0xff]
  %v183 = vld [vmem:[%s1 + $0x340] sm:$0xff]
  %v184 = vld [vmem:[%s1 + $0x348] sm:$0xff]
  %v185 = vld [vmem:[%s1 + $0x350] sm:$0xff]
  %v186 = vld [vmem:[%s1 + $0x358] sm:$0xff]
  %v187 = vld [vmem:[%s1 + $0x360] sm:$0xff]
  %v188 = vld [vmem:[%s1 + $0x368] sm:$0xff]
  %v189 = vld [vmem:[%s1 + $0x370] sm:$0xff]
  %v190 = vld [vmem:[%s1 + $0x378] sm:$0xff]
  %v191 = vld [vmem:[%s1 + $0x380] sm:$0xff]
  %v192 = vld [vmem:[%s1 + $0x388] sm:$0xff]
  %v193 = vld [vmem:[%s1 + $0x390] sm:$0xff]
  %v194 = vld [vmem:[%s1 + $0x398] sm:$0xff]
  %v195 = vld [vmem:[%s1 + $0x3a0] sm:$0xff]
  %v196 = vld [vmem:[%s1 + $0x3a8] sm:$0xff]
  %v197 = vld [vmem:[%s1 + $0x3b0] sm:$0xff]
  %v198 = vld [vmem:[%s1 + $0x3b8] sm:$0xff]
  %v199 = vld [vmem:[%s1 + $0x3c0] sm:$0xff]
  %v200 = vld [vmem:[%s1 + $0x3c8] sm:$0xff]
  %v201 = vld [vmem:[%s1 + $0x3d0] sm:$0xff]
  %v202 = vld [vmem:[%s1 + $0x3d8] sm:$0xff]
  %v203 = vld [vmem:[%s1 + $0x3e0] sm:$0xff]
  %v204 = vld [vmem:[%s1 + $0x3e8] sm:$0xff]
  %v205 = vld [vmem:[%s1 + $0x3f0] sm:$0xff]
  %v206 = vld [vmem:[%s1 + $0x3f8] sm:$0xff]
  %207 = vmatprep.subr.mxu0 %v140
  %208 = vmatpush1.msra.mxu0 %v139
  %209 = vmatprep.subr.mxu0 %v136
  %210 = vmatpush1.msra.mxu0 %v135
  %211 = vmatprep.subr.mxu0 %v132
  %212 = vmatpush1.msra.mxu0 %v131
  %213 = vmatprep.subr.mxu0 %v128
  %214 = vmatpush1.msra.mxu0 %v127
  %215 = vmatprep.subr.mxu0 %v124
  %216 = vmatpush1.msra.mxu0 %v123
  %217 = vmatprep.subr.mxu0 %v120
  %218 = vmatpush1.msra.mxu0 %v119
  %219 = vmatprep.subr.mxu0 %v116
  %220 = vmatpush1.msra.mxu0 %v115
  %221 = vmatprep.subr.mxu0 %v112
  %222 = vmatpush1.msra.mxu0 %v111
  %223 = vmatprep.subr.mxu0 %v108
  %224 = vmatpush1.msra.mxu0 %v107
  %225 = vmatprep.subr.mxu0 %v104
  %226 = vmatpush1.msra.mxu0 %v103
  %227 = vmatprep.subr.mxu0 %v100
  %228 = vmatpush1.msra.mxu0 %v99
  %229 = vmatprep.subr.mxu0 %v96
  %230 = vmatpush1.msra.mxu0 %v95
  %231 = vmatprep.subr.mxu0 %v92
  %232 = vmatpush1.msra.mxu0 %v91
  %233 = vmatprep.subr.mxu0 %v88
  %234 = vmatpush1.msra.mxu0 %v87
  %235 = vmatprep.subr.mxu0 %v84
  %236 = vmatpush1.msra.mxu0 %v83
  %237 = vmatprep.subr.mxu0 %v80
  %238 = vmatpush1.msra.mxu0 %v79
  %239 = vmatprep.subr.mxu0 %v204
  %240 = vmatpush2.msra.mxu0 %v203
  %241 = vmatprep.subr.mxu0 %v200
  %242 = vmatpush2.msra.mxu0 %v199
  %243 = vmatprep.subr.mxu0 %v196
  %244 = vmatpush2.msra.mxu0 %v195
  %245 = vmatprep.subr.mxu0 %v192
  %246 = vmatpush2.msra.mxu0 %v191
  %247 = vmatprep.subr.mxu0 %v188
  %248 = vmatpush2.msra.mxu0 %v187
  %249 = vmatprep.subr.mxu0 %v184
  %250 = vmatpush2.msra.mxu0 %v183
  %251 = vmatprep.subr.mxu0 %v180
  %252 = vmatpush2.msra.mxu0 %v179
  %253 = vmatprep.subr.mxu0 %v176
  %254 = vmatpush2.msra.mxu0 %v175
  %255 = vmatprep.subr.mxu0 %v172
  %256 = vmatpush2.msra.mxu0 %v171
  %257 = vmatprep.subr.mxu0 %v168
  %258 = vmatpush2.msra.mxu0 %v167
  %259 = vmatprep.subr.mxu0 %v164
  %260 = vmatpush2.msra.mxu0 %v163
  %261 = vmatprep.subr.mxu0 %v160
  %262 = vmatpush2.msra.mxu0 %v159
  %263 = vmatprep.subr.mxu0 %v156
  %264 = vmatpush2.msra.mxu0 %v155
  %265 = vmatprep.subr.mxu0 %v152
  %266 = vmatpush2.msra.mxu0 %v151
  %267 = vmatprep.subr.mxu0 %v148
  %268 = vmatpush2.msra.mxu0 %v147
  %269 = vmatprep.subr.mxu0 %v144
  %270 = vmatpush2.msra.mxu0 %v143
  %271 = vmatprep.mubr.f32.mxu0 %v76
  %272 = vmatmul.mubr.f32.gmra.mxu0 %v75
  %v273 = vpop.f32.mrf.mxu0
  %v274 = vadd.f32 0.0, %v273
  %v275 = vpop.f32.mrf.mxu0
  %v276 = vadd.f32 0.0, %v275
  %277 = vmatprep.mubr.f32.mxu0 %v78
  %278 = vmatmul.mubr.f32.gmra.mxu0 %v77
  %v279 = vpop.f32.mrf.mxu0
  %v280 = vadd.f32 0.0, %v279
  %v281 = vpop.f32.mrf.mxu0
  %v282 = vadd.f32 0.0, %v281
  %283 = vdwg.mxu0
  %284 = vmatprep.subr.mxu0 %v142
  %285 = vmatpush1.msra.mxu0 %v141
  %286 = vmatprep.subr.mxu0 %v138
  %287 = vmatpush1.msra.mxu0 %v137
  %288 = vmatprep.subr.mxu0 %v134
  %289 = vmatpush1.msra.mxu0 %v133
  %290 = vmatprep.subr.mxu0 %v130
  %291 = vmatpush1.msra.mxu0 %v129
  %292 = vmatprep.subr.mxu0 %v126
  %293 = vmatpush1.msra.mxu0 %v125
  %294 = vmatprep.subr.mxu0 %v122
  %295 = vmatpush1.msra.mxu0 %v121
  %296 = vmatprep.subr.mxu0 %v118
  %297 = vmatpush1.msra.mxu0 %v117
  %298 = vmatprep.subr.mxu0 %v114
  %299 = vmatpush1.msra.mxu0 %v113
  %300 = vmatprep.subr.mxu0 %v110
  %301 = vmatpush1.msra.mxu0 %v109
  %302 = vmatprep.subr.mxu0 %v106
  %303 = vmatpush1.msra.mxu0 %v105
  %304 = vmatprep.subr.mxu0 %v102
  %305 = vmatpush1.msra.mxu0 %v101
  %306 = vmatprep.subr.mxu0 %v98
  %307 = vmatpush1.msra.mxu0 %v97
  %308 = vmatprep.subr.mxu0 %v94
  %309 = vmatpush1.msra.mxu0 %v93
  %310 = vmatprep.subr.mxu0 %v90
  %311 = vmatpush1.msra.mxu0 %v89
  %312 = vmatprep.subr.mxu0 %v86
  %313 = vmatpush1.msra.mxu0 %v85
  %314 = vmatprep.subr.mxu0 %v82
  %315 = vmatpush1.msra.mxu0 %v81
  %316 = vmatprep.subr.mxu0 %v206
  %317 = vmatpush2.msra.mxu0 %v205
  %318 = vmatprep.subr.mxu0 %v202
  %319 = vmatpush2.msra.mxu0 %v201
  %320 = vmatprep.subr.mxu0 %v198
  %321 = vmatpush2.msra.mxu0 %v197
  %322 = vmatprep.subr.mxu0 %v194
  %323 = vmatpush2.msra.mxu0 %v193
  %324 = vmatprep.subr.mxu0 %v190
  %325 = vmatpush2.msra.mxu0 %v189
  %326 = vmatprep.subr.mxu0 %v186
  %327 = vmatpush2.msra.mxu0 %v185
  %328 = vmatprep.subr.mxu0 %v182
  %329 = vmatpush2.msra.mxu0 %v181
  %330 = vmatprep.subr.mxu0 %v178
  %331 = vmatpush2.msra.mxu0 %v177
  %332 = vmatprep.subr.mxu0 %v174
  %333 = vmatpush2.msra.mxu0 %v173
  %334 = vmatprep.subr.mxu0 %v170
  %335 = vmatpush2.msra.mxu0 %v169
  %336 = vmatprep.subr.mxu0 %v166
  %337 = vmatpush2.msra.mxu0 %v165
  %338 = vmatprep.subr.mxu0 %v162
  %339 = vmatpush2.msra.mxu0 %v161
  %340 = vmatprep.subr.mxu0 %v158
  %341 = vmatpush2.msra.mxu0 %v157
  %342 = vmatprep.subr.mxu0 %v154
  %343 = vmatpush2.msra.mxu0 %v153
  %344 = vmatprep.subr.mxu0 %v150
  %345 = vmatpush2.msra.mxu0 %v149
  %346 = vmatprep.subr.mxu0 %v146
  %347 = vmatpush2.msra.mxu0 %v145
  %348 = vmatprep.mubr.f32.mxu0 %v76
  %349 = vmatmul.mubr.f32.gmra.mxu0 %v75
  %v350 = vpop.f32.mrf.mxu0
  %v351 = vadd.f32 0.0, %v350
  %v352 = vpop.f32.mrf.mxu0
  %v353 = vadd.f32 0.0, %v352
  %354 = vmatprep.mubr.f32.mxu0 %v78
  %355 = vmatmul.mubr.f32.gmra.mxu0 %v77
  %v356 = vpop.f32.mrf.mxu0
  %v357 = vadd.f32 0.0, %v356
  %v358 = vpop.f32.mrf.mxu0
  %v359 = vadd.f32 0.0, %v358
  %360 = vdwg.mxu0
  %v361 = vld [vmem:[%s2] sm:$0xf]
  %v363 = vlaneseq
  %v364 = vshrl.u32 %v363, 7
  %v365 = vsub.s32 0, %v364
  %v366 = vrot.slane %v361, %v365
  %v367 = vlaneseq
  %v368 = vshrl.u32 %v367, 7
  %v369 = vsub.s32 1, %v368
  %v370 = vrot.slane %v361, %v369
  %v371 = vlaneseq
  %v372 = vshrl.u32 %v371, 7
  %v373 = vsub.s32 2, %v372
  %v374 = vrot.slane %v361, %v373
  %v375 = vlaneseq
  %v376 = vshrl.u32 %v375, 7
  %v377 = vsub.s32 3, %v376
  %v378 = vrot.slane %v361, %v377
  %v383 = vmul.f32 %v274, %v366
  %v384 = vmul.f32 %v276, %v370
  %v385 = vmul.f32 %v351, %v374
  %v386 = vmul.f32 %v353, %v378
  %v387 = vmul.f32 %v280, %v366
  %v388 = vmul.f32 %v282, %v370
  %v389 = vmul.f32 %v357, %v374
  %v390 = vmul.f32 %v359, %v378
  %v391 = vld [vmem:[%s3] sm:$0xf]
  %v393 = vlaneseq
  %v394 = vshrl.u32 %v393, 7
  %v395 = vsub.s32 0, %v394
  %v396 = vrot.slane %v391, %v395
  %v397 = vlaneseq
  %v398 = vshrl.u32 %v397, 7
  %v399 = vsub.s32 1, %v398
  %v400 = vrot.slane %v391, %v399
  %v401 = vlaneseq
  %v402 = vshrl.u32 %v401, 7
  %v403 = vsub.s32 2, %v402
  %v404 = vrot.slane %v391, %v403
  %v405 = vlaneseq
  %v406 = vshrl.u32 %v405, 7
  %v407 = vsub.s32 3, %v406
  %v408 = vrot.slane %v391, %v407
  %v413 = vadd.f32 %v383, %v396
  %v414 = vadd.f32 %v384, %v400
  %v415 = vadd.f32 %v385, %v404
  %v416 = vadd.f32 %v386, %v408
  %v417 = vadd.f32 %v387, %v396
  %v418 = vadd.f32 %v388, %v400
  %v419 = vadd.f32 %v389, %v404
  %v420 = vadd.f32 %v390, %v408
  %v421 = vadd.f32 %v413, 3.0
  %v422 = vadd.f32 %v414, 3.0
  %v423 = vadd.f32 %v415, 3.0
  %v424 = vadd.f32 %v416, 3.0
  %v425 = vadd.f32 %v417, 3.0
  %v426 = vadd.f32 %v418, 3.0
  %v427 = vadd.f32 %v419, 3.0
  %v428 = vadd.f32 %v420, 3.0
  %v429 = vmax.f32 %v421, 0.0
  %v430 = vmax.f32 %v422, 0.0
  %v431 = vmax.f32 %v423, 0.0
  %v432 = vmax.f32 %v424, 0.0
  %v433 = vmax.f32 %v425, 0.0
  %v434 = vmax.f32 %v426, 0.0
  %v435 = vmax.f32 %v427, 0.0
  %v436 = vmax.f32 %v428, 0.0
  %v437 = vmin.f32 %v429, 6.0
  %v438 = vmin.f32 %v430, 6.0
  %v439 = vmin.f32 %v431, 6.0
  %v440 = vmin.f32 %v432, 6.0
  %v441 = vmin.f32 %v433, 6.0
  %v442 = vmin.f32 %v434, 6.0
  %v443 = vmin.f32 %v435, 6.0
  %v444 = vmin.f32 %v436, 6.0
  %v445 = vmul.f32 %v413, %v437
  %v446 = vmul.f32 %v414, %v438
  %v447 = vmul.f32 %v415, %v439
  %v448 = vmul.f32 %v416, %v440
  %v449 = vmul.f32 %v417, %v441
  %v450 = vmul.f32 %v418, %v442
  %v451 = vmul.f32 %v419, %v443
  %v452 = vmul.f32 %v420, %v444
  %v453 = vmul.f32 %v445, 0.16666667
  %v454 = vmul.f32 %v446, 0.16666667
  %v455 = vmul.f32 %v447, 0.16666667
  %v456 = vmul.f32 %v448, 0.16666667
  %v457 = vmul.f32 %v449, 0.16666667
  %v458 = vmul.f32 %v450, 0.16666667
  %v459 = vmul.f32 %v451, 0.16666667
  %v460 = vmul.f32 %v452, 0.16666667
  %vm469 = vcmask 1040384
  %v470 = vrot.slane %v453, 7
  %v471 = vrot.slane %v454, 7
  %v472 = vrot.slane %v455, 7
  %v473 = vrot.slane %v456, 7
  %v474 = vrot.slane %v457, 7
  %v475 = vsel %vm469, %v470, %v474
  %v476 = vrot.slane %v458, 7
  %v477 = vsel %vm469, %v471, %v476
  %v478 = vrot.slane %v459, 7
  %v479 = vsel %vm469, %v472, %v478
  %v480 = vrot.slane %v460, 7
  %v481 = vsel %vm469, %v473, %v480
  %v490 = vsel %vm469, 0.0, %v470
  %v491 = vsel %vm469, 0.0, %v471
  %v492 = vsel %vm469, 0.0, %v472
  %v493 = vsel %vm469, 0.0, %v473
  %498 = vrot.lane.b32.xlu0 %v490, 32
  %v499 = vpop.permute.xlu0 %498
  %500 = vrot.lane.b32.xlu0 %v491, 32
  %v501 = vpop.permute.xlu0 %500
  %502 = vrot.lane.b32.xlu0 %v492, 32
  %v503 = vpop.permute.xlu0 %502
  %504 = vrot.lane.b32.xlu0 %v493, 32
  %v505 = vpop.permute.xlu0 %504
  %506 = vrot.lane.b32.xlu0 %v475, 32
  %v507 = vpop.permute.xlu0 %506
  %508 = vrot.lane.b32.xlu0 %v477, 32
  %v509 = vpop.permute.xlu0 %508
  %510 = vrot.lane.b32.xlu0 %v479, 32
  %v511 = vpop.permute.xlu0 %510
  %512 = vrot.lane.b32.xlu0 %v481, 32
  %v513 = vpop.permute.xlu0 %512
  %vm514 = vcmask 261120
  %v515 = vsel %vm514, %v499, %v501
  %v516 = vsel %vm514, %v501, %v503
  %v517 = vsel %vm514, %v503, %v505
  %v518 = vsel %vm514, %v507, %v509
  %v519 = vsel %vm514, %v509, %v511
  %v520 = vsel %vm514, %v511, %v513
  %v529 = vsel %vm514, 0.0, %v499
  %v530 = vsel %vm514, 0.0, %v507
  %v531 = vlaneseq
  %v532 = vshrl.u32 %v531, 7
  %v533 = vsub.s32 0, %v532
  %v534 = vrot.slane %v59, %v533
  %v535 = vlaneseq
  %v536 = vshrl.u32 %v535, 7
  %v537 = vsub.s32 0, %v536
  %v538 = vrot.slane %v60, %v537
  %v539 = vlaneseq
  %v540 = vshrl.u32 %v539, 7
  %v541 = vsub.s32 0, %v540
  %v542 = vrot.slane %v61, %v541
  %v543 = vlaneseq
  %v544 = vshrl.u32 %v543, 7
  %v545 = vsub.s32 0, %v544
  %v546 = vrot.slane %v62, %v545
  %v547 = vmul.f32 %v529, %v534
  %v548 = vmul.f32 %v515, %v538
  %v549 = vmul.f32 %v516, %v542
  %v550 = vmul.f32 %v517, %v546
  %v551 = vmul.f32 %v530, %v534
  %v552 = vmul.f32 %v518, %v538
  %v553 = vmul.f32 %v519, %v542
  %v554 = vmul.f32 %v520, %v546
  %v555 = vlaneseq
  %v556 = vshrl.u32 %v555, 7
  %v557 = vsub.s32 1, %v556
  %v558 = vrot.slane %v59, %v557
  %v559 = vlaneseq
  %v560 = vshrl.u32 %v559, 7
  %v561 = vsub.s32 1, %v560
  %v562 = vrot.slane %v60, %v561
  %v563 = vlaneseq
  %v564 = vshrl.u32 %v563, 7
  %v565 = vsub.s32 1, %v564
  %v566 = vrot.slane %v61, %v565
  %v567 = vlaneseq
  %v568 = vshrl.u32 %v567, 7
  %v569 = vsub.s32 1, %v568
  %v570 = vrot.slane %v62, %v569
  %v571 = vmul.f32 %v490, %v558
  %v572 = vmul.f32 %v491, %v562
  %v573 = vmul.f32 %v492, %v566
  %v574 = vmul.f32 %v493, %v570
  %v575 = vmul.f32 %v475, %v558
  %v576 = vmul.f32 %v477, %v562
  %v577 = vmul.f32 %v479, %v566
  %v578 = vmul.f32 %v481, %v570
  %v579 = vadd.f32 %v547, %v571
  %v580 = vadd.f32 %v548, %v572
  %v581 = vadd.f32 %v549, %v573
  %v582 = vadd.f32 %v550, %v574
  %v583 = vadd.f32 %v551, %v575
  %v584 = vadd.f32 %v552, %v576
  %v585 = vadd.f32 %v553, %v577
  %v586 = vadd.f32 %v554, %v578
  %587 = vrot.lane.b32.xlu0 %v490, 96
  %v588 = vpop.permute.xlu0 %587
  %589 = vrot.lane.b32.xlu0 %v491, 96
  %v590 = vpop.permute.xlu0 %589
  %591 = vrot.lane.b32.xlu0 %v492, 96
  %v592 = vpop.permute.xlu0 %591
  %593 = vrot.lane.b32.xlu0 %v493, 96
  %v594 = vpop.permute.xlu0 %593
  %595 = vrot.lane.b32.xlu0 %v475, 96
  %v596 = vpop.permute.xlu0 %595
  %597 = vrot.lane.b32.xlu0 %v477, 96
  %v598 = vpop.permute.xlu0 %597
  %599 = vrot.lane.b32.xlu0 %v479, 96
  %v600 = vpop.permute.xlu0 %599
  %601 = vrot.lane.b32.xlu0 %v481, 96
  %v602 = vpop.permute.xlu0 %601
  %vm603 = vcmask 785408
  %v604 = vsel %vm603, %v588, %v590
  %v605 = vsel %vm603, %v590, %v592
  %v606 = vsel %vm603, %v592, %v594
  %v607 = vsel %vm603, %v596, %v598
  %v608 = vsel %vm603, %v598, %v600
  %v609 = vsel %vm603, %v600, %v602
  %v618 = vsel %vm603, %v594, 0.0
  %v619 = vsel %vm603, %v602, 0.0
  %v620 = vlaneseq
  %v621 = vshrl.u32 %v620, 7
  %v622 = vsub.s32 2, %v621
  %v623 = vrot.slane %v59, %v622
  %v624 = vlaneseq
  %v625 = vshrl.u32 %v624, 7
  %v626 = vsub.s32 2, %v625
  %v627 = vrot.slane %v60, %v626
  %v628 = vlaneseq
  %v629 = vshrl.u32 %v628, 7
  %v630 = vsub.s32 2, %v629
  %v631 = vrot.slane %v61, %v630
  %v632 = vlaneseq
  %v633 = vshrl.u32 %v632, 7
  %v634 = vsub.s32 2, %v633
  %v635 = vrot.slane %v62, %v634
  %v636 = vmul.f32 %v604, %v623
  %v637 = vmul.f32 %v605, %v627
  %v638 = vmul.f32 %v606, %v631
  %v639 = vmul.f32 %v618, %v635
  %v640 = vmul.f32 %v607, %v623
  %v641 = vmul.f32 %v608, %v627
  %v642 = vmul.f32 %v609, %v631
  %v643 = vmul.f32 %v619, %v635
  %v644 = vadd.f32 %v579, %v636
  %v645 = vadd.f32 %v580, %v637
  %v646 = vadd.f32 %v581, %v638
  %v647 = vadd.f32 %v582, %v639
  %v648 = vadd.f32 %v583, %v640
  %v649 = vadd.f32 %v584, %v641
  %v650 = vadd.f32 %v585, %v642
  %v651 = vadd.f32 %v586, %v643
  %652 = vrot.lane.b32.xlu0 %v453, 32
  %v653 = vpop.permute.xlu0 %652
  %654 = vrot.lane.b32.xlu0 %v454, 32
  %v655 = vpop.permute.xlu0 %654
  %656 = vrot.lane.b32.xlu0 %v455, 32
  %v657 = vpop.permute.xlu0 %656
  %658 = vrot.lane.b32.xlu0 %v456, 32
  %v659 = vpop.permute.xlu0 %658
  %660 = vrot.lane.b32.xlu0 %v457, 32
  %v661 = vpop.permute.xlu0 %660
  %662 = vrot.lane.b32.xlu0 %v458, 32
  %v663 = vpop.permute.xlu0 %662
  %664 = vrot.lane.b32.xlu0 %v459, 32
  %v665 = vpop.permute.xlu0 %664
  %666 = vrot.lane.b32.xlu0 %v460, 32
  %v667 = vpop.permute.xlu0 %666
  %v668 = vsel %vm514, %v653, %v655
  %v669 = vsel %vm514, %v655, %v657
  %v670 = vsel %vm514, %v657, %v659
  %v671 = vsel %vm514, %v661, %v663
  %v672 = vsel %vm514, %v663, %v665
  %v673 = vsel %vm514, %v665, %v667
  %v682 = vsel %vm514, 0.0, %v653
  %v683 = vsel %vm514, 0.0, %v661
  %v684 = vlaneseq
  %v685 = vshrl.u32 %v684, 7
  %v686 = vsub.s32 3, %v685
  %v687 = vrot.slane %v59, %v686
  %v688 = vlaneseq
  %v689 = vshrl.u32 %v688, 7
  %v690 = vsub.s32 3, %v689
  %v691 = vrot.slane %v60, %v690
  %v692 = vlaneseq
  %v693 = vshrl.u32 %v692, 7
  %v694 = vsub.s32 3, %v693
  %v695 = vrot.slane %v61, %v694
  %v696 = vlaneseq
  %v697 = vshrl.u32 %v696, 7
  %v698 = vsub.s32 3, %v697
  %v699 = vrot.slane %v62, %v698
  %v700 = vmul.f32 %v682, %v687
  %v701 = vmul.f32 %v668, %v691
  %v702 = vmul.f32 %v669, %v695
  %v703 = vmul.f32 %v670, %v699
  %v704 = vmul.f32 %v683, %v687
  %v705 = vmul.f32 %v671, %v691
  %v706 = vmul.f32 %v672, %v695
  %v707 = vmul.f32 %v673, %v699
  %v708 = vadd.f32 %v644, %v700
  %v709 = vadd.f32 %v645, %v701
  %v710 = vadd.f32 %v646, %v702
  %v711 = vadd.f32 %v647, %v703
  %v712 = vadd.f32 %v648, %v704
  %v713 = vadd.f32 %v649, %v705
  %v714 = vadd.f32 %v650, %v706
  %v715 = vadd.f32 %v651, %v707
  %v716 = vlaneseq
  %v717 = vshrl.u32 %v716, 7
  %v718 = vsub.s32 4, %v717
  %v719 = vrot.slane %v59, %v718
  %v720 = vlaneseq
  %v721 = vshrl.u32 %v720, 7
  %v722 = vsub.s32 4, %v721
  %v723 = vrot.slane %v60, %v722
  %v724 = vlaneseq
  %v725 = vshrl.u32 %v724, 7
  %v726 = vsub.s32 4, %v725
  %v727 = vrot.slane %v61, %v726
  %v728 = vlaneseq
  %v729 = vshrl.u32 %v728, 7
  %v730 = vsub.s32 4, %v729
  %v731 = vrot.slane %v62, %v730
  %v732 = vmul.f32 %v453, %v719
  %v733 = vmul.f32 %v454, %v723
  %v734 = vmul.f32 %v455, %v727
  %v735 = vmul.f32 %v456, %v731
  %v736 = vmul.f32 %v457, %v719
  %v737 = vmul.f32 %v458, %v723
  %v738 = vmul.f32 %v459, %v727
  %v739 = vmul.f32 %v460, %v731
  %v740 = vadd.f32 %v708, %v732
  %v741 = vadd.f32 %v709, %v733
  %v742 = vadd.f32 %v710, %v734
  %v743 = vadd.f32 %v711, %v735
  %v744 = vadd.f32 %v712, %v736
  %v745 = vadd.f32 %v713, %v737
  %v746 = vadd.f32 %v714, %v738
  %v747 = vadd.f32 %v715, %v739
  %748 = vrot.lane.b32.xlu0 %v453, 96
  %v749 = vpop.permute.xlu0 %748
  %750 = vrot.lane.b32.xlu0 %v454, 96
  %v751 = vpop.permute.xlu0 %750
  %752 = vrot.lane.b32.xlu0 %v455, 96
  %v753 = vpop.permute.xlu0 %752
  %754 = vrot.lane.b32.xlu0 %v456, 96
  %v755 = vpop.permute.xlu0 %754
  %756 = vrot.lane.b32.xlu0 %v457, 96
  %v757 = vpop.permute.xlu0 %756
  %758 = vrot.lane.b32.xlu0 %v458, 96
  %v759 = vpop.permute.xlu0 %758
  %760 = vrot.lane.b32.xlu0 %v459, 96
  %v761 = vpop.permute.xlu0 %760
  %762 = vrot.lane.b32.xlu0 %v460, 96
  %v763 = vpop.permute.xlu0 %762
  %v764 = vsel %vm603, %v749, %v751
  %v765 = vsel %vm603, %v751, %v753
  %v766 = vsel %vm603, %v753, %v755
  %v767 = vsel %vm603, %v757, %v759
  %v768 = vsel %vm603, %v759, %v761
  %v769 = vsel %vm603, %v761, %v763
  %v778 = vsel %vm603, %v755, 0.0
  %v779 = vsel %vm603, %v763, 0.0
  %v780 = vlaneseq
  %v781 = vshrl.u32 %v780, 7
  %v782 = vsub.s32 5, %v781
  %v783 = vrot.slane %v59, %v782
  %v784 = vlaneseq
  %v785 = vshrl.u32 %v784, 7
  %v786 = vsub.s32 5, %v785
  %v787 = vrot.slane %v60, %v786
  %v788 = vlaneseq
  %v789 = vshrl.u32 %v788, 7
  %v790 = vsub.s32 5, %v789
  %v791 = vrot.slane %v61, %v790
  %v792 = vlaneseq
  %v793 = vshrl.u32 %v792, 7
  %v794 = vsub.s32 5, %v793
  %v795 = vrot.slane %v62, %v794
  %v796 = vmul.f32 %v764, %v783
  %v797 = vmul.f32 %v765, %v787
  %v798 = vmul.f32 %v766, %v791
  %v799 = vmul.f32 %v778, %v795
  %v800 = vmul.f32 %v767, %v783
  %v801 = vmul.f32 %v768, %v787
  %v802 = vmul.f32 %v769, %v791
  %v803 = vmul.f32 %v779, %v795
  %v804 = vadd.f32 %v740, %v796
  %v805 = vadd.f32 %v741, %v797
  %v806 = vadd.f32 %v742, %v798
  %v807 = vadd.f32 %v743, %v799
  %v808 = vadd.f32 %v744, %v800
  %v809 = vadd.f32 %v745, %v801
  %v810 = vadd.f32 %v746, %v802
  %v811 = vadd.f32 %v747, %v803
  %vm812 = vcmask 1046528
  %v813 = vrot.slane %v453, 1
  %v814 = vrot.slane %v457, 1
  %v815 = vsel %vm812, %v813, %v814
  %v816 = vrot.slane %v454, 1
  %v817 = vrot.slane %v458, 1
  %v818 = vsel %vm812, %v816, %v817
  %v819 = vrot.slane %v455, 1
  %v820 = vrot.slane %v459, 1
  %v821 = vsel %vm812, %v819, %v820
  %v822 = vrot.slane %v456, 1
  %v823 = vrot.slane %v460, 1
  %v824 = vsel %vm812, %v822, %v823
  %v833 = vsel %vm812, %v814, 0.0
  %v834 = vsel %vm812, %v817, 0.0
  %v835 = vsel %vm812, %v820, 0.0
  %v836 = vsel %vm812, %v823, 0.0
  %841 = vrot.lane.b32.xlu0 %v815, 32
  %v842 = vpop.permute.xlu0 %841
  %843 = vrot.lane.b32.xlu0 %v818, 32
  %v844 = vpop.permute.xlu0 %843
  %845 = vrot.lane.b32.xlu0 %v821, 32
  %v846 = vpop.permute.xlu0 %845
  %847 = vrot.lane.b32.xlu0 %v824, 32
  %v848 = vpop.permute.xlu0 %847
  %849 = vrot.lane.b32.xlu0 %v833, 32
  %v850 = vpop.permute.xlu0 %849
  %851 = vrot.lane.b32.xlu0 %v834, 32
  %v852 = vpop.permute.xlu0 %851
  %853 = vrot.lane.b32.xlu0 %v835, 32
  %v854 = vpop.permute.xlu0 %853
  %855 = vrot.lane.b32.xlu0 %v836, 32
  %v856 = vpop.permute.xlu0 %855
  %v857 = vsel %vm514, %v842, %v844
  %v858 = vsel %vm514, %v844, %v846
  %v859 = vsel %vm514, %v846, %v848
  %v860 = vsel %vm514, %v850, %v852
  %v861 = vsel %vm514, %v852, %v854
  %v862 = vsel %vm514, %v854, %v856
  %v871 = vsel %vm514, 0.0, %v842
  %v872 = vsel %vm514, 0.0, %v850
  %v873 = vlaneseq
  %v874 = vshrl.u32 %v873, 7
  %v875 = vsub.s32 6, %v874
  %v876 = vrot.slane %v59, %v875
  %v877 = vlaneseq
  %v878 = vshrl.u32 %v877, 7
  %v879 = vsub.s32 6, %v878
  %v880 = vrot.slane %v60, %v879
  %v881 = vlaneseq
  %v882 = vshrl.u32 %v881, 7
  %v883 = vsub.s32 6, %v882
  %v884 = vrot.slane %v61, %v883
  %v885 = vlaneseq
  %v886 = vshrl.u32 %v885, 7
  %v887 = vsub.s32 6, %v886
  %v888 = vrot.slane %v62, %v887
  %v889 = vmul.f32 %v871, %v876
  %v890 = vmul.f32 %v857, %v880
  %v891 = vmul.f32 %v858, %v884
  %v892 = vmul.f32 %v859, %v888
  %v893 = vmul.f32 %v872, %v876
  %v894 = vmul.f32 %v860, %v880
  %v895 = vmul.f32 %v861, %v884
  %v896 = vmul.f32 %v862, %v888
  %v897 = vadd.f32 %v804, %v889
  %v898 = vadd.f32 %v805, %v890
  %v899 = vadd.f32 %v806, %v891
  %v900 = vadd.f32 %v807, %v892
  %v901 = vadd.f32 %v808, %v893
  %v902 = vadd.f32 %v809, %v894
  %v903 = vadd.f32 %v810, %v895
  %v904 = vadd.f32 %v811, %v896
  %v905 = vlaneseq
  %v906 = vshrl.u32 %v905, 7
  %v907 = vsub.s32 7, %v906
  %v908 = vrot.slane %v59, %v907
  %v909 = vlaneseq
  %v910 = vshrl.u32 %v909, 7
  %v911 = vsub.s32 7, %v910
  %v912 = vrot.slane %v60, %v911
  %v913 = vlaneseq
  %v914 = vshrl.u32 %v913, 7
  %v915 = vsub.s32 7, %v914
  %v916 = vrot.slane %v61, %v915
  %v917 = vlaneseq
  %v918 = vshrl.u32 %v917, 7
  %v919 = vsub.s32 7, %v918
  %v920 = vrot.slane %v62, %v919
  %v921 = vmul.f32 %v815, %v908
  %v922 = vmul.f32 %v818, %v912
  %v923 = vmul.f32 %v821, %v916
  %v924 = vmul.f32 %v824, %v920
  %v925 = vmul.f32 %v833, %v908
  %v926 = vmul.f32 %v834, %v912
  %v927 = vmul.f32 %v835, %v916
  %v928 = vmul.f32 %v836, %v920
  %v929 = vadd.f32 %v897, %v921
  %v930 = vadd.f32 %v898, %v922
  %v931 = vadd.f32 %v899, %v923
  %v932 = vadd.f32 %v900, %v924
  %v933 = vadd.f32 %v901, %v925
  %v934 = vadd.f32 %v902, %v926
  %v935 = vadd.f32 %v903, %v927
  %v936 = vadd.f32 %v904, %v928
  %937 = vrot.lane.b32.xlu0 %v815, 96
  %v938 = vpop.permute.xlu0 %937
  %939 = vrot.lane.b32.xlu0 %v818, 96
  %v940 = vpop.permute.xlu0 %939
  %941 = vrot.lane.b32.xlu0 %v821, 96
  %v942 = vpop.permute.xlu0 %941
  %943 = vrot.lane.b32.xlu0 %v824, 96
  %v944 = vpop.permute.xlu0 %943
  %945 = vrot.lane.b32.xlu0 %v833, 96
  %v946 = vpop.permute.xlu0 %945
  %947 = vrot.lane.b32.xlu0 %v834, 96
  %v948 = vpop.permute.xlu0 %947
  %949 = vrot.lane.b32.xlu0 %v835, 96
  %v950 = vpop.permute.xlu0 %949
  %951 = vrot.lane.b32.xlu0 %v836, 96
  %v952 = vpop.permute.xlu0 %951
  %v953 = vsel %vm603, %v938, %v940
  %v954 = vsel %vm603, %v940, %v942
  %v955 = vsel %vm603, %v942, %v944
  %v956 = vsel %vm603, %v946, %v948
  %v957 = vsel %vm603, %v948, %v950
  %v958 = vsel %vm603, %v950, %v952
  %v967 = vsel %vm603, %v944, 0.0
  %v968 = vsel %vm603, %v952, 0.0
  %v969 = vlaneseq
  %v970 = vshrl.u32 %v969, 7
  %v971 = vsub.s32 0, %v970
  %v972 = vrot.slane %v63, %v971
  %v973 = vlaneseq
  %v974 = vshrl.u32 %v973, 7
  %v975 = vsub.s32 0, %v974
  %v976 = vrot.slane %v64, %v975
  %v977 = vlaneseq
  %v978 = vshrl.u32 %v977, 7
  %v979 = vsub.s32 0, %v978
  %v980 = vrot.slane %v65, %v979
  %v981 = vlaneseq
  %v982 = vshrl.u32 %v981, 7
  %v983 = vsub.s32 0, %v982
  %v984 = vrot.slane %v66, %v983
  %v985 = vmul.f32 %v953, %v972
  %v986 = vmul.f32 %v954, %v976
  %v987 = vmul.f32 %v955, %v980
  %v988 = vmul.f32 %v967, %v984
  %v989 = vmul.f32 %v956, %v972
  %v990 = vmul.f32 %v957, %v976
  %v991 = vmul.f32 %v958, %v980
  %v992 = vmul.f32 %v968, %v984
  %v993 = vadd.f32 %v929, %v985
  %v994 = vadd.f32 %v930, %v986
  %v995 = vadd.f32 %v931, %v987
  %v996 = vadd.f32 %v932, %v988
  %v997 = vadd.f32 %v933, %v989
  %v998 = vadd.f32 %v934, %v990
  %v999 = vadd.f32 %v935, %v991
  %v1000 = vadd.f32 %v936, %v992
  %v1001 = vld [vmem:[%s5] sm:$0xf]
  %v1003 = vlaneseq
  %v1004 = vshrl.u32 %v1003, 7
  %v1005 = vsub.s32 0, %v1004
  %v1006 = vrot.slane %v1001, %v1005
  %v1007 = vlaneseq
  %v1008 = vshrl.u32 %v1007, 7
  %v1009 = vsub.s32 1, %v1008
  %v1010 = vrot.slane %v1001, %v1009
  %v1011 = vlaneseq
  %v1012 = vshrl.u32 %v1011, 7
  %v1013 = vsub.s32 2, %v1012
  %v1014 = vrot.slane %v1001, %v1013
  %v1015 = vlaneseq
  %v1016 = vshrl.u32 %v1015, 7
  %v1017 = vsub.s32 3, %v1016
  %v1018 = vrot.slane %v1001, %v1017
  %v1023 = vmul.f32 %v993, %v1006
  %v1024 = vmul.f32 %v994, %v1010
  %v1025 = vmul.f32 %v995, %v1014
  %v1026 = vmul.f32 %v996, %v1018
  %v1027 = vmul.f32 %v997, %v1006
  %v1028 = vmul.f32 %v998, %v1010
  %v1029 = vmul.f32 %v999, %v1014
  %v1030 = vmul.f32 %v1000, %v1018
  %v1031 = vld [vmem:[%s6] sm:$0xf]
  %v1033 = vlaneseq
  %v1034 = vshrl.u32 %v1033, 7
  %v1035 = vsub.s32 0, %v1034
  %v1036 = vrot.slane %v1031, %v1035
  %v1037 = vlaneseq
  %v1038 = vshrl.u32 %v1037, 7
  %v1039 = vsub.s32 1, %v1038
  %v1040 = vrot.slane %v1031, %v1039
  %v1041 = vlaneseq
  %v1042 = vshrl.u32 %v1041, 7
  %v1043 = vsub.s32 2, %v1042
  %v1044 = vrot.slane %v1031, %v1043
  %v1045 = vlaneseq
  %v1046 = vshrl.u32 %v1045, 7
  %v1047 = vsub.s32 3, %v1046
  %v1048 = vrot.slane %v1031, %v1047
  %v1053 = vadd.f32 %v1023, %v1036
  %v1054 = vadd.f32 %v1024, %v1040
  %v1055 = vadd.f32 %v1025, %v1044
  %v1056 = vadd.f32 %v1026, %v1048
  %v1057 = vadd.f32 %v1027, %v1036
  %v1058 = vadd.f32 %v1028, %v1040
  %v1059 = vadd.f32 %v1029, %v1044
  %v1060 = vadd.f32 %v1030, %v1048
  %v1061 = vadd.f32 %v1053, 3.0
  %v1062 = vadd.f32 %v1054, 3.0
  %v1063 = vadd.f32 %v1055, 3.0
  %v1064 = vadd.f32 %v1056, 3.0
  %v1065 = vadd.f32 %v1057, 3.0
  %v1066 = vadd.f32 %v1058, 3.0
  %v1067 = vadd.f32 %v1059, 3.0
  %v1068 = vadd.f32 %v1060, 3.0
  %v1069 = vmax.f32 %v1061, 0.0
  %v1070 = vmax.f32 %v1062, 0.0
  %v1071 = vmax.f32 %v1063, 0.0
  %v1072 = vmax.f32 %v1064, 0.0
  %v1073 = vmax.f32 %v1065, 0.0
  %v1074 = vmax.f32 %v1066, 0.0
  %v1075 = vmax.f32 %v1067, 0.0
  %v1076 = vmax.f32 %v1068, 0.0
  %v1077 = vmin.f32 %v1069, 6.0
  %v1078 = vmin.f32 %v1070, 6.0
  %v1079 = vmin.f32 %v1071, 6.0
  %v1080 = vmin.f32 %v1072, 6.0
  %v1081 = vmin.f32 %v1073, 6.0
  %v1082 = vmin.f32 %v1074, 6.0
  %v1083 = vmin.f32 %v1075, 6.0
  %v1084 = vmin.f32 %v1076, 6.0
  %v1085 = vmul.f32 %v1053, %v1077
  %v1086 = vmul.f32 %v1054, %v1078
  %v1087 = vmul.f32 %v1055, %v1079
  %v1088 = vmul.f32 %v1056, %v1080
  %v1089 = vmul.f32 %v1057, %v1081
  %v1090 = vmul.f32 %v1058, %v1082
  %v1091 = vmul.f32 %v1059, %v1083
  %v1092 = vmul.f32 %v1060, %v1084
  %v1093 = vmul.f32 %v1085, 0.16666667
  %v1094 = vmul.f32 %v1086, 0.16666667
  %v1095 = vmul.f32 %v1087, 0.16666667
  %v1096 = vmul.f32 %v1088, 0.16666667
  %v1097 = vmul.f32 %v1089, 0.16666667
  %v1098 = vmul.f32 %v1090, 0.16666667
  %v1099 = vmul.f32 %v1091, 0.16666667
  %v1100 = vmul.f32 %v1092, 0.16666667
  %v1101 = vadd.f32 %v1093, %v1097
  %v1102 = vrot.slane %v1101, 4
  %v1103 = vadd.f32 %v1101, %v1102
  %v1104 = vrot.slane %v1103, 2
  %v1105 = vadd.f32 %v1103, %v1104
  %v1106 = vrot.slane %v1105, 1
  %v1107 = vadd.f32 %v1105, %v1106
  %v1108 = vadd.f32 %v1094, %v1098
  %v1109 = vrot.slane %v1108, 4
  %v1110 = vadd.f32 %v1108, %v1109
  %v1111 = vrot.slane %v1110, 2
  %v1112 = vadd.f32 %v1110, %v1111
  %v1113 = vrot.slane %v1112, 1
  %v1114 = vadd.f32 %v1112, %v1113
  %v1115 = vadd.f32 %v1095, %v1099
  %v1116 = vrot.slane %v1115, 4
  %v1117 = vadd.f32 %v1115, %v1116
  %v1118 = vrot.slane %v1117, 2
  %v1119 = vadd.f32 %v1117, %v1118
  %v1120 = vrot.slane %v1119, 1
  %v1121 = vadd.f32 %v1119, %v1120
  %v1122 = vadd.f32 %v1096, %v1100
  %v1123 = vrot.slane %v1122, 4
  %v1124 = vadd.f32 %v1122, %v1123
  %v1125 = vrot.slane %v1124, 2
  %v1126 = vadd.f32 %v1124, %v1125
  %v1127 = vrot.slane %v1126, 1
  %v1128 = vadd.f32 %v1126, %v1127
  %v1129 = vld [vmem:[%s11] sm:$0xff]
  %v1130 = vld [vmem:[%s11 + $0x8] sm:$0xff]
  %v1131 = vld [vmem:[%s11 + $0x10] sm:$0xff]
  %v1132 = vld [vmem:[%s11 + $0x18] sm:$0xff]
  %v1133 = vld [vmem:[%s11 + $0x20] sm:$0xff]
  %v1134 = vld [vmem:[%s11 + $0x28] sm:$0xff]
  %v1135 = vld [vmem:[%s11 + $0x30] sm:$0xff]
  %v1136 = vld [vmem:[%s11 + $0x38] sm:$0xff]
  %v1137 = vld [vmem:[%s11 + $0x40] sm:$0xff]
  %v1138 = vld [vmem:[%s11 + $0x48] sm:$0xff]
  %v1139 = vld [vmem:[%s11 + $0x50] sm:$0xff]
  %v1140 = vld [vmem:[%s11 + $0x58] sm:$0xff]
  %v1141 = vld [vmem:[%s11 + $0x60] sm:$0xff]
  %v1142 = vld [vmem:[%s11 + $0x68] sm:$0xff]
  %v1143 = vld [vmem:[%s11 + $0x70] sm:$0xff]
  %v1144 = vld [vmem:[%s11 + $0x78] sm:$0xff]
  %v1145 = vld [vmem:[%s11 + $0x80] sm:$0xff]
  %v1146 = vld [vmem:[%s11 + $0x88] sm:$0xff]
  %v1147 = vld [vmem:[%s11 + $0x90] sm:$0xff]
  %v1148 = vld [vmem:[%s11 + $0x98] sm:$0xff]
  %v1149 = vld [vmem:[%s11 + $0xa0] sm:$0xff]
  %v1150 = vld [vmem:[%s11 + $0xa8] sm:$0xff]
  %v1151 = vld [vmem:[%s11 + $0xb0] sm:$0xff]
  %v1152 = vld [vmem:[%s11 + $0xb8] sm:$0xff]
  %v1153 = vld [vmem:[%s11 + $0xc0] sm:$0xff]
  %v1154 = vld [vmem:[%s11 + $0xc8] sm:$0xff]
  %v1155 = vld [vmem:[%s11 + $0xd0] sm:$0xff]
  %v1156 = vld [vmem:[%s11 + $0xd8] sm:$0xff]
  %v1157 = vld [vmem:[%s11 + $0xe0] sm:$0xff]
  %v1158 = vld [vmem:[%s11 + $0xe8] sm:$0xff]
  %v1159 = vld [vmem:[%s11 + $0xf0] sm:$0xff]
  %v1160 = vld [vmem:[%s11 + $0xf8] sm:$0xff]
  %v1161 = vld [vmem:[%s11 + $0x100] sm:$0xff]
  %v1162 = vld [vmem:[%s11 + $0x108] sm:$0xff]
  %v1163 = vld [vmem:[%s11 + $0x110] sm:$0xff]
  %v1164 = vld [vmem:[%s11 + $0x118] sm:$0xff]
  %v1165 = vld [vmem:[%s11 + $0x120] sm:$0xff]
  %v1166 = vld [vmem:[%s11 + $0x128] sm:$0xff]
  %v1167 = vld [vmem:[%s11 + $0x130] sm:$0xff]
  %v1168 = vld [vmem:[%s11 + $0x138] sm:$0xff]
  %v1169 = vld [vmem:[%s11 + $0x140] sm:$0xff]
  %v1170 = vld [vmem:[%s11 + $0x148] sm:$0xff]
  %v1171 = vld [vmem:[%s11 + $0x150] sm:$0xff]
  %v1172 = vld [vmem:[%s11 + $0x158] sm:$0xff]
  %v1173 = vld [vmem:[%s11 + $0x160] sm:$0xff]
  %v1174 = vld [vmem:[%s11 + $0x168] sm:$0xff]
  %v1175 = vld [vmem:[%s11 + $0x170] sm:$0xff]
  %v1176 = vld [vmem:[%s11 + $0x178] sm:$0xff]
  %v1177 = vld [vmem:[%s11 + $0x180] sm:$0xff]
  %v1178 = vld [vmem:[%s11 + $0x188] sm:$0xff]
  %v1179 = vld [vmem:[%s11 + $0x190] sm:$0xff]
  %v1180 = vld [vmem:[%s11 + $0x198] sm:$0xff]
  %v1181 = vld [vmem:[%s11 + $0x1a0] sm:$0xff]
  %v1182 = vld [vmem:[%s11 + $0x1a8] sm:$0xff]
  %v1183 = vld [vmem:[%s11 + $0x1b0] sm:$0xff]
  %v1184 = vld [vmem:[%s11 + $0x1b8] sm:$0xff]
  %v1185 = vld [vmem:[%s11 + $0x1c0] sm:$0xff]
  %v1186 = vld [vmem:[%s11 + $0x1c8] sm:$0xff]
  %v1187 = vld [vmem:[%s11 + $0x1d0] sm:$0xff]
  %v1188 = vld [vmem:[%s11 + $0x1d8] sm:$0xff]
  %v1189 = vld [vmem:[%s11 + $0x1e0] sm:$0xff]
  %v1190 = vld [vmem:[%s11 + $0x1e8] sm:$0xff]
  %v1191 = vld [vmem:[%s11 + $0x1f0] sm:$0xff]
  %v1192 = vld [vmem:[%s11 + $0x1f8] sm:$0xff]
  %1193 = vmatprep.subr.mxu0 0.0
  %1194 = vmatpush1.msra.mxu0 %v1144
  %1195 = vmatprep.subr.mxu0 0.0
  %1196 = vmatpush1.msra.mxu0 %v1143
  %1197 = vmatprep.subr.mxu0 0.0
  %1198 = vmatpush1.msra.mxu0 %v1142
  %1199 = vmatprep.subr.mxu0 0.0
  %1200 = vmatpush1.msra.mxu0 %v1141
  %1201 = vmatprep.subr.mxu0 0.0
  %1202 = vmatpush1.msra.mxu0 %v1140
  %1203 = vmatprep.subr.mxu0 0.0
  %1204 = vmatpush1.msra.mxu0 %v1139
  %1205 = vmatprep.subr.mxu0 0.0
  %1206 = vmatpush1.msra.mxu0 %v1138
  %1207 = vmatprep.subr.mxu0 0.0
  %1208 = vmatpush1.msra.mxu0 %v1137
  %1209 = vmatprep.subr.mxu0 0.0
  %1210 = vmatpush1.msra.mxu0 %v1136
  %1211 = vmatprep.subr.mxu0 0.0
  %1212 = vmatpush1.msra.mxu0 %v1135
  %1213 = vmatprep.subr.mxu0 0.0
  %1214 = vmatpush1.msra.mxu0 %v1134
  %1215 = vmatprep.subr.mxu0 0.0
  %1216 = vmatpush1.msra.mxu0 %v1133
  %1217 = vmatprep.subr.mxu0 0.0
  %1218 = vmatpush1.msra.mxu0 %v1132
  %1219 = vmatprep.subr.mxu0 0.0
  %1220 = vmatpush1.msra.mxu0 %v1131
  %1221 = vmatprep.subr.mxu0 0.0
  %1222 = vmatpush1.msra.mxu0 %v1130
  %1223 = vmatprep.subr.mxu0 0.0
  %1224 = vmatpush1.msra.mxu0 %v1129
  %1225 = vmatprep.subr.mxu0 0.0
  %1226 = vmatpush2.msra.mxu0 %v1160
  %1227 = vmatprep.subr.mxu0 0.0
  %1228 = vmatpush2.msra.mxu0 %v1159
  %1229 = vmatprep.subr.mxu0 0.0
  %1230 = vmatpush2.msra.mxu0 %v1158
  %1231 = vmatprep.subr.mxu0 0.0
  %1232 = vmatpush2.msra.mxu0 %v1157
  %1233 = vmatprep.subr.mxu0 0.0
  %1234 = vmatpush2.msra.mxu0 %v1156
  %1235 = vmatprep.subr.mxu0 0.0
  %1236 = vmatpush2.msra.mxu0 %v1155
  %1237 = vmatprep.subr.mxu0 0.0
  %1238 = vmatpush2.msra.mxu0 %v1154
  %1239 = vmatprep.subr.mxu0 0.0
  %1240 = vmatpush2.msra.mxu0 %v1153
  %1241 = vmatprep.subr.mxu0 0.0
  %1242 = vmatpush2.msra.mxu0 %v1152
  %1243 = vmatprep.subr.mxu0 0.0
  %1244 = vmatpush2.msra.mxu0 %v1151
  %1245 = vmatprep.subr.mxu0 0.0
  %1246 = vmatpush2.msra.mxu0 %v1150
  %1247 = vmatprep.subr.mxu0 0.0
  %1248 = vmatpush2.msra.mxu0 %v1149
  %1249 = vmatprep.subr.mxu0 0.0
  %1250 = vmatpush2.msra.mxu0 %v1148
  %1251 = vmatprep.subr.mxu0 0.0
  %1252 = vmatpush2.msra.mxu0 %v1147
  %1253 = vmatprep.subr.mxu0 0.0
  %1254 = vmatpush2.msra.mxu0 %v1146
  %1255 = vmatprep.subr.mxu0 0.0
  %1256 = vmatpush2.msra.mxu0 %v1145
  %1257 = vmatprep.mubr.f32.mxu0 %v1114
  %1258 = vmatmul.mubr.f32.gmra.mxu0 %v1107
  %v1259 = vpop.f32.mrf.mxu0
  %v1260 = vadd.f32 0.0, %v1259
  %v1261 = vpop.f32.mrf.mxu0
  %1262 = vdwg.mxu0
  %1263 = vmatprep.subr.mxu0 0.0
  %1264 = vmatpush1.msra.mxu0 %v1176
  %1265 = vmatprep.subr.mxu0 0.0
  %1266 = vmatpush1.msra.mxu0 %v1175
  %1267 = vmatprep.subr.mxu0 0.0
  %1268 = vmatpush1.msra.mxu0 %v1174
  %1269 = vmatprep.subr.mxu0 0.0
  %1270 = vmatpush1.msra.mxu0 %v1173
  %1271 = vmatprep.subr.mxu0 0.0
  %1272 = vmatpush1.msra.mxu0 %v1172
  %1273 = vmatprep.subr.mxu0 0.0
  %1274 = vmatpush1.msra.mxu0 %v1171
  %1275 = vmatprep.subr.mxu0 0.0
  %1276 = vmatpush1.msra.mxu0 %v1170
  %1277 = vmatprep.subr.mxu0 0.0
  %1278 = vmatpush1.msra.mxu0 %v1169
  %1279 = vmatprep.subr.mxu0 0.0
  %1280 = vmatpush1.msra.mxu0 %v1168
  %1281 = vmatprep.subr.mxu0 0.0
  %1282 = vmatpush1.msra.mxu0 %v1167
  %1283 = vmatprep.subr.mxu0 0.0
  %1284 = vmatpush1.msra.mxu0 %v1166
  %1285 = vmatprep.subr.mxu0 0.0
  %1286 = vmatpush1.msra.mxu0 %v1165
  %1287 = vmatprep.subr.mxu0 0.0
  %1288 = vmatpush1.msra.mxu0 %v1164
  %1289 = vmatprep.subr.mxu0 0.0
  %1290 = vmatpush1.msra.mxu0 %v1163
  %1291 = vmatprep.subr.mxu0 0.0
  %1292 = vmatpush1.msra.mxu0 %v1162
  %1293 = vmatprep.subr.mxu0 0.0
  %1294 = vmatpush1.msra.mxu0 %v1161
  %1295 = vmatprep.subr.mxu0 0.0
  %1296 = vmatpush2.msra.mxu0 %v1192
  %1297 = vmatprep.subr.mxu0 0.0
  %1298 = vmatpush2.msra.mxu0 %v1191
  %1299 = vmatprep.subr.mxu0 0.0
  %1300 = vmatpush2.msra.mxu0 %v1190
  %1301 = vmatprep.subr.mxu0 0.0
  %1302 = vmatpush2.msra.mxu0 %v1189
  %1303 = vmatprep.subr.mxu0 0.0
  %1304 = vmatpush2.msra.mxu0 %v1188
  %1305 = vmatprep.subr.mxu0 0.0
  %1306 = vmatpush2.msra.mxu0 %v1187
  %1307 = vmatprep.subr.mxu0 0.0
  %1308 = vmatpush2.msra.mxu0 %v1186
  %1309 = vmatprep.subr.mxu0 0.0
  %1310 = vmatpush2.msra.mxu0 %v1185
  %1311 = vmatprep.subr.mxu0 0.0
  %1312 = vmatpush2.msra.mxu0 %v1184
  %1313 = vmatprep.subr.mxu0 0.0
  %1314 = vmatpush2.msra.mxu0 %v1183
  %1315 = vmatprep.subr.mxu0 0.0
  %1316 = vmatpush2.msra.mxu0 %v1182
  %1317 = vmatprep.subr.mxu0 0.0
  %1318 = vmatpush2.msra.mxu0 %v1181
  %1319 = vmatprep.subr.mxu0 0.0
  %1320 = vmatpush2.msra.mxu0 %v1180
  %1321 = vmatprep.subr.mxu0 0.0
  %1322 = vmatpush2.msra.mxu0 %v1179
  %1323 = vmatprep.subr.mxu0 0.0
  %1324 = vmatpush2.msra.mxu0 %v1178
  %1325 = vmatprep.subr.mxu0 0.0
  %1326 = vmatpush2.msra.mxu0 %v1177
  %1327 = vmatprep.mubr.f32.mxu0 %v1128
  %1328 = vmatmul.mubr.f32.gmra.mxu0 %v1121
  %v1329 = vpop.f32.mrf.mxu0
  %v1330 = vadd.f32 %v1260, %v1329
  %v1331 = vpop.f32.mrf.mxu0
  %1332 = vdwg.mxu0
  %v1333 = vmul.f32 %v1330, 0.00390625
  %v1334 = vld [vmem:[%s7] sm:$0xff]
  %v1335 = vld [vmem:[%s7 + $0x8] sm:$0xff]
  %v1336 = vld [vmem:[%s7 + $0x10] sm:$0xff]
  %v1337 = vld [vmem:[%s7 + $0x18] sm:$0xff]
  %v1338 = vld [vmem:[%s8] sm:$0x1]
  %v1340 = vsel %vm514, %v1333, 0
  %1342 = vmatprep.subr.mxu0 0.0
  %1343 = vmatpush1.msra.mxu0 0.0
  %1344 = vmatprep.subr.mxu0 0.0
  %1345 = vmatpush1.msra.mxu0 0.0
  %1346 = vmatprep.subr.mxu0 0.0
  %1347 = vmatpush1.msra.mxu0 0.0
  %1348 = vmatprep.subr.mxu0 0.0
  %1349 = vmatpush1.msra.mxu0 0.0
  %1350 = vmatprep.subr.mxu0 0.0
  %1351 = vmatpush1.msra.mxu0 0.0
  %1352 = vmatprep.subr.mxu0 0.0
  %1353 = vmatpush1.msra.mxu0 0.0
  %1354 = vmatprep.subr.mxu0 0.0
  %1355 = vmatpush1.msra.mxu0 0.0
  %1356 = vmatprep.subr.mxu0 0.0
  %1357 = vmatpush1.msra.mxu0 0.0
  %1358 = vmatprep.subr.mxu0 0.0
  %1359 = vmatpush1.msra.mxu0 0.0
  %1360 = vmatprep.subr.mxu0 0.0
  %1361 = vmatpush1.msra.mxu0 0.0
  %1362 = vmatprep.subr.mxu0 0.0
  %1363 = vmatpush1.msra.mxu0 0.0
  %1364 = vmatprep.subr.mxu0 0.0
  %1365 = vmatpush1.msra.mxu0 0.0
  %1366 = vmatprep.subr.mxu0 0.0
  %1367 = vmatpush1.msra.mxu0 %v1337
  %1368 = vmatprep.subr.mxu0 0.0
  %1369 = vmatpush1.msra.mxu0 %v1336
  %1370 = vmatprep.subr.mxu0 0.0
  %1371 = vmatpush1.msra.mxu0 %v1335
  %1372 = vmatprep.subr.mxu0 0.0
  %1373 = vmatpush1.msra.mxu0 %v1334
  %1374 = vmatprep.subr.mxu0 0.0
  %1375 = vmatpush2.msra.mxu0 0.0
  %1376 = vmatprep.subr.mxu0 0.0
  %1377 = vmatpush2.msra.mxu0 0.0
  %1378 = vmatprep.subr.mxu0 0.0
  %1379 = vmatpush2.msra.mxu0 0.0
  %1380 = vmatprep.subr.mxu0 0.0
  %1381 = vmatpush2.msra.mxu0 0.0
  %1382 = vmatprep.subr.mxu0 0.0
  %1383 = vmatpush2.msra.mxu0 0.0
  %1384 = vmatprep.subr.mxu0 0.0
  %1385 = vmatpush2.msra.mxu0 0.0
  %1386 = vmatprep.subr.mxu0 0.0
  %1387 = vmatpush2.msra.mxu0 0.0
  %1388 = vmatprep.subr.mxu0 0.0
  %1389 = vmatpush2.msra.mxu0 0.0
  %1390 = vmatprep.subr.mxu0 0.0
  %1391 = vmatpush2.msra.mxu0 0.0
  %1392 = vmatprep.subr.mxu0 0.0
  %1393 = vmatpush2.msra.mxu0 0.0
  %1394 = vmatprep.subr.mxu0 0.0
  %1395 = vmatpush2.msra.mxu0 0.0
  %1396 = vmatprep.subr.mxu0 0.0
  %1397 = vmatpush2.msra.mxu0 0.0
  %1398 = vmatprep.subr.mxu0 0.0
  %1399 = vmatpush2.msra.mxu0 0.0
  %1400 = vmatprep.subr.mxu0 0.0
  %1401 = vmatpush2.msra.mxu0 0.0
  %1402 = vmatprep.subr.mxu0 0.0
  %1403 = vmatpush2.msra.mxu0 0.0
  %1404 = vmatprep.subr.mxu0 0.0
  %1405 = vmatpush2.msra.mxu0 0.0
  %1406 = vmatprep.mubr.f32.mxu0 0.0
  %1407 = vmatmul.mubr.f32.gmra.mxu0 %v1340
  %v1408 = vpop.f32.mrf.mxu0
  %v1409 = vadd.f32 %v1338, %v1408
  %v1410 = vpop.f32.mrf.mxu0
  %1411 = vdwg.mxu0
  %v1412 = vmax.f32 %v1409, 0.0
  %v1413 = vld [vmem:[%s9] sm:$0xff]
  %v1414 = vld [vmem:[%s10] sm:$0x1]
  %vm1415 = vcmask 64512
  %v1417 = vsel %vm1415, %v1412, 0
  %1419 = vmatprep.subr.mxu0 0.0
  %1420 = vmatpush1.msra.mxu0 0.0
  %1421 = vmatprep.subr.mxu0 0.0
  %1422 = vmatpush1.msra.mxu0 0.0
  %1423 = vmatprep.subr.mxu0 0.0
  %1424 = vmatpush1.msra.mxu0 0.0
  %1425 = vmatprep.subr.mxu0 0.0
  %1426 = vmatpush1.msra.mxu0 0.0
  %1427 = vmatprep.subr.mxu0 0.0
  %1428 = vmatpush1.msra.mxu0 0.0
  %1429 = vmatprep.subr.mxu0 0.0
  %1430 = vmatpush1.msra.mxu0 0.0
  %1431 = vmatprep.subr.mxu0 0.0
  %1432 = vmatpush1.msra.mxu0 0.0
  %1433 = vmatprep.subr.mxu0 0.0
  %1434 = vmatpush1.msra.mxu0 0.0
  %1435 = vmatprep.subr.mxu0 0.0
  %1436 = vmatpush1.msra.mxu0 0.0
  %1437 = vmatprep.subr.mxu0 0.0
  %1438 = vmatpush1.msra.mxu0 0.0
  %1439 = vmatprep.subr.mxu0 0.0
  %1440 = vmatpush1.msra.mxu0 0.0
  %1441 = vmatprep.subr.mxu0 0.0
  %1442 = vmatpush1.msra.mxu0 0.0
  %1443 = vmatprep.subr.mxu0 0.0
  %1444 = vmatpush1.msra.mxu0 0.0
  %1445 = vmatprep.subr.mxu0 0.0
  %1446 = vmatpush1.msra.mxu0 0.0
  %1447 = vmatprep.subr.mxu0 0.0
  %1448 = vmatpush1.msra.mxu0 0.0
  %1449 = vmatprep.subr.mxu0 0.0
  %1450 = vmatpush1.msra.mxu0 %v1413
  %1451 = vmatprep.subr.mxu0 0.0
  %1452 = vmatpush2.msra.mxu0 0.0
  %1453 = vmatprep.subr.mxu0 0.0
  %1454 = vmatpush2.msra.mxu0 0.0
  %1455 = vmatprep.subr.mxu0 0.0
  %1456 = vmatpush2.msra.mxu0 0.0
  %1457 = vmatprep.subr.mxu0 0.0
  %1458 = vmatpush2.msra.mxu0 0.0
  %1459 = vmatprep.subr.mxu0 0.0
  %1460 = vmatpush2.msra.mxu0 0.0
  %1461 = vmatprep.subr.mxu0 0.0
  %1462 = vmatpush2.msra.mxu0 0.0
  %1463 = vmatprep.subr.mxu0 0.0
  %1464 = vmatpush2.msra.mxu0 0.0
  %1465 = vmatprep.subr.mxu0 0.0
  %1466 = vmatpush2.msra.mxu0 0.0
  %1467 = vmatprep.subr.mxu0 0.0
  %1468 = vmatpush2.msra.mxu0 0.0
  %1469 = vmatprep.subr.mxu0 0.0
  %1470 = vmatpush2.msra.mxu0 0.0
  %1471 = vmatprep.subr.mxu0 0.0
  %1472 = vmatpush2.msra.mxu0 0.0
  %1473 = vmatprep.subr.mxu0 0.0
  %1474 = vmatpush2.msra.mxu0 0.0
  %1475 = vmatprep.subr.mxu0 0.0
  %1476 = vmatpush2.msra.mxu0 0.0
  %1477 = vmatprep.subr.mxu0 0.0
  %1478 = vmatpush2.msra.mxu0 0.0
  %1479 = vmatprep.subr.mxu0 0.0
  %1480 = vmatpush2.msra.mxu0 0.0
  %1481 = vmatprep.subr.mxu0 0.0
  %1482 = vmatpush2.msra.mxu0 0.0
  %1483 = vmatprep.mubr.f32.mxu0 0.0
  %1484 = vmatmul.mubr.f32.gmra.mxu0 %v1417
  %v1485 = vpop.f32.mrf.mxu0
  %v1486 = vadd.f32 %v1414, %v1485
  %v1487 = vpop.f32.mrf.mxu0
  %1488 = vdwg.mxu0
  %v1489 = vadd.f32 %v1486, 3.0
  %v1490 = vmax.f32 %v1489, 0.0
  %v1491 = vmin.f32 %v1490, 6.0
  %v1492 = vmul.f32 %v1491, 0.16666667
  %1494 = vrot.lane.b32.xlu0 %v1492, 32
  %v1495 = vpop.permute.xlu0 %1494
  %1497 = vrot.lane.b32.xlu0 %v1492, 64
  %v1498 = vpop.permute.xlu0 %1497
  %1500 = vrot.lane.b32.xlu0 %v1492, 96
  %v1501 = vpop.permute.xlu0 %1500
  %v1503 = vsel %vm514, %v1492, %v1495
  %vm1504 = vcmask 523264
  %v1505 = vsel %vm1504, %v1503, %v1498
  %v1506 = vsel %vm603, %v1505, %v1501
  %v1507 = vlaneseq
  %v1508 = vshrl.u32 %v1507, 7
  %v1509 = vsub.s32 0, %v1508
  %v1510 = vrot.slane %v1506, %v1509
  %v1511 = vmul.f32 %v1093, %v1510
  %v1512 = vmul.f32 %v1094, %v1510
  %v1513 = vmul.f32 %v1095, %v1510
  %v1514 = vmul.f32 %v1096, %v1510
  %v1515 = vmul.f32 %v1097, %v1510
  %v1516 = vmul.f32 %v1098, %v1510
  %v1517 = vmul.f32 %v1099, %v1510
  %v1518 = vmul.f32 %v1100, %v1510
  %v1527 = vrot.slane %v1511, 7
  %v1528 = vrot.slane %v1512, 7
  %v1529 = vrot.slane %v1513, 7
  %v1530 = vrot.slane %v1514, 7
  %v1531 = vrot.slane %v1515, 7
  %v1532 = vsel %vm469, %v1527, %v1531
  %v1533 = vrot.slane %v1516, 7
  %v1534 = vsel %vm469, %v1528, %v1533
  %v1535 = vrot.slane %v1517, 7
  %v1536 = vsel %vm469, %v1529, %v1535
  %v1537 = vrot.slane %v1518, 7
  %v1538 = vsel %vm469, %v1530, %v1537
  %v1547 = vsel %vm469, 0.0, %v1527
  %v1548 = vsel %vm469, 0.0, %v1528
  %v1549 = vsel %vm469, 0.0, %v1529
  %v1550 = vsel %vm469, 0.0, %v1530
  %1555 = vrot.lane.b32.xlu0 %v1547, 32
  %v1556 = vpop.permute.xlu0 %1555
  %1557 = vrot.lane.b32.xlu0 %v1548, 32
  %v1558 = vpop.permute.xlu0 %1557
  %1559 = vrot.lane.b32.xlu0 %v1549, 32
  %v1560 = vpop.permute.xlu0 %1559
  %1561 = vrot.lane.b32.xlu0 %v1550, 32
  %v1562 = vpop.permute.xlu0 %1561
  %1563 = vrot.lane.b32.xlu0 %v1532, 32
  %v1564 = vpop.permute.xlu0 %1563
  %1565 = vrot.lane.b32.xlu0 %v1534, 32
  %v1566 = vpop.permute.xlu0 %1565
  %1567 = vrot.lane.b32.xlu0 %v1536, 32
  %v1568 = vpop.permute.xlu0 %1567
  %1569 = vrot.lane.b32.xlu0 %v1538, 32
  %v1570 = vpop.permute.xlu0 %1569
  %v1571 = vsel %vm514, %v1556, %v1558
  %v1572 = vsel %vm514, %v1558, %v1560
  %v1573 = vsel %vm514, %v1560, %v1562
  %v1574 = vsel %vm514, %v1564, %v1566
  %v1575 = vsel %vm514, %v1566, %v1568
  %v1576 = vsel %vm514, %v1568, %v1570
  %v1585 = vsel %vm514, 0.0, %v1556
  %v1586 = vsel %vm514, 0.0, %v1564
  %v1587 = vlaneseq
  %v1588 = vshrl.u32 %v1587, 7
  %v1589 = vsub.s32 0, %v1588
  %v1590 = vrot.slane %v67, %v1589
  %v1591 = vlaneseq
  %v1592 = vshrl.u32 %v1591, 7
  %v1593 = vsub.s32 0, %v1592
  %v1594 = vrot.slane %v68, %v1593
  %v1595 = vlaneseq
  %v1596 = vshrl.u32 %v1595, 7
  %v1597 = vsub.s32 0, %v1596
  %v1598 = vrot.slane %v69, %v1597
  %v1599 = vlaneseq
  %v1600 = vshrl.u32 %v1599, 7
  %v1601 = vsub.s32 0, %v1600
  %v1602 = vrot.slane %v70, %v1601
  %v1603 = vmul.f32 %v1585, %v1590
  %v1604 = vmul.f32 %v1571, %v1594
  %v1605 = vmul.f32 %v1572, %v1598
  %v1606 = vmul.f32 %v1573, %v1602
  %v1607 = vmul.f32 %v1586, %v1590
  %v1608 = vmul.f32 %v1574, %v1594
  %v1609 = vmul.f32 %v1575, %v1598
  %v1610 = vmul.f32 %v1576, %v1602
  %v1611 = vlaneseq
  %v1612 = vshrl.u32 %v1611, 7
  %v1613 = vsub.s32 1, %v1612
  %v1614 = vrot.slane %v67, %v1613
  %v1615 = vlaneseq
  %v1616 = vshrl.u32 %v1615, 7
  %v1617 = vsub.s32 1, %v1616
  %v1618 = vrot.slane %v68, %v1617
  %v1619 = vlaneseq
  %v1620 = vshrl.u32 %v1619, 7
  %v1621 = vsub.s32 1, %v1620
  %v1622 = vrot.slane %v69, %v1621
  %v1623 = vlaneseq
  %v1624 = vshrl.u32 %v1623, 7
  %v1625 = vsub.s32 1, %v1624
  %v1626 = vrot.slane %v70, %v1625
  %v1627 = vmul.f32 %v1547, %v1614
  %v1628 = vmul.f32 %v1548, %v1618
  %v1629 = vmul.f32 %v1549, %v1622
  %v1630 = vmul.f32 %v1550, %v1626
  %v1631 = vmul.f32 %v1532, %v1614
  %v1632 = vmul.f32 %v1534, %v1618
  %v1633 = vmul.f32 %v1536, %v1622
  %v1634 = vmul.f32 %v1538, %v1626
  %v1635 = vadd.f32 %v1603, %v1627
  %v1636 = vadd.f32 %v1604, %v1628
  %v1637 = vadd.f32 %v1605, %v1629
  %v1638 = vadd.f32 %v1606, %v1630
  %v1639 = vadd.f32 %v1607, %v1631
  %v1640 = vadd.f32 %v1608, %v1632
  %v1641 = vadd.f32 %v1609, %v1633
  %v1642 = vadd.f32 %v1610, %v1634
  %1643 = vrot.lane.b32.xlu0 %v1547, 96
  %v1644 = vpop.permute.xlu0 %1643
  %1645 = vrot.lane.b32.xlu0 %v1548, 96
  %v1646 = vpop.permute.xlu0 %1645
  %1647 = vrot.lane.b32.xlu0 %v1549, 96
  %v1648 = vpop.permute.xlu0 %1647
  %1649 = vrot.lane.b32.xlu0 %v1550, 96
  %v1650 = vpop.permute.xlu0 %1649
  %1651 = vrot.lane.b32.xlu0 %v1532, 96
  %v1652 = vpop.permute.xlu0 %1651
  %1653 = vrot.lane.b32.xlu0 %v1534, 96
  %v1654 = vpop.permute.xlu0 %1653
  %1655 = vrot.lane.b32.xlu0 %v1536, 96
  %v1656 = vpop.permute.xlu0 %1655
  %1657 = vrot.lane.b32.xlu0 %v1538, 96
  %v1658 = vpop.permute.xlu0 %1657
  %v1659 = vsel %vm603, %v1644, %v1646
  %v1660 = vsel %vm603, %v1646, %v1648
  %v1661 = vsel %vm603, %v1648, %v1650
  %v1662 = vsel %vm603, %v1652, %v1654
  %v1663 = vsel %vm603, %v1654, %v1656
  %v1664 = vsel %vm603, %v1656, %v1658
  %v1673 = vsel %vm603, %v1650, 0.0
  %v1674 = vsel %vm603, %v1658, 0.0
  %v1675 = vlaneseq
  %v1676 = vshrl.u32 %v1675, 7
  %v1677 = vsub.s32 2, %v1676
  %v1678 = vrot.slane %v67, %v1677
  %v1679 = vlaneseq
  %v1680 = vshrl.u32 %v1679, 7
  %v1681 = vsub.s32 2, %v1680
  %v1682 = vrot.slane %v68, %v1681
  %v1683 = vlaneseq
  %v1684 = vshrl.u32 %v1683, 7
  %v1685 = vsub.s32 2, %v1684
  %v1686 = vrot.slane %v69, %v1685
  %v1687 = vlaneseq
  %v1688 = vshrl.u32 %v1687, 7
  %v1689 = vsub.s32 2, %v1688
  %v1690 = vrot.slane %v70, %v1689
  %v1691 = vmul.f32 %v1659, %v1678
  %v1692 = vmul.f32 %v1660, %v1682
  %v1693 = vmul.f32 %v1661, %v1686
  %v1694 = vmul.f32 %v1673, %v1690
  %v1695 = vmul.f32 %v1662, %v1678
  %v1696 = vmul.f32 %v1663, %v1682
  %v1697 = vmul.f32 %v1664, %v1686
  %v1698 = vmul.f32 %v1674, %v1690
  %v1699 = vadd.f32 %v1635, %v1691
  %v1700 = vadd.f32 %v1636, %v1692
  %v1701 = vadd.f32 %v1637, %v1693
  %v1702 = vadd.f32 %v1638, %v1694
  %v1703 = vadd.f32 %v1639, %v1695
  %v1704 = vadd.f32 %v1640, %v1696
  %v1705 = vadd.f32 %v1641, %v1697
  %v1706 = vadd.f32 %v1642, %v1698
  %1707 = vrot.lane.b32.xlu0 %v1511, 32
  %v1708 = vpop.permute.xlu0 %1707
  %1709 = vrot.lane.b32.xlu0 %v1512, 32
  %v1710 = vpop.permute.xlu0 %1709
  %1711 = vrot.lane.b32.xlu0 %v1513, 32
  %v1712 = vpop.permute.xlu0 %1711
  %1713 = vrot.lane.b32.xlu0 %v1514, 32
  %v1714 = vpop.permute.xlu0 %1713
  %1715 = vrot.lane.b32.xlu0 %v1515, 32
  %v1716 = vpop.permute.xlu0 %1715
  %1717 = vrot.lane.b32.xlu0 %v1516, 32
  %v1718 = vpop.permute.xlu0 %1717
  %1719 = vrot.lane.b32.xlu0 %v1517, 32
  %v1720 = vpop.permute.xlu0 %1719
  %1721 = vrot.lane.b32.xlu0 %v1518, 32
  %v1722 = vpop.permute.xlu0 %1721
  %v1723 = vsel %vm514, %v1708, %v1710
  %v1724 = vsel %vm514, %v1710, %v1712
  %v1725 = vsel %vm514, %v1712, %v1714
  %v1726 = vsel %vm514, %v1716, %v1718
  %v1727 = vsel %vm514, %v1718, %v1720
  %v1728 = vsel %vm514, %v1720, %v1722
  %v1737 = vsel %vm514, 0.0, %v1708
  %v1738 = vsel %vm514, 0.0, %v1716
  %v1739 = vlaneseq
  %v1740 = vshrl.u32 %v1739, 7
  %v1741 = vsub.s32 3, %v1740
  %v1742 = vrot.slane %v67, %v1741
  %v1743 = vlaneseq
  %v1744 = vshrl.u32 %v1743, 7
  %v1745 = vsub.s32 3, %v1744
  %v1746 = vrot.slane %v68, %v1745
  %v1747 = vlaneseq
  %v1748 = vshrl.u32 %v1747, 7
  %v1749 = vsub.s32 3, %v1748
  %v1750 = vrot.slane %v69, %v1749
  %v1751 = vlaneseq
  %v1752 = vshrl.u32 %v1751, 7
  %v1753 = vsub.s32 3, %v1752
  %v1754 = vrot.slane %v70, %v1753
  %v1755 = vmul.f32 %v1737, %v1742
  %v1756 = vmul.f32 %v1723, %v1746
  %v1757 = vmul.f32 %v1724, %v1750
  %v1758 = vmul.f32 %v1725, %v1754
  %v1759 = vmul.f32 %v1738, %v1742
  %v1760 = vmul.f32 %v1726, %v1746
  %v1761 = vmul.f32 %v1727, %v1750
  %v1762 = vmul.f32 %v1728, %v1754
  %v1763 = vadd.f32 %v1699, %v1755
  %v1764 = vadd.f32 %v1700, %v1756
  %v1765 = vadd.f32 %v1701, %v1757
  %v1766 = vadd.f32 %v1702, %v1758
  %v1767 = vadd.f32 %v1703, %v1759
  %v1768 = vadd.f32 %v1704, %v1760
  %v1769 = vadd.f32 %v1705, %v1761
  %v1770 = vadd.f32 %v1706, %v1762
  %v1771 = vlaneseq
  %v1772 = vshrl.u32 %v1771, 7
  %v1773 = vsub.s32 4, %v1772
  %v1774 = vrot.slane %v67, %v1773
  %v1775 = vlaneseq
  %v1776 = vshrl.u32 %v1775, 7
  %v1777 = vsub.s32 4, %v1776
  %v1778 = vrot.slane %v68, %v1777
  %v1779 = vlaneseq
  %v1780 = vshrl.u32 %v1779, 7
  %v1781 = vsub.s32 4, %v1780
  %v1782 = vrot.slane %v69, %v1781
  %v1783 = vlaneseq
  %v1784 = vshrl.u32 %v1783, 7
  %v1785 = vsub.s32 4, %v1784
  %v1786 = vrot.slane %v70, %v1785
  %v1787 = vmul.f32 %v1511, %v1774
  %v1788 = vmul.f32 %v1512, %v1778
  %v1789 = vmul.f32 %v1513, %v1782
  %v1790 = vmul.f32 %v1514, %v1786
  %v1791 = vmul.f32 %v1515, %v1774
  %v1792 = vmul.f32 %v1516, %v1778
  %v1793 = vmul.f32 %v1517, %v1782
  %v1794 = vmul.f32 %v1518, %v1786
  %v1795 = vadd.f32 %v1763, %v1787
  %v1796 = vadd.f32 %v1764, %v1788
  %v1797 = vadd.f32 %v1765, %v1789
  %v1798 = vadd.f32 %v1766, %v1790
  %v1799 = vadd.f32 %v1767, %v1791
  %v1800 = vadd.f32 %v1768, %v1792
  %v1801 = vadd.f32 %v1769, %v1793
  %v1802 = vadd.f32 %v1770, %v1794
  %1803 = vrot.lane.b32.xlu0 %v1511, 96
  %v1804 = vpop.permute.xlu0 %1803
  %1805 = vrot.lane.b32.xlu0 %v1512, 96
  %v1806 = vpop.permute.xlu0 %1805
  %1807 = vrot.lane.b32.xlu0 %v1513, 96
  %v1808 = vpop.permute.xlu0 %1807
  %1809 = vrot.lane.b32.xlu0 %v1514, 96
  %v1810 = vpop.permute.xlu0 %1809
  %1811 = vrot.lane.b32.xlu0 %v1515, 96
  %v1812 = vpop.permute.xlu0 %1811
  %1813 = vrot.lane.b32.xlu0 %v1516, 96
  %v1814 = vpop.permute.xlu0 %1813
  %1815 = vrot.lane.b32.xlu0 %v1517, 96
  %v1816 = vpop.permute.xlu0 %1815
  %1817 = vrot.lane.b32.xlu0 %v1518, 96
  %v1818 = vpop.permute.xlu0 %1817
  %v1819 = vsel %vm603, %v1804, %v1806
  %v1820 = vsel %vm603, %v1806, %v1808
  %v1821 = vsel %vm603, %v1808, %v1810
  %v1822 = vsel %vm603, %v1812, %v1814
  %v1823 = vsel %vm603, %v1814, %v1816
  %v1824 = vsel %vm603, %v1816, %v1818
  %v1833 = vsel %vm603, %v1810, 0.0
  %v1834 = vsel %vm603, %v1818, 0.0
  %v1835 = vlaneseq
  %v1836 = vshrl.u32 %v1835, 7
  %v1837 = vsub.s32 5, %v1836
  %v1838 = vrot.slane %v67, %v1837
  %v1839 = vlaneseq
  %v1840 = vshrl.u32 %v1839, 7
  %v1841 = vsub.s32 5, %v1840
  %v1842 = vrot.slane %v68, %v1841
  %v1843 = vlaneseq
  %v1844 = vshrl.u32 %v1843, 7
  %v1845 = vsub.s32 5, %v1844
  %v1846 = vrot.slane %v69, %v1845
  %v1847 = vlaneseq
  %v1848 = vshrl.u32 %v1847, 7
  %v1849 = vsub.s32 5, %v1848
  %v1850 = vrot.slane %v70, %v1849
  %v1851 = vmul.f32 %v1819, %v1838
  %v1852 = vmul.f32 %v1820, %v1842
  %v1853 = vmul.f32 %v1821, %v1846
  %v1854 = vmul.f32 %v1833, %v1850
  %v1855 = vmul.f32 %v1822, %v1838
  %v1856 = vmul.f32 %v1823, %v1842
  %v1857 = vmul.f32 %v1824, %v1846
  %v1858 = vmul.f32 %v1834, %v1850
  %v1859 = vadd.f32 %v1795, %v1851
  %v1860 = vadd.f32 %v1796, %v1852
  %v1861 = vadd.f32 %v1797, %v1853
  %v1862 = vadd.f32 %v1798, %v1854
  %v1863 = vadd.f32 %v1799, %v1855
  %v1864 = vadd.f32 %v1800, %v1856
  %v1865 = vadd.f32 %v1801, %v1857
  %v1866 = vadd.f32 %v1802, %v1858
  %v1867 = vrot.slane %v1511, 1
  %v1868 = vrot.slane %v1515, 1
  %v1869 = vsel %vm812, %v1867, %v1868
  %v1870 = vrot.slane %v1512, 1
  %v1871 = vrot.slane %v1516, 1
  %v1872 = vsel %vm812, %v1870, %v1871
  %v1873 = vrot.slane %v1513, 1
  %v1874 = vrot.slane %v1517, 1
  %v1875 = vsel %vm812, %v1873, %v1874
  %v1876 = vrot.slane %v1514, 1
  %v1877 = vrot.slane %v1518, 1
  %v1878 = vsel %vm812, %v1876, %v1877
  %v1887 = vsel %vm812, %v1868, 0.0
  %v1888 = vsel %vm812, %v1871, 0.0
  %v1889 = vsel %vm812, %v1874, 0.0
  %v1890 = vsel %vm812, %v1877, 0.0
  %1895 = vrot.lane.b32.xlu0 %v1869, 32
  %v1896 = vpop.permute.xlu0 %1895
  %1897 = vrot.lane.b32.xlu0 %v1872, 32
  %v1898 = vpop.permute.xlu0 %1897
  %1899 = vrot.lane.b32.xlu0 %v1875, 32
  %v1900 = vpop.permute.xlu0 %1899
  %1901 = vrot.lane.b32.xlu0 %v1878, 32
  %v1902 = vpop.permute.xlu0 %1901
  %1903 = vrot.lane.b32.xlu0 %v1887, 32
  %v1904 = vpop.permute.xlu0 %1903
  %1905 = vrot.lane.b32.xlu0 %v1888, 32
  %v1906 = vpop.permute.xlu0 %1905
  %1907 = vrot.lane.b32.xlu0 %v1889, 32
  %v1908 = vpop.permute.xlu0 %1907
  %1909 = vrot.lane.b32.xlu0 %v1890, 32
  %v1910 = vpop.permute.xlu0 %1909
  %v1911 = vsel %vm514, %v1896, %v1898
  %v1912 = vsel %vm514, %v1898, %v1900
  %v1913 = vsel %vm514, %v1900, %v1902
  %v1914 = vsel %vm514, %v1904, %v1906
  %v1915 = vsel %vm514, %v1906, %v1908
  %v1916 = vsel %vm514, %v1908, %v1910
  %v1925 = vsel %vm514, 0.0, %v1896
  %v1926 = vsel %vm514, 0.0, %v1904
  %v1927 = vlaneseq
  %v1928 = vshrl.u32 %v1927, 7
  %v1929 = vsub.s32 6, %v1928
  %v1930 = vrot.slane %v67, %v1929
  %v1931 = vlaneseq
  %v1932 = vshrl.u32 %v1931, 7
  %v1933 = vsub.s32 6, %v1932
  %v1934 = vrot.slane %v68, %v1933
  %v1935 = vlaneseq
  %v1936 = vshrl.u32 %v1935, 7
  %v1937 = vsub.s32 6, %v1936
  %v1938 = vrot.slane %v69, %v1937
  %v1939 = vlaneseq
  %v1940 = vshrl.u32 %v1939, 7
  %v1941 = vsub.s32 6, %v1940
  %v1942 = vrot.slane %v70, %v1941
  %v1943 = vmul.f32 %v1925, %v1930
  %v1944 = vmul.f32 %v1911, %v1934
  %v1945 = vmul.f32 %v1912, %v1938
  %v1946 = vmul.f32 %v1913, %v1942
  %v1947 = vmul.f32 %v1926, %v1930
  %v1948 = vmul.f32 %v1914, %v1934
  %v1949 = vmul.f32 %v1915, %v1938
  %v1950 = vmul.f32 %v1916, %v1942
  %v1951 = vadd.f32 %v1859, %v1943
  %v1952 = vadd.f32 %v1860, %v1944
  %v1953 = vadd.f32 %v1861, %v1945
  %v1954 = vadd.f32 %v1862, %v1946
  %v1955 = vadd.f32 %v1863, %v1947
  %v1956 = vadd.f32 %v1864, %v1948
  %v1957 = vadd.f32 %v1865, %v1949
  %v1958 = vadd.f32 %v1866, %v1950
  %v1959 = vlaneseq
  %v1960 = vshrl.u32 %v1959, 7
  %v1961 = vsub.s32 7, %v1960
  %v1962 = vrot.slane %v67, %v1961
  %v1963 = vlaneseq
  %v1964 = vshrl.u32 %v1963, 7
  %v1965 = vsub.s32 7, %v1964
  %v1966 = vrot.slane %v68, %v1965
  %v1967 = vlaneseq
  %v1968 = vshrl.u32 %v1967, 7
  %v1969 = vsub.s32 7, %v1968
  %v1970 = vrot.slane %v69, %v1969
  %v1971 = vlaneseq
  %v1972 = vshrl.u32 %v1971, 7
  %v1973 = vsub.s32 7, %v1972
  %v1974 = vrot.slane %v70, %v1973
  %v1975 = vmul.f32 %v1869, %v1962
  %v1976 = vmul.f32 %v1872, %v1966
  %v1977 = vmul.f32 %v1875, %v1970
  %v1978 = vmul.f32 %v1878, %v1974
  %v1979 = vmul.f32 %v1887, %v1962
  %v1980 = vmul.f32 %v1888, %v1966
  %v1981 = vmul.f32 %v1889, %v1970
  %v1982 = vmul.f32 %v1890, %v1974
  %v1983 = vadd.f32 %v1951, %v1975
  %v1984 = vadd.f32 %v1952, %v1976
  %v1985 = vadd.f32 %v1953, %v1977
  %v1986 = vadd.f32 %v1954, %v1978
  %v1987 = vadd.f32 %v1955, %v1979
  %v1988 = vadd.f32 %v1956, %v1980
  %v1989 = vadd.f32 %v1957, %v1981
  %v1990 = vadd.f32 %v1958, %v1982
  %1991 = vrot.lane.b32.xlu0 %v1869, 96
  %v1992 = vpop.permute.xlu0 %1991
  %1993 = vrot.lane.b32.xlu0 %v1872, 96
  %v1994 = vpop.permute.xlu0 %1993
  %1995 = vrot.lane.b32.xlu0 %v1875, 96
  %v1996 = vpop.permute.xlu0 %1995
  %1997 = vrot.lane.b32.xlu0 %v1878, 96
  %v1998 = vpop.permute.xlu0 %1997
  %1999 = vrot.lane.b32.xlu0 %v1887, 96
  %v2000 = vpop.permute.xlu0 %1999
  %2001 = vrot.lane.b32.xlu0 %v1888, 96
  %v2002 = vpop.permute.xlu0 %2001
  %2003 = vrot.lane.b32.xlu0 %v1889, 96
  %v2004 = vpop.permute.xlu0 %2003
  %2005 = vrot.lane.b32.xlu0 %v1890, 96
  %v2006 = vpop.permute.xlu0 %2005
  %v2007 = vsel %vm603, %v1992, %v1994
  %v2008 = vsel %vm603, %v1994, %v1996
  %v2009 = vsel %vm603, %v1996, %v1998
  %v2010 = vsel %vm603, %v2000, %v2002
  %v2011 = vsel %vm603, %v2002, %v2004
  %v2012 = vsel %vm603, %v2004, %v2006
  %v2021 = vsel %vm603, %v1998, 0.0
  %v2022 = vsel %vm603, %v2006, 0.0
  %v2023 = vlaneseq
  %v2024 = vshrl.u32 %v2023, 7
  %v2025 = vsub.s32 0, %v2024
  %v2026 = vrot.slane %v71, %v2025
  %v2027 = vlaneseq
  %v2028 = vshrl.u32 %v2027, 7
  %v2029 = vsub.s32 0, %v2028
  %v2030 = vrot.slane %v72, %v2029
  %v2031 = vlaneseq
  %v2032 = vshrl.u32 %v2031, 7
  %v2033 = vsub.s32 0, %v2032
  %v2034 = vrot.slane %v73, %v2033
  %v2035 = vlaneseq
  %v2036 = vshrl.u32 %v2035, 7
  %v2037 = vsub.s32 0, %v2036
  %v2038 = vrot.slane %v74, %v2037
  %v2039 = vmul.f32 %v2007, %v2026
  %v2040 = vmul.f32 %v2008, %v2030
  %v2041 = vmul.f32 %v2009, %v2034
  %v2042 = vmul.f32 %v2021, %v2038
  %v2043 = vmul.f32 %v2010, %v2026
  %v2044 = vmul.f32 %v2011, %v2030
  %v2045 = vmul.f32 %v2012, %v2034
  %v2046 = vmul.f32 %v2022, %v2038
  %v2047 = vadd.f32 %v1983, %v2039
  %v2048 = vadd.f32 %v1984, %v2040
  %v2049 = vadd.f32 %v1985, %v2041
  %v2050 = vadd.f32 %v1986, %v2042
  %v2051 = vadd.f32 %v1987, %v2043
  %v2052 = vadd.f32 %v1988, %v2044
  %v2053 = vadd.f32 %v1989, %v2045
  %v2054 = vadd.f32 %v1990, %v2046
  %v2055 = vld [vmem:[%s13] sm:$0xf]
  %v2057 = vlaneseq
  %v2058 = vshrl.u32 %v2057, 7
  %v2059 = vsub.s32 0, %v2058
  %v2060 = vrot.slane %v2055, %v2059
  %v2061 = vlaneseq
  %v2062 = vshrl.u32 %v2061, 7
  %v2063 = vsub.s32 1, %v2062
  %v2064 = vrot.slane %v2055, %v2063
  %v2065 = vlaneseq
  %v2066 = vshrl.u32 %v2065, 7
  %v2067 = vsub.s32 2, %v2066
  %v2068 = vrot.slane %v2055, %v2067
  %v2069 = vlaneseq
  %v2070 = vshrl.u32 %v2069, 7
  %v2071 = vsub.s32 3, %v2070
  %v2072 = vrot.slane %v2055, %v2071
  %v2077 = vmul.f32 %v2047, %v2060
  %v2078 = vmul.f32 %v2048, %v2064
  %v2079 = vmul.f32 %v2049, %v2068
  %v2080 = vmul.f32 %v2050, %v2072
  %v2081 = vmul.f32 %v2051, %v2060
  %v2082 = vmul.f32 %v2052, %v2064
  %v2083 = vmul.f32 %v2053, %v2068
  %v2084 = vmul.f32 %v2054, %v2072
  %v2085 = vld [vmem:[%s14] sm:$0xf]
  %v2087 = vlaneseq
  %v2088 = vshrl.u32 %v2087, 7
  %v2089 = vsub.s32 0, %v2088
  %v2090 = vrot.slane %v2085, %v2089
  %v2091 = vlaneseq
  %v2092 = vshrl.u32 %v2091, 7
  %v2093 = vsub.s32 1, %v2092
  %v2094 = vrot.slane %v2085, %v2093
  %v2095 = vlaneseq
  %v2096 = vshrl.u32 %v2095, 7
  %v2097 = vsub.s32 2, %v2096
  %v2098 = vrot.slane %v2085, %v2097
  %v2099 = vlaneseq
  %v2100 = vshrl.u32 %v2099, 7
  %v2101 = vsub.s32 3, %v2100
  %v2102 = vrot.slane %v2085, %v2101
  %v2107 = vadd.f32 %v2077, %v2090
  %v2108 = vadd.f32 %v2078, %v2094
  %v2109 = vadd.f32 %v2079, %v2098
  %v2110 = vadd.f32 %v2080, %v2102
  %v2111 = vadd.f32 %v2081, %v2090
  %v2112 = vadd.f32 %v2082, %v2094
  %v2113 = vadd.f32 %v2083, %v2098
  %v2114 = vadd.f32 %v2084, %v2102
  %v2115 = vadd.f32 %v2107, 3.0
  %v2116 = vadd.f32 %v2108, 3.0
  %v2117 = vadd.f32 %v2109, 3.0
  %v2118 = vadd.f32 %v2110, 3.0
  %v2119 = vadd.f32 %v2111, 3.0
  %v2120 = vadd.f32 %v2112, 3.0
  %v2121 = vadd.f32 %v2113, 3.0
  %v2122 = vadd.f32 %v2114, 3.0
  %v2123 = vmax.f32 %v2115, 0.0
  %v2124 = vmax.f32 %v2116, 0.0
  %v2125 = vmax.f32 %v2117, 0.0
  %v2126 = vmax.f32 %v2118, 0.0
  %v2127 = vmax.f32 %v2119, 0.0
  %v2128 = vmax.f32 %v2120, 0.0
  %v2129 = vmax.f32 %v2121, 0.0
  %v2130 = vmax.f32 %v2122, 0.0
  %v2131 = vmin.f32 %v2123, 6.0
  %v2132 = vmin.f32 %v2124, 6.0
  %v2133 = vmin.f32 %v2125, 6.0
  %v2134 = vmin.f32 %v2126, 6.0
  %v2135 = vmin.f32 %v2127, 6.0
  %v2136 = vmin.f32 %v2128, 6.0
  %v2137 = vmin.f32 %v2129, 6.0
  %v2138 = vmin.f32 %v2130, 6.0
  %v2139 = vmul.f32 %v2107, %v2131
  %v2140 = vmul.f32 %v2108, %v2132
  %v2141 = vmul.f32 %v2109, %v2133
  %v2142 = vmul.f32 %v2110, %v2134
  %v2143 = vmul.f32 %v2111, %v2135
  %v2144 = vmul.f32 %v2112, %v2136
  %v2145 = vmul.f32 %v2113, %v2137
  %v2146 = vmul.f32 %v2114, %v2138
  %v2147 = vmul.f32 %v2139, 0.16666667
  %v2148 = vmul.f32 %v2140, 0.16666667
  %v2149 = vmul.f32 %v2141, 0.16666667
  %v2150 = vmul.f32 %v2142, 0.16666667
  %v2151 = vmul.f32 %v2143, 0.16666667
  %v2152 = vmul.f32 %v2144, 0.16666667
  %v2153 = vmul.f32 %v2145, 0.16666667
  %v2154 = vmul.f32 %v2146, 0.16666667
  %v2155 = vld [vmem:[%s15] sm:$0xff]
  %v2156 = vld [vmem:[%s15 + $0x8] sm:$0xff]
  %v2157 = vld [vmem:[%s15 + $0x10] sm:$0xff]
  %v2158 = vld [vmem:[%s15 + $0x18] sm:$0xff]
  %v2159 = vld [vmem:[%s15 + $0x20] sm:$0xff]
  %v2160 = vld [vmem:[%s15 + $0x28] sm:$0xff]
  %v2161 = vld [vmem:[%s15 + $0x30] sm:$0xff]
  %v2162 = vld [vmem:[%s15 + $0x38] sm:$0xff]
  %v2163 = vld [vmem:[%s15 + $0x40] sm:$0xff]
  %v2164 = vld [vmem:[%s15 + $0x48] sm:$0xff]
  %v2165 = vld [vmem:[%s15 + $0x50] sm:$0xff]
  %v2166 = vld [vmem:[%s15 + $0x58] sm:$0xff]
  %v2167 = vld [vmem:[%s15 + $0x60] sm:$0xff]
  %v2168 = vld [vmem:[%s15 + $0x68] sm:$0xff]
  %v2169 = vld [vmem:[%s15 + $0x70] sm:$0xff]
  %v2170 = vld [vmem:[%s15 + $0x78] sm:$0xff]
  %v2171 = vld [vmem:[%s15 + $0x80] sm:$0xff]
  %v2172 = vld [vmem:[%s15 + $0x88] sm:$0xff]
  %v2173 = vld [vmem:[%s15 + $0x90] sm:$0xff]
  %v2174 = vld [vmem:[%s15 + $0x98] sm:$0xff]
  %v2175 = vld [vmem:[%s15 + $0xa0] sm:$0xff]
  %v2176 = vld [vmem:[%s15 + $0xa8] sm:$0xff]
  %v2177 = vld [vmem:[%s15 + $0xb0] sm:$0xff]
  %v2178 = vld [vmem:[%s15 + $0xb8] sm:$0xff]
  %v2179 = vld [vmem:[%s15 + $0xc0] sm:$0xff]
  %v2180 = vld [vmem:[%s15 + $0xc8] sm:$0xff]
  %v2181 = vld [vmem:[%s15 + $0xd0] sm:$0xff]
  %v2182 = vld [vmem:[%s15 + $0xd8] sm:$0xff]
  %v2183 = vld [vmem:[%s15 + $0xe0] sm:$0xff]
  %v2184 = vld [vmem:[%s15 + $0xe8] sm:$0xff]
  %v2185 = vld [vmem:[%s15 + $0xf0] sm:$0xff]
  %v2186 = vld [vmem:[%s15 + $0xf8] sm:$0xff]
  %v2187 = vld [vmem:[%s15 + $0x100] sm:$0xff]
  %v2188 = vld [vmem:[%s15 + $0x108] sm:$0xff]
  %v2189 = vld [vmem:[%s15 + $0x110] sm:$0xff]
  %v2190 = vld [vmem:[%s15 + $0x118] sm:$0xff]
  %v2191 = vld [vmem:[%s15 + $0x120] sm:$0xff]
  %v2192 = vld [vmem:[%s15 + $0x128] sm:$0xff]
  %v2193 = vld [vmem:[%s15 + $0x130] sm:$0xff]
  %v2194 = vld [vmem:[%s15 + $0x138] sm:$0xff]
  %v2195 = vld [vmem:[%s15 + $0x140] sm:$0xff]
  %v2196 = vld [vmem:[%s15 + $0x148] sm:$0xff]
  %v2197 = vld [vmem:[%s15 + $0x150] sm:$0xff]
  %v2198 = vld [vmem:[%s15 + $0x158] sm:$0xff]
  %v2199 = vld [vmem:[%s15 + $0x160] sm:$0xff]
  %v2200 = vld [vmem:[%s15 + $0x168] sm:$0xff]
  %v2201 = vld [vmem:[%s15 + $0x170] sm:$0xff]
  %v2202 = vld [vmem:[%s15 + $0x178] sm:$0xff]
  %v2203 = vld [vmem:[%s15 + $0x180] sm:$0xff]
  %v2204 = vld [vmem:[%s15 + $0x188] sm:$0xff]
  %v2205 = vld [vmem:[%s15 + $0x190] sm:$0xff]
  %v2206 = vld [vmem:[%s15 + $0x198] sm:$0xff]
  %v2207 = vld [vmem:[%s15 + $0x1a0] sm:$0xff]
  %v2208 = vld [vmem:[%s15 + $0x1a8] sm:$0xff]
  %v2209 = vld [vmem:[%s15 + $0x1b0] sm:$0xff]
  %v2210 = vld [vmem:[%s15 + $0x1b8] sm:$0xff]
  %v2211 = vld [vmem:[%s15 + $0x1c0] sm:$0xff]
  %v2212 = vld [vmem:[%s15 + $0x1c8] sm:$0xff]
  %v2213 = vld [vmem:[%s15 + $0x1d0] sm:$0xff]
  %v2214 = vld [vmem:[%s15 + $0x1d8] sm:$0xff]
  %v2215 = vld [vmem:[%s15 + $0x1e0] sm:$0xff]
  %v2216 = vld [vmem:[%s15 + $0x1e8] sm:$0xff]
  %v2217 = vld [vmem:[%s15 + $0x1f0] sm:$0xff]
  %v2218 = vld [vmem:[%s15 + $0x1f8] sm:$0xff]
  %v2219 = vld [vmem:[%s15 + $0x200] sm:$0xff]
  %v2220 = vld [vmem:[%s15 + $0x208] sm:$0xff]
  %v2221 = vld [vmem:[%s15 + $0x210] sm:$0xff]
  %v2222 = vld [vmem:[%s15 + $0x218] sm:$0xff]
  %v2223 = vld [vmem:[%s15 + $0x220] sm:$0xff]
  %v2224 = vld [vmem:[%s15 + $0x228] sm:$0xff]
  %v2225 = vld [vmem:[%s15 + $0x230] sm:$0xff]
  %v2226 = vld [vmem:[%s15 + $0x238] sm:$0xff]
  %v2227 = vld [vmem:[%s15 + $0x240] sm:$0xff]
  %v2228 = vld [vmem:[%s15 + $0x248] sm:$0xff]
  %v2229 = vld [vmem:[%s15 + $0x250] sm:$0xff]
  %v2230 = vld [vmem:[%s15 + $0x258] sm:$0xff]
  %v2231 = vld [vmem:[%s15 + $0x260] sm:$0xff]
  %v2232 = vld [vmem:[%s15 + $0x268] sm:$0xff]
  %v2233 = vld [vmem:[%s15 + $0x270] sm:$0xff]
  %v2234 = vld [vmem:[%s15 + $0x278] sm:$0xff]
  %v2235 = vld [vmem:[%s15 + $0x280] sm:$0xff]
  %v2236 = vld [vmem:[%s15 + $0x288] sm:$0xff]
  %v2237 = vld [vmem:[%s15 + $0x290] sm:$0xff]
  %v2238 = vld [vmem:[%s15 + $0x298] sm:$0xff]
  %v2239 = vld [vmem:[%s15 + $0x2a0] sm:$0xff]
  %v2240 = vld [vmem:[%s15 + $0x2a8] sm:$0xff]
  %v2241 = vld [vmem:[%s15 + $0x2b0] sm:$0xff]
  %v2242 = vld [vmem:[%s15 + $0x2b8] sm:$0xff]
  %v2243 = vld [vmem:[%s15 + $0x2c0] sm:$0xff]
  %v2244 = vld [vmem:[%s15 + $0x2c8] sm:$0xff]
  %v2245 = vld [vmem:[%s15 + $0x2d0] sm:$0xff]
  %v2246 = vld [vmem:[%s15 + $0x2d8] sm:$0xff]
  %v2247 = vld [vmem:[%s15 + $0x2e0] sm:$0xff]
  %v2248 = vld [vmem:[%s15 + $0x2e8] sm:$0xff]
  %v2249 = vld [vmem:[%s15 + $0x2f0] sm:$0xff]
  %v2250 = vld [vmem:[%s15 + $0x2f8] sm:$0xff]
  %v2251 = vld [vmem:[%s15 + $0x300] sm:$0xff]
  %v2252 = vld [vmem:[%s15 + $0x308] sm:$0xff]
  %v2253 = vld [vmem:[%s15 + $0x310] sm:$0xff]
  %v2254 = vld [vmem:[%s15 + $0x318] sm:$0xff]
  %v2255 = vld [vmem:[%s15 + $0x320] sm:$0xff]
  %v2256 = vld [vmem:[%s15 + $0x328] sm:$0xff]
  %v2257 = vld [vmem:[%s15 + $0x330] sm:$0xff]
  %v2258 = vld [vmem:[%s15 + $0x338] sm:$0xff]
  %v2259 = vld [vmem:[%s15 + $0x340] sm:$0xff]
  %v2260 = vld [vmem:[%s15 + $0x348] sm:$0xff]
  %v2261 = vld [vmem:[%s15 + $0x350] sm:$0xff]
  %v2262 = vld [vmem:[%s15 + $0x358] sm:$0xff]
  %v2263 = vld [vmem:[%s15 + $0x360] sm:$0xff]
  %v2264 = vld [vmem:[%s15 + $0x368] sm:$0xff]
  %v2265 = vld [vmem:[%s15 + $0x370] sm:$0xff]
  %v2266 = vld [vmem:[%s15 + $0x378] sm:$0xff]
  %v2267 = vld [vmem:[%s15 + $0x380] sm:$0xff]
  %v2268 = vld [vmem:[%s15 + $0x388] sm:$0xff]
  %v2269 = vld [vmem:[%s15 + $0x390] sm:$0xff]
  %v2270 = vld [vmem:[%s15 + $0x398] sm:$0xff]
  %v2271 = vld [vmem:[%s15 + $0x3a0] sm:$0xff]
  %v2272 = vld [vmem:[%s15 + $0x3a8] sm:$0xff]
  %v2273 = vld [vmem:[%s15 + $0x3b0] sm:$0xff]
  %v2274 = vld [vmem:[%s15 + $0x3b8] sm:$0xff]
  %v2275 = vld [vmem:[%s15 + $0x3c0] sm:$0xff]
  %v2276 = vld [vmem:[%s15 + $0x3c8] sm:$0xff]
  %v2277 = vld [vmem:[%s15 + $0x3d0] sm:$0xff]
  %v2278 = vld [vmem:[%s15 + $0x3d8] sm:$0xff]
  %v2279 = vld [vmem:[%s15 + $0x3e0] sm:$0xff]
  %v2280 = vld [vmem:[%s15 + $0x3e8] sm:$0xff]
  %v2281 = vld [vmem:[%s15 + $0x3f0] sm:$0xff]
  %v2282 = vld [vmem:[%s15 + $0x3f8] sm:$0xff]
  %2283 = vmatprep.subr.mxu0 %v2186
  %2284 = vmatpush1.msra.mxu0 %v2185
  %2285 = vmatprep.subr.mxu0 %v2184
  %2286 = vmatpush1.msra.mxu0 %v2183
  %2287 = vmatprep.subr.mxu0 %v2182
  %2288 = vmatpush1.msra.mxu0 %v2181
  %2289 = vmatprep.subr.mxu0 %v2180
  %2290 = vmatpush1.msra.mxu0 %v2179
  %2291 = vmatprep.subr.mxu0 %v2178
  %2292 = vmatpush1.msra.mxu0 %v2177
  %2293 = vmatprep.subr.mxu0 %v2176
  %2294 = vmatpush1.msra.mxu0 %v2175
  %2295 = vmatprep.subr.mxu0 %v2174
  %2296 = vmatpush1.msra.mxu0 %v2173
  %2297 = vmatprep.subr.mxu0 %v2172
  %2298 = vmatpush1.msra.mxu0 %v2171
  %2299 = vmatprep.subr.mxu0 %v2170
  %2300 = vmatpush1.msra.mxu0 %v2169
  %2301 = vmatprep.subr.mxu0 %v2168
  %2302 = vmatpush1.msra.mxu0 %v2167
  %2303 = vmatprep.subr.mxu0 %v2166
  %2304 = vmatpush1.msra.mxu0 %v2165
  %2305 = vmatprep.subr.mxu0 %v2164
  %2306 = vmatpush1.msra.mxu0 %v2163
  %2307 = vmatprep.subr.mxu0 %v2162
  %2308 = vmatpush1.msra.mxu0 %v2161
  %2309 = vmatprep.subr.mxu0 %v2160
  %2310 = vmatpush1.msra.mxu0 %v2159
  %2311 = vmatprep.subr.mxu0 %v2158
  %2312 = vmatpush1.msra.mxu0 %v2157
  %2313 = vmatprep.subr.mxu0 %v2156
  %2314 = vmatpush1.msra.mxu0 %v2155
  %2315 = vmatprep.subr.mxu0 %v2218
  %2316 = vmatpush2.msra.mxu0 %v2217
  %2317 = vmatprep.subr.mxu0 %v2216
  %2318 = vmatpush2.msra.mxu0 %v2215
  %2319 = vmatprep.subr.mxu0 %v2214
  %2320 = vmatpush2.msra.mxu0 %v2213
  %2321 = vmatprep.subr.mxu0 %v2212
  %2322 = vmatpush2.msra.mxu0 %v2211
  %2323 = vmatprep.subr.mxu0 %v2210
  %2324 = vmatpush2.msra.mxu0 %v2209
  %2325 = vmatprep.subr.mxu0 %v2208
  %2326 = vmatpush2.msra.mxu0 %v2207
  %2327 = vmatprep.subr.mxu0 %v2206
  %2328 = vmatpush2.msra.mxu0 %v2205
  %2329 = vmatprep.subr.mxu0 %v2204
  %2330 = vmatpush2.msra.mxu0 %v2203
  %2331 = vmatprep.subr.mxu0 %v2202
  %2332 = vmatpush2.msra.mxu0 %v2201
  %2333 = vmatprep.subr.mxu0 %v2200
  %2334 = vmatpush2.msra.mxu0 %v2199
  %2335 = vmatprep.subr.mxu0 %v2198
  %2336 = vmatpush2.msra.mxu0 %v2197
  %2337 = vmatprep.subr.mxu0 %v2196
  %2338 = vmatpush2.msra.mxu0 %v2195
  %2339 = vmatprep.subr.mxu0 %v2194
  %2340 = vmatpush2.msra.mxu0 %v2193
  %2341 = vmatprep.subr.mxu0 %v2192
  %2342 = vmatpush2.msra.mxu0 %v2191
  %2343 = vmatprep.subr.mxu0 %v2190
  %2344 = vmatpush2.msra.mxu0 %v2189
  %2345 = vmatprep.subr.mxu0 %v2188
  %2346 = vmatpush2.msra.mxu0 %v2187
  %2347 = vmatprep.mubr.f32.mxu0 %v2148
  %2348 = vmatmul.mubr.f32.gmra.mxu0 %v2147
  %v2349 = vpop.f32.mrf.mxu0
  %v2350 = vadd.f32 0.0, %v2349
  %v2351 = vpop.f32.mrf.mxu0
  %v2352 = vadd.f32 0.0, %v2351
  %2353 = vmatprep.mubr.f32.mxu0 %v2152
  %2354 = vmatmul.mubr.f32.gmra.mxu0 %v2151
  %v2355 = vpop.f32.mrf.mxu0
  %v2356 = vadd.f32 0.0, %v2355
  %v2357 = vpop.f32.mrf.mxu0
  %v2358 = vadd.f32 0.0, %v2357
  %2359 = vdwg.mxu0
  %2360 = vmatprep.subr.mxu0 %v2250
  %2361 = vmatpush1.msra.mxu0 %v2249
  %2362 = vmatprep.subr.mxu0 %v2248
  %2363 = vmatpush1.msra.mxu0 %v2247
  %2364 = vmatprep.subr.mxu0 %v2246
  %2365 = vmatpush1.msra.mxu0 %v2245
  %2366 = vmatprep.subr.mxu0 %v2244
  %2367 = vmatpush1.msra.mxu0 %v2243
  %2368 = vmatprep.subr.mxu0 %v2242
  %2369 = vmatpush1.msra.mxu0 %v2241
  %2370 = vmatprep.subr.mxu0 %v2240
  %2371 = vmatpush1.msra.mxu0 %v2239
  %2372 = vmatprep.subr.mxu0 %v2238
  %2373 = vmatpush1.msra.mxu0 %v2237
  %2374 = vmatprep.subr.mxu0 %v2236
  %2375 = vmatpush1.msra.mxu0 %v2235
  %2376 = vmatprep.subr.mxu0 %v2234
  %2377 = vmatpush1.msra.mxu0 %v2233
  %2378 = vmatprep.subr.mxu0 %v2232
  %2379 = vmatpush1.msra.mxu0 %v2231
  %2380 = vmatprep.subr.mxu0 %v2230
  %2381 = vmatpush1.msra.mxu0 %v2229
  %2382 = vmatprep.subr.mxu0 %v2228
  %2383 = vmatpush1.msra.mxu0 %v2227
  %2384 = vmatprep.subr.mxu0 %v2226
  %2385 = vmatpush1.msra.mxu0 %v2225
  %2386 = vmatprep.subr.mxu0 %v2224
  %2387 = vmatpush1.msra.mxu0 %v2223
  %2388 = vmatprep.subr.mxu0 %v2222
  %2389 = vmatpush1.msra.mxu0 %v2221
  %2390 = vmatprep.subr.mxu0 %v2220
  %2391 = vmatpush1.msra.mxu0 %v2219
  %2392 = vmatprep.subr.mxu0 %v2282
  %2393 = vmatpush2.msra.mxu0 %v2281
  %2394 = vmatprep.subr.mxu0 %v2280
  %2395 = vmatpush2.msra.mxu0 %v2279
  %2396 = vmatprep.subr.mxu0 %v2278
  %2397 = vmatpush2.msra.mxu0 %v2277
  %2398 = vmatprep.subr.mxu0 %v2276
  %2399 = vmatpush2.msra.mxu0 %v2275
  %2400 = vmatprep.subr.mxu0 %v2274
  %2401 = vmatpush2.msra.mxu0 %v2273
  %2402 = vmatprep.subr.mxu0 %v2272
  %2403 = vmatpush2.msra.mxu0 %v2271
  %2404 = vmatprep.subr.mxu0 %v2270
  %2405 = vmatpush2.msra.mxu0 %v2269
  %2406 = vmatprep.subr.mxu0 %v2268
  %2407 = vmatpush2.msra.mxu0 %v2267
  %2408 = vmatprep.subr.mxu0 %v2266
  %2409 = vmatpush2.msra.mxu0 %v2265
  %2410 = vmatprep.subr.mxu0 %v2264
  %2411 = vmatpush2.msra.mxu0 %v2263
  %2412 = vmatprep.subr.mxu0 %v2262
  %2413 = vmatpush2.msra.mxu0 %v2261
  %2414 = vmatprep.subr.mxu0 %v2260
  %2415 = vmatpush2.msra.mxu0 %v2259
  %2416 = vmatprep.subr.mxu0 %v2258
  %2417 = vmatpush2.msra.mxu0 %v2257
  %2418 = vmatprep.subr.mxu0 %v2256
  %2419 = vmatpush2.msra.mxu0 %v2255
  %2420 = vmatprep.subr.mxu0 %v2254
  %2421 = vmatpush2.msra.mxu0 %v2253
  %2422 = vmatprep.subr.mxu0 %v2252
  %2423 = vmatpush2.msra.mxu0 %v2251
  %2424 = vmatprep.mubr.f32.mxu0 %v2150
  %2425 = vmatmul.mubr.f32.gmra.mxu0 %v2149
  %v2426 = vpop.f32.mrf.mxu0
  %v2427 = vadd.f32 %v2350, %v2426
  %v2428 = vpop.f32.mrf.mxu0
  %v2429 = vadd.f32 %v2352, %v2428
  %2430 = vmatprep.mubr.f32.mxu0 %v2154
  %2431 = vmatmul.mubr.f32.gmra.mxu0 %v2153
  %v2432 = vpop.f32.mrf.mxu0
  %v2433 = vadd.f32 %v2356, %v2432
  %v2434 = vpop.f32.mrf.mxu0
  %v2435 = vadd.f32 %v2358, %v2434
  %2436 = vdwg.mxu0
  %v2437 = vld [vmem:[%s16] sm:$0x3]
  %v2439 = vlaneseq
  %v2440 = vshrl.u32 %v2439, 7
  %v2441 = vsub.s32 0, %v2440
  %v2442 = vrot.slane %v2437, %v2441
  %v2443 = vlaneseq
  %v2444 = vshrl.u32 %v2443, 7
  %v2445 = vsub.s32 1, %v2444
  %v2446 = vrot.slane %v2437, %v2445
  %v2449 = vmul.f32 %v2427, %v2442
  %v2450 = vmul.f32 %v2429, %v2446
  %v2451 = vmul.f32 %v2433, %v2442
  %v2452 = vmul.f32 %v2435, %v2446
  %v2453 = vld [vmem:[%s17] sm:$0x3]
  %v2455 = vlaneseq
  %v2456 = vshrl.u32 %v2455, 7
  %v2457 = vsub.s32 0, %v2456
  %v2458 = vrot.slane %v2453, %v2457
  %v2459 = vlaneseq
  %v2460 = vshrl.u32 %v2459, 7
  %v2461 = vsub.s32 1, %v2460
  %v2462 = vrot.slane %v2453, %v2461
  %v2465 = vadd.f32 %v2449, %v2458
  %v2466 = vadd.f32 %v2450, %v2462
  %v2467 = vadd.f32 %v2451, %v2458
  %v2468 = vadd.f32 %v2452, %v2462
  %v2469 = vadd.f32 %v2465, %v75
  %v2470 = vadd.f32 %v2466, %v76
  %v2471 = vadd.f32 %v2467, %v77
  %v2472 = vadd.f32 %v2468, %v78
  %2473 = vst [vmem:[%s18] sm:$0xff] %v2469
  %2474 = vst [vmem:[%s18 + $0x8] sm:$0xff] %v2470
  %2475 = vst [vmem:[%s18 + $0x10] sm:$0xff] %v2471
  %2476 = vst [vmem:[%s18 + $0x18] sm:$0xff] %v2472
  %s2477 = scalar_lea.vmem %s0, 32
  %v2478 = vld [vmem:[%s2477] sm:$0xff]
  %v2479 = vld [vmem:[%s2477 + $0x8] sm:$0xff]
  %v2480 = vld [vmem:[%s2477 + $0x10] sm:$0xff]
  %v2481 = vld [vmem:[%s2477 + $0x18] sm:$0xff]
  %v2482 = vld [vmem:[%s1] sm:$0xff]
  %v2483 = vld [vmem:[%s1 + $0x8] sm:$0xff]
  %v2484 = vld [vmem:[%s1 + $0x10] sm:$0xff]
  %v2485 = vld [vmem:[%s1 + $0x18] sm:$0xff]
  %v2486 = vld [vmem:[%s1 + $0x20] sm:$0xff]
  %v2487 = vld [vmem:[%s1 + $0x28] sm:$0xff]
  %v2488 = vld [vmem:[%s1 + $0x30] sm:$0xff]
  %v2489 = vld [vmem:[%s1 + $0x38] sm:$0xff]
  %v2490 = vld [vmem:[%s1 + $0x40] sm:$0xff]
  %v2491 = vld [vmem:[%s1 + $0x48] sm:$0xff]
  %v2492 = vld [vmem:[%s1 + $0x50] sm:$0xff]
  %v2493 = vld [vmem:[%s1 + $0x58] sm:$0xff]
  %v2494 = vld [vmem:[%s1 + $0x60] sm:$0xff]
  %v2495 = vld [vmem:[%s1 + $0x68] sm:$0xff]
  %v2496 = vld [vmem:[%s1 + $0x70] sm:$0xff]
  %v2497 = vld [vmem:[%s1 + $0x78] sm:$0xff]
  %v2498 = vld [vmem:[%s1 + $0x80] sm:$0xff]
  %v2499 = vld [vmem:[%s1 + $0x88] sm:$0xff]
  %v2500 = vld [vmem:[%s1 + $0x90] sm:$0xff]
  %v2501 = vld [vmem:[%s1 + $0x98] sm:$0xff]
  %v2502 = vld [vmem:[%s1 + $0xa0] sm:$0xff]
  %v2503 = vld [vmem:[%s1 + $0xa8] sm:$0xff]
  %v2504 = vld [vmem:[%s1 + $0xb0] sm:$0xff]
  %v2505 = vld [vmem:[%s1 + $0xb8] sm:$0xff]
  %v2506 = vld [vmem:[%s1 + $0xc0] sm:$0xff]
  %v2507 = vld [vmem:[%s1 + $0xc8] sm:$0xff]
  %v2508 = vld [vmem:[%s1 + $0xd0] sm:$0xff]
  %v2509 = vld [vmem:[%s1 + $0xd8] sm:$0xff]
  %v2510 = vld [vmem:[%s1 + $0xe0] sm:$0xff]
  %v2511 = vld [vmem:[%s1 + $0xe8] sm:$0xff]
  %v2512 = vld [vmem:[%s1 + $0xf0] sm:$0xff]
  %v2513 = vld [vmem:[%s1 + $0xf8] sm:$0xff]
  %v2514 = vld [vmem:[%s1 + $0x100] sm:$0xff]
  %v2515 = vld [vmem:[%s1 + $0x108] sm:$0xff]
  %v2516 = vld [vmem:[%s1 + $0x110] sm:$0xff]
  %v2517 = vld [vmem:[%s1 + $0x118] sm:$0xff]
  %v2518 = vld [vmem:[%s1 + $0x120] sm:$0xff]
  %v2519 = vld [vmem:[%s1 + $0x128] sm:$0xff]
  %v2520 = vld [vmem:[%s1 + $0x130] sm:$0xff]
  %v2521 = vld [vmem:[%s1 + $0x138] sm:$0xff]
  %v2522 = vld [vmem:[%s1 + $0x140] sm:$0xff]
  %v2523 = vld [vmem:[%s1 + $0x148] sm:$0xff]
  %v2524 = vld [vmem:[%s1 + $0x150] sm:$0xff]
  %v2525 = vld [vmem:[%s1 + $0x158] sm:$0xff]
  %v2526 = vld [vmem:[%s1 + $0x160] sm:$0xff]
  %v2527 = vld [vmem:[%s1 + $0x168] sm:$0xff]
  %v2528 = vld [vmem:[%s1 + $0x170] sm:$0xff]
  %v2529 = vld [vmem:[%s1 + $0x178] sm:$0xff]
  %v2530 = vld [vmem:[%s1 + $0x180] sm:$0xff]
  %v2531 = vld [vmem:[%s1 + $0x188] sm:$0xff]
  %v2532 = vld [vmem:[%s1 + $0x190] sm:$0xff]
  %v2533 = vld [vmem:[%s1 + $0x198] sm:$0xff]
  %v2534 = vld [vmem:[%s1 + $0x1a0] sm:$0xff]
  %v2535 = vld [vmem:[%s1 + $0x1a8] sm:$0xff]
  %v2536 = vld [vmem:[%s1 + $0x1b0] sm:$0xff]
  %v2537 = vld [vmem:[%s1 + $0x1b8] sm:$0xff]
  %v2538 = vld [vmem:[%s1 + $0x1c0] sm:$0xff]
  %v2539 = vld [vmem:[%s1 + $0x1c8] sm:$0xff]
  %v2540 = vld [vmem:[%s1 + $0x1d0] sm:$0xff]
  %v2541 = vld [vmem:[%s1 + $0x1d8] sm:$0xff]
  %v2542 = vld [vmem:[%s1 + $0x1e0] sm:$0xff]
  %v2543 = vld [vmem:[%s1 + $0x1e8] sm:$0xff]
  %v2544 = vld [vmem:[%s1 + $0x1f0] sm:$0xff]
  %v2545 = vld [vmem:[%s1 + $0x1f8] sm:$0xff]
  %v2546 = vld [vmem:[%s1 + $0x200] sm:$0xff]
  %v2547 = vld [vmem:[%s1 + $0x208] sm:$0xff]
  %v2548 = vld [vmem:[%s1 + $0x210] sm:$0xff]
  %v2549 = vld [vmem:[%s1 + $0x218] sm:$0xff]
  %v2550 = vld [vmem:[%s1 + $0x220] sm:$0xff]
  %v2551 = vld [vmem:[%s1 + $0x228] sm:$0xff]
  %v2552 = vld [vmem:[%s1 + $0x230] sm:$0xff]
  %v2553 = vld [vmem:[%s1 + $0x238] sm:$0xff]
  %v2554 = vld [vmem:[%s1 + $0x240] sm:$0xff]
  %v2555 = vld [vmem:[%s1 + $0x248] sm:$0xff]
  %v2556 = vld [vmem:[%s1 + $0x250] sm:$0xff]
  %v2557 = vld [vmem:[%s1 + $0x258] sm:$0xff]
  %v2558 = vld [vmem:[%s1 + $0x260] sm:$0xff]
  %v2559 = vld [vmem:[%s1 + $0x268] sm:$0xff]
  %v2560 = vld [vmem:[%s1 + $0x270] sm:$0xff]
  %v2561 = vld [vmem:[%s1 + $0x278] sm:$0xff]
  %v2562 = vld [vmem:[%s1 + $0x280] sm:$0xff]
  %v2563 = vld [vmem:[%s1 + $0x288] sm:$0xff]
  %v2564 = vld [vmem:[%s1 + $0x290] sm:$0xff]
  %v2565 = vld [vmem:[%s1 + $0x298] sm:$0xff]
  %v2566 = vld [vmem:[%s1 + $0x2a0] sm:$0xff]
  %v2567 = vld [vmem:[%s1 + $0x2a8] sm:$0xff]
  %v2568 = vld [vmem:[%s1 + $0x2b0] sm:$0xff]
  %v2569 = vld [vmem:[%s1 + $0x2b8] sm:$0xff]
  %v2570 = vld [vmem:[%s1 + $0x2c0] sm:$0xff]
  %v2571 = vld [vmem:[%s1 + $0x2c8] sm:$0xff]
  %v2572 = vld [vmem:[%s1 + $0x2d0] sm:$0xff]
  %v2573 = vld [vmem:[%s1 + $0x2d8] sm:$0xff]
  %v2574 = vld [vmem:[%s1 + $0x2e0] sm:$0xff]
  %v2575 = vld [vmem:[%s1 + $0x2e8] sm:$0xff]
  %v2576 = vld [vmem:[%s1 + $0x2f0] sm:$0xff]
  %v2577 = vld [vmem:[%s1 + $0x2f8] sm:$0xff]
  %v2578 = vld [vmem:[%s1 + $0x300] sm:$0xff]
  %v2579 = vld [vmem:[%s1 + $0x308] sm:$0xff]
  %v2580 = vld [vmem:[%s1 + $0x310] sm:$0xff]
  %v2581 = vld [vmem:[%s1 + $0x318] sm:$0xff]
  %v2582 = vld [vmem:[%s1 + $0x320] sm:$0xff]
  %v2583 = vld [vmem:[%s1 + $0x328] sm:$0xff]
  %v2584 = vld [vmem:[%s1 + $0x330] sm:$0xff]
  %v2585 = vld [vmem:[%s1 + $0x338] sm:$0xff]
  %v2586 = vld [vmem:[%s1 + $0x340] sm:$0xff]
  %v2587 = vld [vmem:[%s1 + $0x348] sm:$0xff]
  %v2588 = vld [vmem:[%s1 + $0x350] sm:$0xff]
  %v2589 = vld [vmem:[%s1 + $0x358] sm:$0xff]
  %v2590 = vld [vmem:[%s1 + $0x360] sm:$0xff]
  %v2591 = vld [vmem:[%s1 + $0x368] sm:$0xff]
  %v2592 = vld [vmem:[%s1 + $0x370] sm:$0xff]
  %v2593 = vld [vmem:[%s1 + $0x378] sm:$0xff]
  %v2594 = vld [vmem:[%s1 + $0x380] sm:$0xff]
  %v2595 = vld [vmem:[%s1 + $0x388] sm:$0xff]
  %v2596 = vld [vmem:[%s1 + $0x390] sm:$0xff]
  %v2597 = vld [vmem:[%s1 + $0x398] sm:$0xff]
  %v2598 = vld [vmem:[%s1 + $0x3a0] sm:$0xff]
  %v2599 = vld [vmem:[%s1 + $0x3a8] sm:$0xff]
  %v2600 = vld [vmem:[%s1 + $0x3b0] sm:$0xff]
  %v2601 = vld [vmem:[%s1 + $0x3b8] sm:$0xff]
  %v2602 = vld [vmem:[%s1 + $0x3c0] sm:$0xff]
  %v2603 = vld [vmem:[%s1 + $0x3c8] sm:$0xff]
  %v2604 = vld [vmem:[%s1 + $0x3d0] sm:$0xff]
  %v2605 = vld [vmem:[%s1 + $0x3d8] sm:$0xff]
  %v2606 = vld [vmem:[%s1 + $0x3e0] sm:$0xff]
  %v2607 = vld [vmem:[%s1 + $0x3e8] sm:$0xff]
  %v2608 = vld [vmem:[%s1 + $0x3f0] sm:$0xff]
  %v2609 = vld [vmem:[%s1 + $0x3f8] sm:$0xff]
  %2610 = vmatprep.subr.mxu0 %v2543
  %2611 = vmatpush1.msra.mxu0 %v2542
  %2612 = vmatprep.subr.mxu0 %v2539
  %2613 = vmatpush1.msra.mxu0 %v2538
  %2614 = vmatprep.subr.mxu0 %v2535
  %2615 = vmatpush1.msra.mxu0 %v2534
  %2616 = vmatprep.subr.mxu0 %v2531
  %2617 = vmatpush1.msra.mxu0 %v2530
  %2618 = vmatprep.subr.mxu0 %v2527
  %2619 = vmatpush1.msra.mxu0 %v2526
  %2620 = vmatprep.subr.mxu0 %v2523
  %2621 = vmatpush1.msra.mxu0 %v2522
  %2622 = vmatprep.subr.mxu0 %v2519
  %2623 = vmatpush1.msra.mxu0 %v2518
  %2624 = vmatprep.subr.mxu0 %v2515
  %2625 = vmatpush1.msra.mxu0 %v2514
  %2626 = vmatprep.subr.mxu0 %v2511
  %2627 = vmatpush1.msra.mxu0 %v2510
  %2628 = vmatprep.subr.mxu0 %v2507
  %2629 = vmatpush1.msra.mxu0 %v2506
  %2630 = vmatprep.subr.mxu0 %v2503
  %2631 = vmatpush1.msra.mxu0 %v2502
  %2632 = vmatprep.subr.mxu0 %v2499
  %2633 = vmatpush1.msra.mxu0 %v2498
  %2634 = vmatprep.subr.mxu0 %v2495
  %2635 = vmatpush1.msra.mxu0 %v2494
  %2636 = vmatprep.subr.mxu0 %v2491
  %2637 = vmatpush1.msra.mxu0 %v2490
  %2638 = vmatprep.subr.mxu0 %v2487
  %2639 = vmatpush1.msra.mxu0 %v2486
  %2640 = vmatprep.subr.mxu0 %v2483
  %2641 = vmatpush1.msra.mxu0 %v2482
  %2642 = vmatprep.subr.mxu0 %v2607
  %2643 = vmatpush2.msra.mxu0 %v2606
  %2644 = vmatprep.subr.mxu0 %v2603
  %2645 = vmatpush2.msra.mxu0 %v2602
  %2646 = vmatprep.subr.mxu0 %v2599
  %2647 = vmatpush2.msra.mxu0 %v2598
  %2648 = vmatprep.subr.mxu0 %v2595
  %2649 = vmatpush2.msra.mxu0 %v2594
  %2650 = vmatprep.subr.mxu0 %v2591
  %2651 = vmatpush2.msra.mxu0 %v2590
  %2652 = vmatprep.subr.mxu0 %v2587
  %2653 = vmatpush2.msra.mxu0 %v2586
  %2654 = vmatprep.subr.mxu0 %v2583
  %2655 = vmatpush2.msra.mxu0 %v2582
  %2656 = vmatprep.subr.mxu0 %v2579
  %2657 = vmatpush2.msra.mxu0 %v2578
  %2658 = vmatprep.subr.mxu0 %v2575
  %2659 = vmatpush2.msra.mxu0 %v2574
  %2660 = vmatprep.subr.mxu0 %v2571
  %2661 = vmatpush2.msra.mxu0 %v2570
  %2662 = vmatprep.subr.mxu0 %v2567
  %2663 = vmatpush2.msra.mxu0 %v2566
  %2664 = vmatprep.subr.mxu0 %v2563
  %2665 = vmatpush2.msra.mxu0 %v2562
  %2666 = vmatprep.subr.mxu0 %v2559
  %2667 = vmatpush2.msra.mxu0 %v2558
  %2668 = vmatprep.subr.mxu0 %v2555
  %2669 = vmatpush2.msra.mxu0 %v2554
  %2670 = vmatprep.subr.mxu0 %v2551
  %2671 = vmatpush2.msra.mxu0 %v2550
  %2672 = vmatprep.subr.mxu0 %v2547
  %2673 = vmatpush2.msra.mxu0 %v2546
  %2674 = vmatprep.mubr.f32.mxu0 %v2479
  %2675 = vmatmul.mubr.f32.gmra.mxu0 %v2478
  %v2676 = vpop.f32.mrf.mxu0
  %v2677 = vadd.f32 0.0, %v2676
  %v2678 = vpop.f32.mrf.mxu0
  %v2679 = vadd.f32 0.0, %v2678
  %2680 = vmatprep.mubr.f32.mxu0 %v2481
  %2681 = vmatmul.mubr.f32.gmra.mxu0 %v2480
  %v2682 = vpop.f32.mrf.mxu0
  %v2683 = vadd.f32 0.0, %v2682
  %v2684 = vpop.f32.mrf.mxu0
  %v2685 = vadd.f32 0.0, %v2684
  %2686 = vdwg.mxu0
  %2687 = vmatprep.subr.mxu0 %v2545
  %2688 = vmatpush1.msra.mxu0 %v2544
  %2689 = vmatprep.subr.mxu0 %v2541
  %2690 = vmatpush1.msra.mxu0 %v2540
  %2691 = vmatprep.subr.mxu0 %v2537
  %2692 = vmatpush1.msra.mxu0 %v2536
  %2693 = vmatprep.subr.mxu0 %v2533
  %2694 = vmatpush1.msra.mxu0 %v2532
  %2695 = vmatprep.subr.mxu0 %v2529
  %2696 = vmatpush1.msra.mxu0 %v2528
  %2697 = vmatprep.subr.mxu0 %v2525
  %2698 = vmatpush1.msra.mxu0 %v2524
  %2699 = vmatprep.subr.mxu0 %v2521
  %2700 = vmatpush1.msra.mxu0 %v2520
  %2701 = vmatprep.subr.mxu0 %v2517
  %2702 = vmatpush1.msra.mxu0 %v2516
  %2703 = vmatprep.subr.mxu0 %v2513
  %2704 = vmatpush1.msra.mxu0 %v2512
  %2705 = vmatprep.subr.mxu0 %v2509
  %2706 = vmatpush1.msra.mxu0 %v2508
  %2707 = vmatprep.subr.mxu0 %v2505
  %2708 = vmatpush1.msra.mxu0 %v2504
  %2709 = vmatprep.subr.mxu0 %v2501
  %2710 = vmatpush1.msra.mxu0 %v2500
  %2711 = vmatprep.subr.mxu0 %v2497
  %2712 = vmatpush1.msra.mxu0 %v2496
  %2713 = vmatprep.subr.mxu0 %v2493
  %2714 = vmatpush1.msra.mxu0 %v2492
  %2715 = vmatprep.subr.mxu0 %v2489
  %2716 = vmatpush1.msra.mxu0 %v2488
  %2717 = vmatprep.subr.mxu0 %v2485
  %2718 = vmatpush1.msra.mxu0 %v2484
  %2719 = vmatprep.subr.mxu0 %v2609
  %2720 = vmatpush2.msra.mxu0 %v2608
  %2721 = vmatprep.subr.mxu0 %v2605
  %2722 = vmatpush2.msra.mxu0 %v2604
  %2723 = vmatprep.subr.mxu0 %v2601
  %2724 = vmatpush2.msra.mxu0 %v2600
  %2725 = vmatprep.subr.mxu0 %v2597
  %2726 = vmatpush2.msra.mxu0 %v2596
  %2727 = vmatprep.subr.mxu0 %v2593
  %2728 = vmatpush2.msra.mxu0 %v2592
  %2729 = vmatprep.subr.mxu0 %v2589
  %2730 = vmatpush2.msra.mxu0 %v2588
  %2731 = vmatprep.subr.mxu0 %v2585
  %2732 = vmatpush2.msra.mxu0 %v2584
  %2733 = vmatprep.subr.mxu0 %v2581
  %2734 = vmatpush2.msra.mxu0 %v2580
  %2735 = vmatprep.subr.mxu0 %v2577
  %2736 = vmatpush2.msra.mxu0 %v2576
  %2737 = vmatprep.subr.mxu0 %v2573
  %2738 = vmatpush2.msra.mxu0 %v2572
  %2739 = vmatprep.subr.mxu0 %v2569
  %2740 = vmatpush2.msra.mxu0 %v2568
  %2741 = vmatprep.subr.mxu0 %v2565
  %2742 = vmatpush2.msra.mxu0 %v2564
  %2743 = vmatprep.subr.mxu0 %v2561
  %2744 = vmatpush2.msra.mxu0 %v2560
  %2745 = vmatprep.subr.mxu0 %v2557
  %2746 = vmatpush2.msra.mxu0 %v2556
  %2747 = vmatprep.subr.mxu0 %v2553
  %2748 = vmatpush2.msra.mxu0 %v2552
  %2749 = vmatprep.subr.mxu0 %v2549
  %2750 = vmatpush2.msra.mxu0 %v2548
  %2751 = vmatprep.mubr.f32.mxu0 %v2479
  %2752 = vmatmul.mubr.f32.gmra.mxu0 %v2478
  %v2753 = vpop.f32.mrf.mxu0
  %v2754 = vadd.f32 0.0, %v2753
  %v2755 = vpop.f32.mrf.mxu0
  %v2756 = vadd.f32 0.0, %v2755
  %2757 = vmatprep.mubr.f32.mxu0 %v2481
  %2758 = vmatmul.mubr.f32.gmra.mxu0 %v2480
  %v2759 = vpop.f32.mrf.mxu0
  %v2760 = vadd.f32 0.0, %v2759
  %v2761 = vpop.f32.mrf.mxu0
  %v2762 = vadd.f32 0.0, %v2761
  %2763 = vdwg.mxu0
  %v2764 = vld [vmem:[%s2] sm:$0xf]
  %v2766 = vlaneseq
  %v2767 = vshrl.u32 %v2766, 7
  %v2768 = vsub.s32 0, %v2767
  %v2769 = vrot.slane %v2764, %v2768
  %v2770 = vlaneseq
  %v2771 = vshrl.u32 %v2770, 7
  %v2772 = vsub.s32 1, %v2771
  %v2773 = vrot.slane %v2764, %v2772
  %v2774 = vlaneseq
  %v2775 = vshrl.u32 %v2774, 7
  %v2776 = vsub.s32 2, %v2775
  %v2777 = vrot.slane %v2764, %v2776
  %v2778 = vlaneseq
  %v2779 = vshrl.u32 %v2778, 7
  %v2780 = vsub.s32 3, %v2779
  %v2781 = vrot.slane %v2764, %v2780
  %v2786 = vmul.f32 %v2677, %v2769
  %v2787 = vmul.f32 %v2679, %v2773
  %v2788 = vmul.f32 %v2754, %v2777
  %v2789 = vmul.f32 %v2756, %v2781
  %v2790 = vmul.f32 %v2683, %v2769
  %v2791 = vmul.f32 %v2685, %v2773
  %v2792 = vmul.f32 %v2760, %v2777
  %v2793 = vmul.f32 %v2762, %v2781
  %v2794 = vld [vmem:[%s3] sm:$0xf]
  %v2796 = vlaneseq
  %v2797 = vshrl.u32 %v2796, 7
  %v2798 = vsub.s32 0, %v2797
  %v2799 = vrot.slane %v2794, %v2798
  %v2800 = vlaneseq
  %v2801 = vshrl.u32 %v2800, 7
  %v2802 = vsub.s32 1, %v2801
  %v2803 = vrot.slane %v2794, %v2802
  %v2804 = vlaneseq
  %v2805 = vshrl.u32 %v2804, 7
  %v2806 = vsub.s32 2, %v2805
  %v2807 = vrot.slane %v2794, %v2806
  %v2808 = vlaneseq
  %v2809 = vshrl.u32 %v2808, 7
  %v2810 = vsub.s32 3, %v2809
  %v2811 = vrot.slane %v2794, %v2810
  %v2816 = vadd.f32 %v2786, %v2799
  %v2817 = vadd.f32 %v2787, %v2803
  %v2818 = vadd.f32 %v2788, %v2807
  %v2819 = vadd.f32 %v2789, %v2811
  %v2820 = vadd.f32 %v2790, %v2799
  %v2821 = vadd.f32 %v2791, %v2803
  %v2822 = vadd.f32 %v2792, %v2807
  %v2823 = vadd.f32 %v2793, %v2811
  %v2824 = vadd.f32 %v2816, 3.0
  %v2825 = vadd.f32 %v2817, 3.0
  %v2826 = vadd.f32 %v2818, 3.0
  %v2827 = vadd.f32 %v2819, 3.0
  %v2828 = vadd.f32 %v2820, 3.0
  %v2829 = vadd.f32 %v2821, 3.0
  %v2830 = vadd.f32 %v2822, 3.0
  %v2831 = vadd.f32 %v2823, 3.0
  %v2832 = vmax.f32 %v2824, 0.0
  %v2833 = vmax.f32 %v2825, 0.0
  %v2834 = vmax.f32 %v2826, 0.0
  %v2835 = vmax.f32 %v2827, 0.0
  %v2836 = vmax.f32 %v2828, 0.0
  %v2837 = vmax.f32 %v2829, 0.0
  %v2838 = vmax.f32 %v2830, 0.0
  %v2839 = vmax.f32 %v2831, 0.0
  %v2840 = vmin.f32 %v2832, 6.0
  %v2841 = vmin.f32 %v2833, 6.0
  %v2842 = vmin.f32 %v2834, 6.0
  %v2843 = vmin.f32 %v2835, 6.0
  %v2844 = vmin.f32 %v2836, 6.0
  %v2845 = vmin.f32 %v2837, 6.0
  %v2846 = vmin.f32 %v2838, 6.0
  %v2847 = vmin.f32 %v2839, 6.0
  %v2848 = vmul.f32 %v2816, %v2840
  %v2849 = vmul.f32 %v2817, %v2841
  %v2850 = vmul.f32 %v2818, %v2842
  %v2851 = vmul.f32 %v2819, %v2843
  %v2852 = vmul.f32 %v2820, %v2844
  %v2853 = vmul.f32 %v2821, %v2845
  %v2854 = vmul.f32 %v2822, %v2846
  %v2855 = vmul.f32 %v2823, %v2847
  %v2856 = vmul.f32 %v2848, 0.16666667
  %v2857 = vmul.f32 %v2849, 0.16666667
  %v2858 = vmul.f32 %v2850, 0.16666667
  %v2859 = vmul.f32 %v2851, 0.16666667
  %v2860 = vmul.f32 %v2852, 0.16666667
  %v2861 = vmul.f32 %v2853, 0.16666667
  %v2862 = vmul.f32 %v2854, 0.16666667
  %v2863 = vmul.f32 %v2855, 0.16666667
  %v2872 = vrot.slane %v2856, 7
  %v2873 = vrot.slane %v2857, 7
  %v2874 = vrot.slane %v2858, 7
  %v2875 = vrot.slane %v2859, 7
  %v2876 = vrot.slane %v2860, 7
  %v2877 = vsel %vm469, %v2872, %v2876
  %v2878 = vrot.slane %v2861, 7
  %v2879 = vsel %vm469, %v2873, %v2878
  %v2880 = vrot.slane %v2862, 7
  %v2881 = vsel %vm469, %v2874, %v2880
  %v2882 = vrot.slane %v2863, 7
  %v2883 = vsel %vm469, %v2875, %v2882
  %v2892 = vsel %vm469, 0.0, %v2872
  %v2893 = vsel %vm469, 0.0, %v2873
  %v2894 = vsel %vm469, 0.0, %v2874
  %v2895 = vsel %vm469, 0.0, %v2875
  %2900 = vrot.lane.b32.xlu0 %v2892, 32
  %v2901 = vpop.permute.xlu0 %2900
  %2902 = vrot.lane.b32.xlu0 %v2893, 32
  %v2903 = vpop.permute.xlu0 %2902
  %2904 = vrot.lane.b32.xlu0 %v2894, 32
  %v2905 = vpop.permute.xlu0 %2904
  %2906 = vrot.lane.b32.xlu0 %v2895, 32
  %v2907 = vpop.permute.xlu0 %2906
  %2908 = vrot.lane.b32.xlu0 %v2877, 32
  %v2909 = vpop.permute.xlu0 %2908
  %2910 = vrot.lane.b32.xlu0 %v2879, 32
  %v2911 = vpop.permute.xlu0 %2910
  %2912 = vrot.lane.b32.xlu0 %v2881, 32
  %v2913 = vpop.permute.xlu0 %2912
  %2914 = vrot.lane.b32.xlu0 %v2883, 32
  %v2915 = vpop.permute.xlu0 %2914
  %v2916 = vsel %vm514, %v2901, %v2903
  %v2917 = vsel %vm514, %v2903, %v2905
  %v2918 = vsel %vm514, %v2905, %v2907
  %v2919 = vsel %vm514, %v2909, %v2911
  %v2920 = vsel %vm514, %v2911, %v2913
  %v2921 = vsel %vm514, %v2913, %v2915
  %v2930 = vsel %vm514, 0.0, %v2901
  %v2931 = vsel %vm514, 0.0, %v2909
  %v2932 = vmul.f32 %v2930, %v534
  %v2933 = vmul.f32 %v2916, %v538
  %v2934 = vmul.f32 %v2917, %v542
  %v2935 = vmul.f32 %v2918, %v546
  %v2936 = vmul.f32 %v2931, %v534
  %v2937 = vmul.f32 %v2919, %v538
  %v2938 = vmul.f32 %v2920, %v542
  %v2939 = vmul.f32 %v2921, %v546
  %v2940 = vmul.f32 %v2892, %v558
  %v2941 = vmul.f32 %v2893, %v562
  %v2942 = vmul.f32 %v2894, %v566
  %v2943 = vmul.f32 %v2895, %v570
  %v2944 = vmul.f32 %v2877, %v558
  %v2945 = vmul.f32 %v2879, %v562
  %v2946 = vmul.f32 %v2881, %v566
  %v2947 = vmul.f32 %v2883, %v570
  %v2948 = vadd.f32 %v2932, %v2940
  %v2949 = vadd.f32 %v2933, %v2941
  %v2950 = vadd.f32 %v2934, %v2942
  %v2951 = vadd.f32 %v2935, %v2943
  %v2952 = vadd.f32 %v2936, %v2944
  %v2953 = vadd.f32 %v2937, %v2945
  %v2954 = vadd.f32 %v2938, %v2946
  %v2955 = vadd.f32 %v2939, %v2947
  %2956 = vrot.lane.b32.xlu0 %v2892, 96
  %v2957 = vpop.permute.xlu0 %2956
  %2958 = vrot.lane.b32.xlu0 %v2893, 96
  %v2959 = vpop.permute.xlu0 %2958
  %2960 = vrot.lane.b32.xlu0 %v2894, 96
  %v2961 = vpop.permute.xlu0 %2960
  %2962 = vrot.lane.b32.xlu0 %v2895, 96
  %v2963 = vpop.permute.xlu0 %2962
  %2964 = vrot.lane.b32.xlu0 %v2877, 96
  %v2965 = vpop.permute.xlu0 %2964
  %2966 = vrot.lane.b32.xlu0 %v2879, 96
  %v2967 = vpop.permute.xlu0 %2966
  %2968 = vrot.lane.b32.xlu0 %v2881, 96
  %v2969 = vpop.permute.xlu0 %2968
  %2970 = vrot.lane.b32.xlu0 %v2883, 96
  %v2971 = vpop.permute.xlu0 %2970
  %v2972 = vsel %vm603, %v2957, %v2959
  %v2973 = vsel %vm603, %v2959, %v2961
  %v2974 = vsel %vm603, %v2961, %v2963
  %v2975 = vsel %vm603, %v2965, %v2967
  %v2976 = vsel %vm603, %v2967, %v2969
  %v2977 = vsel %vm603, %v2969, %v2971
  %v2986 = vsel %vm603, %v2963, 0.0
  %v2987 = vsel %vm603, %v2971, 0.0
  %v2988 = vmul.f32 %v2972, %v623
  %v2989 = vmul.f32 %v2973, %v627
  %v2990 = vmul.f32 %v2974, %v631
  %v2991 = vmul.f32 %v2986, %v635
  %v2992 = vmul.f32 %v2975, %v623
  %v2993 = vmul.f32 %v2976, %v627
  %v2994 = vmul.f32 %v2977, %v631
  %v2995 = vmul.f32 %v2987, %v635
  %v2996 = vadd.f32 %v2948, %v2988
  %v2997 = vadd.f32 %v2949, %v2989
  %v2998 = vadd.f32 %v2950, %v2990
  %v2999 = vadd.f32 %v2951, %v2991
  %v3000 = vadd.f32 %v2952, %v2992
  %v3001 = vadd.f32 %v2953, %v2993
  %v3002 = vadd.f32 %v2954, %v2994
  %v3003 = vadd.f32 %v2955, %v2995
  %3004 = vrot.lane.b32.xlu0 %v2856, 32
  %v3005 = vpop.permute.xlu0 %3004
  %3006 = vrot.lane.b32.xlu0 %v2857, 32
  %v3007 = vpop.permute.xlu0 %3006
  %3008 = vrot.lane.b32.xlu0 %v2858, 32
  %v3009 = vpop.permute.xlu0 %3008
  %3010 = vrot.lane.b32.xlu0 %v2859, 32
  %v3011 = vpop.permute.xlu0 %3010
  %3012 = vrot.lane.b32.xlu0 %v2860, 32
  %v3013 = vpop.permute.xlu0 %3012
  %3014 = vrot.lane.b32.xlu0 %v2861, 32
  %v3015 = vpop.permute.xlu0 %3014
  %3016 = vrot.lane.b32.xlu0 %v2862, 32
  %v3017 = vpop.permute.xlu0 %3016
  %3018 = vrot.lane.b32.xlu0 %v2863, 32
  %v3019 = vpop.permute.xlu0 %3018
  %v3020 = vsel %vm514, %v3005, %v3007
  %v3021 = vsel %vm514, %v3007, %v3009
  %v3022 = vsel %vm514, %v3009, %v3011
  %v3023 = vsel %vm514, %v3013, %v3015
  %v3024 = vsel %vm514, %v3015, %v3017
  %v3025 = vsel %vm514, %v3017, %v3019
  %v3034 = vsel %vm514, 0.0, %v3005
  %v3035 = vsel %vm514, 0.0, %v3013
  %v3036 = vmul.f32 %v3034, %v687
  %v3037 = vmul.f32 %v3020, %v691
  %v3038 = vmul.f32 %v3021, %v695
  %v3039 = vmul.f32 %v3022, %v699
  %v3040 = vmul.f32 %v3035, %v687
  %v3041 = vmul.f32 %v3023, %v691
  %v3042 = vmul.f32 %v3024, %v695
  %v3043 = vmul.f32 %v3025, %v699
  %v3044 = vadd.f32 %v2996, %v3036
  %v3045 = vadd.f32 %v2997, %v3037
  %v3046 = vadd.f32 %v2998, %v3038
  %v3047 = vadd.f32 %v2999, %v3039
  %v3048 = vadd.f32 %v3000, %v3040
  %v3049 = vadd.f32 %v3001, %v3041
  %v3050 = vadd.f32 %v3002, %v3042
  %v3051 = vadd.f32 %v3003, %v3043
  %v3052 = vmul.f32 %v2856, %v719
  %v3053 = vmul.f32 %v2857, %v723
  %v3054 = vmul.f32 %v2858, %v727
  %v3055 = vmul.f32 %v2859, %v731
  %v3056 = vmul.f32 %v2860, %v719
  %v3057 = vmul.f32 %v2861, %v723
  %v3058 = vmul.f32 %v2862, %v727
  %v3059 = vmul.f32 %v2863, %v731
  %v3060 = vadd.f32 %v3044, %v3052
  %v3061 = vadd.f32 %v3045, %v3053
  %v3062 = vadd.f32 %v3046, %v3054
  %v3063 = vadd.f32 %v3047, %v3055
  %v3064 = vadd.f32 %v3048, %v3056
  %v3065 = vadd.f32 %v3049, %v3057
  %v3066 = vadd.f32 %v3050, %v3058
  %v3067 = vadd.f32 %v3051, %v3059
  %3068 = vrot.lane.b32.xlu0 %v2856, 96
  %v3069 = vpop.permute.xlu0 %3068
  %3070 = vrot.lane.b32.xlu0 %v2857, 96
  %v3071 = vpop.permute.xlu0 %3070
  %3072 = vrot.lane.b32.xlu0 %v2858, 96
  %v3073 = vpop.permute.xlu0 %3072
  %3074 = vrot.lane.b32.xlu0 %v2859, 96
  %v3075 = vpop.permute.xlu0 %3074
  %3076 = vrot.lane.b32.xlu0 %v2860, 96
  %v3077 = vpop.permute.xlu0 %3076
  %3078 = vrot.lane.b32.xlu0 %v2861, 96
  %v3079 = vpop.permute.xlu0 %3078
  %3080 = vrot.lane.b32.xlu0 %v2862, 96
  %v3081 = vpop.permute.xlu0 %3080
  %3082 = vrot.lane.b32.xlu0 %v2863, 96
  %v3083 = vpop.permute.xlu0 %3082
  %v3084 = vsel %vm603, %v3069, %v3071
  %v3085 = vsel %vm603, %v3071, %v3073
  %v3086 = vsel %vm603, %v3073, %v3075
  %v3087 = vsel %vm603, %v3077, %v3079
  %v3088 = vsel %vm603, %v3079, %v3081
  %v3089 = vsel %vm603, %v3081, %v3083
  %v3098 = vsel %vm603, %v3075, 0.0
  %v3099 = vsel %vm603, %v3083, 0.0
  %v3100 = vmul.f32 %v3084, %v783
  %v3101 = vmul.f32 %v3085, %v787
  %v3102 = vmul.f32 %v3086, %v791
  %v3103 = vmul.f32 %v3098, %v795
  %v3104 = vmul.f32 %v3087, %v783
  %v3105 = vmul.f32 %v3088, %v787
  %v3106 = vmul.f32 %v3089, %v791
  %v3107 = vmul.f32 %v3099, %v795
  %v3108 = vadd.f32 %v3060, %v3100
  %v3109 = vadd.f32 %v3061, %v3101
  %v3110 = vadd.f32 %v3062, %v3102
  %v3111 = vadd.f32 %v3063, %v3103
  %v3112 = vadd.f32 %v3064, %v3104
  %v3113 = vadd.f32 %v3065, %v3105
  %v3114 = vadd.f32 %v3066, %v3106
  %v3115 = vadd.f32 %v3067, %v3107
  %v3116 = vrot.slane %v2856, 1
  %v3117 = vrot.slane %v2860, 1
  %v3118 = vsel %vm812, %v3116, %v3117
  %v3119 = vrot.slane %v2857, 1
  %v3120 = vrot.slane %v2861, 1
  %v3121 = vsel %vm812, %v3119, %v3120
  %v3122 = vrot.slane %v2858, 1
  %v3123 = vrot.slane %v2862, 1
  %v3124 = vsel %vm812, %v3122, %v3123
  %v3125 = vrot.slane %v2859, 1
  %v3126 = vrot.slane %v2863, 1
  %v3127 = vsel %vm812, %v3125, %v3126
  %v3136 = vsel %vm812, %v3117, 0.0
  %v3137 = vsel %vm812, %v3120, 0.0
  %v3138 = vsel %vm812, %v3123, 0.0
  %v3139 = vsel %vm812, %v3126, 0.0
  %3144 = vrot.lane.b32.xlu0 %v3118, 32
  %v3145 = vpop.permute.xlu0 %3144
  %3146 = vrot.lane.b32.xlu0 %v3121, 32
  %v3147 = vpop.permute.xlu0 %3146
  %3148 = vrot.lane.b32.xlu0 %v3124, 32
  %v3149 = vpop.permute.xlu0 %3148
  %3150 = vrot.lane.b32.xlu0 %v3127, 32
  %v3151 = vpop.permute.xlu0 %3150
  %3152 = vrot.lane.b32.xlu0 %v3136, 32
  %v3153 = vpop.permute.xlu0 %3152
  %3154 = vrot.lane.b32.xlu0 %v3137, 32
  %v3155 = vpop.permute.xlu0 %3154
  %3156 = vrot.lane.b32.xlu0 %v3138, 32
  %v3157 = vpop.permute.xlu0 %3156
  %3158 = vrot.lane.b32.xlu0 %v3139, 32
  %v3159 = vpop.permute.xlu0 %3158
  %v3160 = vsel %vm514, %v3145, %v3147
  %v3161 = vsel %vm514, %v3147, %v3149
  %v3162 = vsel %vm514, %v3149, %v3151
  %v3163 = vsel %vm514, %v3153, %v3155
  %v3164 = vsel %vm514, %v3155, %v3157
  %v3165 = vsel %vm514, %v3157, %v3159
  %v3174 = vsel %vm514, 0.0, %v3145
  %v3175 = vsel %vm514, 0.0, %v3153
  %v3176 = vmul.f32 %v3174, %v876
  %v3177 = vmul.f32 %v3160, %v880
  %v3178 = vmul.f32 %v3161, %v884
  %v3179 = vmul.f32 %v3162, %v888
  %v3180 = vmul.f32 %v3175, %v876
  %v3181 = vmul.f32 %v3163, %v880
  %v3182 = vmul.f32 %v3164, %v884
  %v3183 = vmul.f32 %v3165, %v888
  %v3184 = vadd.f32 %v3108, %v3176
  %v3185 = vadd.f32 %v3109, %v3177
  %v3186 = vadd.f32 %v3110, %v3178
  %v3187 = vadd.f32 %v3111, %v3179
  %v3188 = vadd.f32 %v3112, %v3180
  %v3189 = vadd.f32 %v3113, %v3181
  %v3190 = vadd.f32 %v3114, %v3182
  %v3191 = vadd.f32 %v3115, %v3183
  %v3192 = vmul.f32 %v3118, %v908
  %v3193 = vmul.f32 %v3121, %v912
  %v3194 = vmul.f32 %v3124, %v916
  %v3195 = vmul.f32 %v3127, %v920
  %v3196 = vmul.f32 %v3136, %v908
  %v3197 = vmul.f32 %v3137, %v912
  %v3198 = vmul.f32 %v3138, %v916
  %v3199 = vmul.f32 %v3139, %v920
  %v3200 = vadd.f32 %v3184, %v3192
  %v3201 = vadd.f32 %v3185, %v3193
  %v3202 = vadd.f32 %v3186, %v3194
  %v3203 = vadd.f32 %v3187, %v3195
  %v3204 = vadd.f32 %v3188, %v3196
  %v3205 = vadd.f32 %v3189, %v3197
  %v3206 = vadd.f32 %v3190, %v3198
  %v3207 = vadd.f32 %v3191, %v3199
  %3208 = vrot.lane.b32.xlu0 %v3118, 96
  %v3209 = vpop.permute.xlu0 %3208
  %3210 = vrot.lane.b32.xlu0 %v3121, 96
  %v3211 = vpop.permute.xlu0 %3210
  %3212 = vrot.lane.b32.xlu0 %v3124, 96
  %v3213 = vpop.permute.xlu0 %3212
  %3214 = vrot.lane.b32.xlu0 %v3127, 96
  %v3215 = vpop.permute.xlu0 %3214
  %3216 = vrot.lane.b32.xlu0 %v3136, 96
  %v3217 = vpop.permute.xlu0 %3216
  %3218 = vrot.lane.b32.xlu0 %v3137, 96
  %v3219 = vpop.permute.xlu0 %3218
  %3220 = vrot.lane.b32.xlu0 %v3138, 96
  %v3221 = vpop.permute.xlu0 %3220
  %3222 = vrot.lane.b32.xlu0 %v3139, 96
  %v3223 = vpop.permute.xlu0 %3222
  %v3224 = vsel %vm603, %v3209, %v3211
  %v3225 = vsel %vm603, %v3211, %v3213
  %v3226 = vsel %vm603, %v3213, %v3215
  %v3227 = vsel %vm603, %v3217, %v3219
  %v3228 = vsel %vm603, %v3219, %v3221
  %v3229 = vsel %vm603, %v3221, %v3223
  %v3238 = vsel %vm603, %v3215, 0.0
  %v3239 = vsel %vm603, %v3223, 0.0
  %v3240 = vmul.f32 %v3224, %v972
  %v3241 = vmul.f32 %v3225, %v976
  %v3242 = vmul.f32 %v3226, %v980
  %v3243 = vmul.f32 %v3238, %v984
  %v3244 = vmul.f32 %v3227, %v972
  %v3245 = vmul.f32 %v3228, %v976
  %v3246 = vmul.f32 %v3229, %v980
  %v3247 = vmul.f32 %v3239, %v984
  %v3248 = vadd.f32 %v3200, %v3240
  %v3249 = vadd.f32 %v3201, %v3241
  %v3250 = vadd.f32 %v3202, %v3242
  %v3251 = vadd.f32 %v3203, %v3243
  %v3252 = vadd.f32 %v3204, %v3244
  %v3253 = vadd.f32 %v3205, %v3245
  %v3254 = vadd.f32 %v3206, %v3246
  %v3255 = vadd.f32 %v3207, %v3247
  %v3256 = vld [vmem:[%s5] sm:$0xf]
  %v3258 = vlaneseq
  %v3259 = vshrl.u32 %v3258, 7
  %v3260 = vsub.s32 0, %v3259
  %v3261 = vrot.slane %v3256, %v3260
  %v3262 = vlaneseq
  %v3263 = vshrl.u32 %v3262, 7
  %v3264 = vsub.s32 1, %v3263
  %v3265 = vrot.slane %v3256, %v3264
  %v3266 = vlaneseq
  %v3267 = vshrl.u32 %v3266, 7
  %v3268 = vsub.s32 2, %v3267
  %v3269 = vrot.slane %v3256, %v3268
  %v3270 = vlaneseq
  %v3271 = vshrl.u32 %v3270, 7
  %v3272 = vsub.s32 3, %v3271
  %v3273 = vrot.slane %v3256, %v3272
  %v3278 = vmul.f32 %v3248, %v3261
  %v3279 = vmul.f32 %v3249, %v3265
  %v3280 = vmul.f32 %v3250, %v3269
  %v3281 = vmul.f32 %v3251, %v3273
  %v3282 = vmul.f32 %v3252, %v3261
  %v3283 = vmul.f32 %v3253, %v3265
  %v3284 = vmul.f32 %v3254, %v3269
  %v3285 = vmul.f32 %v3255, %v3273
  %v3286 = vld [vmem:[%s6] sm:$0xf]
  %v3288 = vlaneseq
  %v3289 = vshrl.u32 %v3288, 7
  %v3290 = vsub.s32 0, %v3289
  %v3291 = vrot.slane %v3286, %v3290
  %v3292 = vlaneseq
  %v3293 = vshrl.u32 %v3292, 7
  %v3294 = vsub.s32 1, %v3293
  %v3295 = vrot.slane %v3286, %v3294
  %v3296 = vlaneseq
  %v3297 = vshrl.u32 %v3296, 7
  %v3298 = vsub.s32 2, %v3297
  %v3299 = vrot.slane %v3286, %v3298
  %v3300 = vlaneseq
  %v3301 = vshrl.u32 %v3300, 7
  %v3302 = vsub.s32 3, %v3301
  %v3303 = vrot.slane %v3286, %v3302
  %v3308 = vadd.f32 %v3278, %v3291
  %v3309 = vadd.f32 %v3279, %v3295
  %v3310 = vadd.f32 %v3280, %v3299
  %v3311 = vadd.f32 %v3281, %v3303
  %v3312 = vadd.f32 %v3282, %v3291
  %v3313 = vadd.f32 %v3283, %v3295
  %v3314 = vadd.f32 %v3284, %v3299
  %v3315 = vadd.f32 %v3285, %v3303
  %v3316 = vadd.f32 %v3308, 3.0
  %v3317 = vadd.f32 %v3309, 3.0
  %v3318 = vadd.f32 %v3310, 3.0
  %v3319 = vadd.f32 %v3311, 3.0
  %v3320 = vadd.f32 %v3312, 3.0
  %v3321 = vadd.f32 %v3313, 3.0
  %v3322 = vadd.f32 %v3314, 3.0
  %v3323 = vadd.f32 %v3315, 3.0
  %v3324 = vmax.f32 %v3316, 0.0
  %v3325 = vmax.f32 %v3317, 0.0
  %v3326 = vmax.f32 %v3318, 0.0
  %v3327 = vmax.f32 %v3319, 0.0
  %v3328 = vmax.f32 %v3320, 0.0
  %v3329 = vmax.f32 %v3321, 0.0
  %v3330 = vmax.f32 %v3322, 0.0
  %v3331 = vmax.f32 %v3323, 0.0
  %v3332 = vmin.f32 %v3324, 6.0
  %v3333 = vmin.f32 %v3325, 6.0
  %v3334 = vmin.f32 %v3326, 6.0
  %v3335 = vmin.f32 %v3327, 6.0
  %v3336 = vmin.f32 %v3328, 6.0
  %v3337 = vmin.f32 %v3329, 6.0
  %v3338 = vmin.f32 %v3330, 6.0
  %v3339 = vmin.f32 %v3331, 6.0
  %v3340 = vmul.f32 %v3308, %v3332
  %v3341 = vmul.f32 %v3309, %v3333
  %v3342 = vmul.f32 %v3310, %v3334
  %v3343 = vmul.f32 %v3311, %v3335
  %v3344 = vmul.f32 %v3312, %v3336
  %v3345 = vmul.f32 %v3313, %v3337
  %v3346 = vmul.f32 %v3314, %v3338
  %v3347 = vmul.f32 %v3315, %v3339
  %v3348 = vmul.f32 %v3340, 0.16666667
  %v3349 = vmul.f32 %v3341, 0.16666667
  %v3350 = vmul.f32 %v3342, 0.16666667
  %v3351 = vmul.f32 %v3343, 0.16666667
  %v3352 = vmul.f32 %v3344, 0.16666667
  %v3353 = vmul.f32 %v3345, 0.16666667
  %v3354 = vmul.f32 %v3346, 0.16666667
  %v3355 = vmul.f32 %v3347, 0.16666667
  %v3356 = vadd.f32 %v3348, %v3352
  %v3357 = vrot.slane %v3356, 4
  %v3358 = vadd.f32 %v3356, %v3357
  %v3359 = vrot.slane %v3358, 2
  %v3360 = vadd.f32 %v3358, %v3359
  %v3361 = vrot.slane %v3360, 1
  %v3362 = vadd.f32 %v3360, %v3361
  %v3363 = vadd.f32 %v3349, %v3353
  %v3364 = vrot.slane %v3363, 4
  %v3365 = vadd.f32 %v3363, %v3364
  %v3366 = vrot.slane %v3365, 2
  %v3367 = vadd.f32 %v3365, %v3366
  %v3368 = vrot.slane %v3367, 1
  %v3369 = vadd.f32 %v3367, %v3368
  %v3370 = vadd.f32 %v3350, %v3354
  %v3371 = vrot.slane %v3370, 4
  %v3372 = vadd.f32 %v3370, %v3371
  %v3373 = vrot.slane %v3372, 2
  %v3374 = vadd.f32 %v3372, %v3373
  %v3375 = vrot.slane %v3374, 1
  %v3376 = vadd.f32 %v3374, %v3375
  %v3377 = vadd.f32 %v3351, %v3355
  %v3378 = vrot.slane %v3377, 4
  %v3379 = vadd.f32 %v3377, %v3378
  %v3380 = vrot.slane %v3379, 2
  %v3381 = vadd.f32 %v3379, %v3380
  %v3382 = vrot.slane %v3381, 1
  %v3383 = vadd.f32 %v3381, %v3382
  %v3384 = vld [vmem:[%s11] sm:$0xff]
  %v3385 = vld [vmem:[%s11 + $0x8] sm:$0xff]
  %v3386 = vld [vmem:[%s11 + $0x10] sm:$0xff]
  %v3387 = vld [vmem:[%s11 + $0x18] sm:$0xff]
  %v3388 = vld [vmem:[%s11 + $0x20] sm:$0xff]
  %v3389 = vld [vmem:[%s11 + $0x28] sm:$0xff]
  %v3390 = vld [vmem:[%s11 + $0x30] sm:$0xff]
  %v3391 = vld [vmem:[%s11 + $0x38] sm:$0xff]
  %v3392 = vld [vmem:[%s11 + $0x40] sm:$0xff]
  %v3393 = vld [vmem:[%s11 + $0x48] sm:$0xff]
  %v3394 = vld [vmem:[%s11 + $0x50] sm:$0xff]
  %v3395 = vld [vmem:[%s11 + $0x58] sm:$0xff]
  %v3396 = vld [vmem:[%s11 + $0x60] sm:$0xff]
  %v3397 = vld [vmem:[%s11 + $0x68] sm:$0xff]
  %v3398 = vld [vmem:[%s11 + $0x70] sm:$0xff]
  %v3399 = vld [vmem:[%s11 + $0x78] sm:$0xff]
  %v3400 = vld [vmem:[%s11 + $0x80] sm:$0xff]
  %v3401 = vld [vmem:[%s11 + $0x88] sm:$0xff]
  %v3402 = vld [vmem:[%s11 + $0x90] sm:$0xff]
  %v3403 = vld [vmem:[%s11 + $0x98] sm:$0xff]
  %v3404 = vld [vmem:[%s11 + $0xa0] sm:$0xff]
  %v3405 = vld [vmem:[%s11 + $0xa8] sm:$0xff]
  %v3406 = vld [vmem:[%s11 + $0xb0] sm:$0xff]
  %v3407 = vld [vmem:[%s11 + $0xb8] sm:$0xff]
  %v3408 = vld [vmem:[%s11 + $0xc0] sm:$0xff]
  %v3409 = vld [vmem:[%s11 + $0xc8] sm:$0xff]
  %v3410 = vld [vmem:[%s11 + $0xd0] sm:$0xff]
  %v3411 = vld [vmem:[%s11 + $0xd8] sm:$0xff]
  %v3412 = vld [vmem:[%s11 + $0xe0] sm:$0xff]
  %v3413 = vld [vmem:[%s11 + $0xe8] sm:$0xff]
  %v3414 = vld [vmem:[%s11 + $0xf0] sm:$0xff]
  %v3415 = vld [vmem:[%s11 + $0xf8] sm:$0xff]
  %v3416 = vld [vmem:[%s11 + $0x100] sm:$0xff]
  %v3417 = vld [vmem:[%s11 + $0x108] sm:$0xff]
  %v3418 = vld [vmem:[%s11 + $0x110] sm:$0xff]
  %v3419 = vld [vmem:[%s11 + $0x118] sm:$0xff]
  %v3420 = vld [vmem:[%s11 + $0x120] sm:$0xff]
  %v3421 = vld [vmem:[%s11 + $0x128] sm:$0xff]
  %v3422 = vld [vmem:[%s11 + $0x130] sm:$0xff]
  %v3423 = vld [vmem:[%s11 + $0x138] sm:$0xff]
  %v3424 = vld [vmem:[%s11 + $0x140] sm:$0xff]
  %v3425 = vld [vmem:[%s11 + $0x148] sm:$0xff]
  %v3426 = vld [vmem:[%s11 + $0x150] sm:$0xff]
  %v3427 = vld [vmem:[%s11 + $0x158] sm:$0xff]
  %v3428 = vld [vmem:[%s11 + $0x160] sm:$0xff]
  %v3429 = vld [vmem:[%s11 + $0x168] sm:$0xff]
  %v3430 = vld [vmem:[%s11 + $0x170] sm:$0xff]
  %v3431 = vld [vmem:[%s11 + $0x178] sm:$0xff]
  %v3432 = vld [vmem:[%s11 + $0x180] sm:$0xff]
  %v3433 = vld [vmem:[%s11 + $0x188] sm:$0xff]
  %v3434 = vld [vmem:[%s11 + $0x190] sm:$0xff]
  %v3435 = vld [vmem:[%s11 + $0x198] sm:$0xff]
  %v3436 = vld [vmem:[%s11 + $0x1a0] sm:$0xff]
  %v3437 = vld [vmem:[%s11 + $0x1a8] sm:$0xff]
  %v3438 = vld [vmem:[%s11 + $0x1b0] sm:$0xff]
  %v3439 = vld [vmem:[%s11 + $0x1b8] sm:$0xff]
  %v3440 = vld [vmem:[%s11 + $0x1c0] sm:$0xff]
  %v3441 = vld [vmem:[%s11 + $0x1c8] sm:$0xff]
  %v3442 = vld [vmem:[%s11 + $0x1d0] sm:$0xff]
  %v3443 = vld [vmem:[%s11 + $0x1d8] sm:$0xff]
  %v3444 = vld [vmem:[%s11 + $0x1e0] sm:$0xff]
  %v3445 = vld [vmem:[%s11 + $0x1e8] sm:$0xff]
  %v3446 = vld [vmem:[%s11 + $0x1f0] sm:$0xff]
  %v3447 = vld [vmem:[%s11 + $0x1f8] sm:$0xff]
  %3448 = vmatprep.subr.mxu0 0.0
  %3449 = vmatpush1.msra.mxu0 %v3399
  %3450 = vmatprep.subr.mxu0 0.0
  %3451 = vmatpush1.msra.mxu0 %v3398
  %3452 = vmatprep.subr.mxu0 0.0
  %3453 = vmatpush1.msra.mxu0 %v3397
  %3454 = vmatprep.subr.mxu0 0.0
  %3455 = vmatpush1.msra.mxu0 %v3396
  %3456 = vmatprep.subr.mxu0 0.0
  %3457 = vmatpush1.msra.mxu0 %v3395
  %3458 = vmatprep.subr.mxu0 0.0
  %3459 = vmatpush1.msra.mxu0 %v3394
  %3460 = vmatprep.subr.mxu0 0.0
  %3461 = vmatpush1.msra.mxu0 %v3393
  %3462 = vmatprep.subr.mxu0 0.0
  %3463 = vmatpush1.msra.mxu0 %v3392
  %3464 = vmatprep.subr.mxu0 0.0
  %3465 = vmatpush1.msra.mxu0 %v3391
  %3466 = vmatprep.subr.mxu0 0.0
  %3467 = vmatpush1.msra.mxu0 %v3390
  %3468 = vmatprep.subr.mxu0 0.0
  %3469 = vmatpush1.msra.mxu0 %v3389
  %3470 = vmatprep.subr.mxu0 0.0
  %3471 = vmatpush1.msra.mxu0 %v3388
  %3472 = vmatprep.subr.mxu0 0.0
  %3473 = vmatpush1.msra.mxu0 %v3387
  %3474 = vmatprep.subr.mxu0 0.0
  %3475 = vmatpush1.msra.mxu0 %v3386
  %3476 = vmatprep.subr.mxu0 0.0
  %3477 = vmatpush1.msra.mxu0 %v3385
  %3478 = vmatprep.subr.mxu0 0.0
  %3479 = vmatpush1.msra.mxu0 %v3384
  %3480 = vmatprep.subr.mxu0 0.0
  %3481 = vmatpush2.msra.mxu0 %v3415
  %3482 = vmatprep.subr.mxu0 0.0
  %3483 = vmatpush2.msra.mxu0 %v3414
  %3484 = vmatprep.subr.mxu0 0.0
  %3485 = vmatpush2.msra.mxu0 %v3413
  %3486 = vmatprep.subr.mxu0 0.0
  %3487 = vmatpush2.msra.mxu0 %v3412
  %3488 = vmatprep.subr.mxu0 0.0
  %3489 = vmatpush2.msra.mxu0 %v3411
  %3490 = vmatprep.subr.mxu0 0.0
  %3491 = vmatpush2.msra.mxu0 %v3410
  %3492 = vmatprep.subr.mxu0 0.0
  %3493 = vmatpush2.msra.mxu0 %v3409
  %3494 = vmatprep.subr.mxu0 0.0
  %3495 = vmatpush2.msra.mxu0 %v3408
  %3496 = vmatprep.subr.mxu0 0.0
  %3497 = vmatpush2.msra.mxu0 %v3407
  %3498 = vmatprep.subr.mxu0 0.0
  %3499 = vmatpush2.msra.mxu0 %v3406
  %3500 = vmatprep.subr.mxu0 0.0
  %3501 = vmatpush2.msra.mxu0 %v3405
  %3502 = vmatprep.subr.mxu0 0.0
  %3503 = vmatpush2.msra.mxu0 %v3404
  %3504 = vmatprep.subr.mxu0 0.0
  %3505 = vmatpush2.msra.mxu0 %v3403
  %3506 = vmatprep.subr.mxu0 0.0
  %3507 = vmatpush2.msra.mxu0 %v3402
  %3508 = vmatprep.subr.mxu0 0.0
  %3509 = vmatpush2.msra.mxu0 %v3401
  %3510 = vmatprep.subr.mxu0 0.0
  %3511 = vmatpush2.msra.mxu0 %v3400
  %3512 = vmatprep.mubr.f32.mxu0 %v3369
  %3513 = vmatmul.mubr.f32.gmra.mxu0 %v3362
  %v3514 = vpop.f32.mrf.mxu0
  %v3515 = vadd.f32 0.0, %v3514
  %v3516 = vpop.f32.mrf.mxu0
  %3517 = vdwg.mxu0
  %3518 = vmatprep.subr.mxu0 0.0
  %3519 = vmatpush1.msra.mxu0 %v3431
  %3520 = vmatprep.subr.mxu0 0.0
  %3521 = vmatpush1.msra.mxu0 %v3430
  %3522 = vmatprep.subr.mxu0 0.0
  %3523 = vmatpush1.msra.mxu0 %v3429
  %3524 = vmatprep.subr.mxu0 0.0
  %3525 = vmatpush1.msra.mxu0 %v3428
  %3526 = vmatprep.subr.mxu0 0.0
  %3527 = vmatpush1.msra.mxu0 %v3427
  %3528 = vmatprep.subr.mxu0 0.0
  %3529 = vmatpush1.msra.mxu0 %v3426
  %3530 = vmatprep.subr.mxu0 0.0
  %3531 = vmatpush1.msra.mxu0 %v3425
  %3532 = vmatprep.subr.mxu0 0.0
  %3533 = vmatpush1.msra.mxu0 %v3424
  %3534 = vmatprep.subr.mxu0 0.0
  %3535 = vmatpush1.msra.mxu0 %v3423
  %3536 = vmatprep.subr.mxu0 0.0
  %3537 = vmatpush1.msra.mxu0 %v3422
  %3538 = vmatprep.subr.mxu0 0.0
  %3539 = vmatpush1.msra.mxu0 %v3421
  %3540 = vmatprep.subr.mxu0 0.0
  %3541 = vmatpush1.msra.mxu0 %v3420
  %3542 = vmatprep.subr.mxu0 0.0
  %3543 = vmatpush1.msra.mxu0 %v3419
  %3544 = vmatprep.subr.mxu0 0.0
  %3545 = vmatpush1.msra.mxu0 %v3418
  %3546 = vmatprep.subr.mxu0 0.0
  %3547 = vmatpush1.msra.mxu0 %v3417
  %3548 = vmatprep.subr.mxu0 0.0
  %3549 = vmatpush1.msra.mxu0 %v3416
  %3550 = vmatprep.subr.mxu0 0.0
  %3551 = vmatpush2.msra.mxu0 %v3447
  %3552 = vmatprep.subr.mxu0 0.0
  %3553 = vmatpush2.msra.mxu0 %v3446
  %3554 = vmatprep.subr.mxu0 0.0
  %3555 = vmatpush2.msra.mxu0 %v3445
  %3556 = vmatprep.subr.mxu0 0.0
  %3557 = vmatpush2.msra.mxu0 %v3444
  %3558 = vmatprep.subr.mxu0 0.0
  %3559 = vmatpush2.msra.mxu0 %v3443
  %3560 = vmatprep.subr.mxu0 0.0
  %3561 = vmatpush2.msra.mxu0 %v3442
  %3562 = vmatprep.subr.mxu0 0.0
  %3563 = vmatpush2.msra.mxu0 %v3441
  %3564 = vmatprep.subr.mxu0 0.0
  %3565 = vmatpush2.msra.mxu0 %v3440
  %3566 = vmatprep.subr.mxu0 0.0
  %3567 = vmatpush2.msra.mxu0 %v3439
  %3568 = vmatprep.subr.mxu0 0.0
  %3569 = vmatpush2.msra.mxu0 %v3438
  %3570 = vmatprep.subr.mxu0 0.0
  %3571 = vmatpush2.msra.mxu0 %v3437
  %3572 = vmatprep.subr.mxu0 0.0
  %3573 = vmatpush2.msra.mxu0 %v3436
  %3574 = vmatprep.subr.mxu0 0.0
  %3575 = vmatpush2.msra.mxu0 %v3435
  %3576 = vmatprep.subr.mxu0 0.0
  %3577 = vmatpush2.msra.mxu0 %v3434
  %3578 = vmatprep.subr.mxu0 0.0
  %3579 = vmatpush2.msra.mxu0 %v3433
  %3580 = vmatprep.subr.mxu0 0.0
  %3581 = vmatpush2.msra.mxu0 %v3432
  %3582 = vmatprep.mubr.f32.mxu0 %v3383
  %3583 = vmatmul.mubr.f32.gmra.mxu0 %v3376
  %v3584 = vpop.f32.mrf.mxu0
  %v3585 = vadd.f32 %v3515, %v3584
  %v3586 = vpop.f32.mrf.mxu0
  %3587 = vdwg.mxu0
  %v3588 = vmul.f32 %v3585, 0.00390625
  %v3589 = vld [vmem:[%s7] sm:$0xff]
  %v3590 = vld [vmem:[%s7 + $0x8] sm:$0xff]
  %v3591 = vld [vmem:[%s7 + $0x10] sm:$0xff]
  %v3592 = vld [vmem:[%s7 + $0x18] sm:$0xff]
  %v3593 = vld [vmem:[%s8] sm:$0x1]
  %v3595 = vsel %vm514, %v3588, 0
  %3597 = vmatprep.subr.mxu0 0.0
  %3598 = vmatpush1.msra.mxu0 0.0
  %3599 = vmatprep.subr.mxu0 0.0
  %3600 = vmatpush1.msra.mxu0 0.0
  %3601 = vmatprep.subr.mxu0 0.0
  %3602 = vmatpush1.msra.mxu0 0.0
  %3603 = vmatprep.subr.mxu0 0.0
  %3604 = vmatpush1.msra.mxu0 0.0
  %3605 = vmatprep.subr.mxu0 0.0
  %3606 = vmatpush1.msra.mxu0 0.0
  %3607 = vmatprep.subr.mxu0 0.0
  %3608 = vmatpush1.msra.mxu0 0.0
  %3609 = vmatprep.subr.mxu0 0.0
  %3610 = vmatpush1.msra.mxu0 0.0
  %3611 = vmatprep.subr.mxu0 0.0
  %3612 = vmatpush1.msra.mxu0 0.0
  %3613 = vmatprep.subr.mxu0 0.0
  %3614 = vmatpush1.msra.mxu0 0.0
  %3615 = vmatprep.subr.mxu0 0.0
  %3616 = vmatpush1.msra.mxu0 0.0
  %3617 = vmatprep.subr.mxu0 0.0
  %3618 = vmatpush1.msra.mxu0 0.0
  %3619 = vmatprep.subr.mxu0 0.0
  %3620 = vmatpush1.msra.mxu0 0.0
  %3621 = vmatprep.subr.mxu0 0.0
  %3622 = vmatpush1.msra.mxu0 %v3592
  %3623 = vmatprep.subr.mxu0 0.0
  %3624 = vmatpush1.msra.mxu0 %v3591
  %3625 = vmatprep.subr.mxu0 0.0
  %3626 = vmatpush1.msra.mxu0 %v3590
  %3627 = vmatprep.subr.mxu0 0.0
  %3628 = vmatpush1.msra.mxu0 %v3589
  %3629 = vmatprep.subr.mxu0 0.0
  %3630 = vmatpush2.msra.mxu0 0.0
  %3631 = vmatprep.subr.mxu0 0.0
  %3632 = vmatpush2.msra.mxu0 0.0
  %3633 = vmatprep.subr.mxu0 0.0
  %3634 = vmatpush2.msra.mxu0 0.0
  %3635 = vmatprep.subr.mxu0 0.0
  %3636 = vmatpush2.msra.mxu0 0.0
  %3637 = vmatprep.subr.mxu0 0.0
  %3638 = vmatpush2.msra.mxu0 0.0
  %3639 = vmatprep.subr.mxu0 0.0
  %3640 = vmatpush2.msra.mxu0 0.0
  %3641 = vmatprep.subr.mxu0 0.0
  %3642 = vmatpush2.msra.mxu0 0.0
  %3643 = vmatprep.subr.mxu0 0.0
  %3644 = vmatpush2.msra.mxu0 0.0
  %3645 = vmatprep.subr.mxu0 0.0
  %3646 = vmatpush2.msra.mxu0 0.0
  %3647 = vmatprep.subr.mxu0 0.0
  %3648 = vmatpush2.msra.mxu0 0.0
  %3649 = vmatprep.subr.mxu0 0.0
  %3650 = vmatpush2.msra.mxu0 0.0
  %3651 = vmatprep.subr.mxu0 0.0
  %3652 = vmatpush2.msra.mxu0 0.0
  %3653 = vmatprep.subr.mxu0 0.0
  %3654 = vmatpush2.msra.mxu0 0.0
  %3655 = vmatprep.subr.mxu0 0.0
  %3656 = vmatpush2.msra.mxu0 0.0
  %3657 = vmatprep.subr.mxu0 0.0
  %3658 = vmatpush2.msra.mxu0 0.0
  %3659 = vmatprep.subr.mxu0 0.0
  %3660 = vmatpush2.msra.mxu0 0.0
  %3661 = vmatprep.mubr.f32.mxu0 0.0
  %3662 = vmatmul.mubr.f32.gmra.mxu0 %v3595
  %v3663 = vpop.f32.mrf.mxu0
  %v3664 = vadd.f32 %v3593, %v3663
  %v3665 = vpop.f32.mrf.mxu0
  %3666 = vdwg.mxu0
  %v3667 = vmax.f32 %v3664, 0.0
  %v3668 = vld [vmem:[%s9] sm:$0xff]
  %v3669 = vld [vmem:[%s10] sm:$0x1]
  %v3671 = vsel %vm1415, %v3667, 0
  %3673 = vmatprep.subr.mxu0 0.0
  %3674 = vmatpush1.msra.mxu0 0.0
  %3675 = vmatprep.subr.mxu0 0.0
  %3676 = vmatpush1.msra.mxu0 0.0
  %3677 = vmatprep.subr.mxu0 0.0
  %3678 = vmatpush1.msra.mxu0 0.0
  %3679 = vmatprep.subr.mxu0 0.0
  %3680 = vmatpush1.msra.mxu0 0.0
  %3681 = vmatprep.subr.mxu0 0.0
  %3682 = vmatpush1.msra.mxu0 0.0
  %3683 = vmatprep.subr.mxu0 0.0
  %3684 = vmatpush1.msra.mxu0 0.0
  %3685 = vmatprep.subr.mxu0 0.0
  %3686 = vmatpush1.msra.mxu0 0.0
  %3687 = vmatprep.subr.mxu0 0.0
  %3688 = vmatpush1.msra.mxu0 0.0
  %3689 = vmatprep.subr.mxu0 0.0
  %3690 = vmatpush1.msra.mxu0 0.0
  %3691 = vmatprep.subr.mxu0 0.0
  %3692 = vmatpush1.msra.mxu0 0.0
  %3693 = vmatprep.subr.mxu0 0.0
  %3694 = vmatpush1.msra.mxu0 0.0
  %3695 = vmatprep.subr.mxu0 0.0
  %3696 = vmatpush1.msra.mxu0 0.0
  %3697 = vmatprep.subr.mxu0 0.0
  %3698 = vmatpush1.msra.mxu0 0.0
  %3699 = vmatprep.subr.mxu0 0.0
  %3700 = vmatpush1.msra.mxu0 0.0
  %3701 = vmatprep.subr.mxu0 0.0
  %3702 = vmatpush1.msra.mxu0 0.0
  %3703 = vmatprep.subr.mxu0 0.0
  %3704 = vmatpush1.msra.mxu0 %v3668
  %3705 = vmatprep.subr.mxu0 0.0
  %3706 = vmatpush2.msra.mxu0 0.0
  %3707 = vmatprep.subr.mxu0 0.0
  %3708 = vmatpush2.msra.mxu0 0.0
  %3709 = vmatprep.subr.mxu0 0.0
  %3710 = vmatpush2.msra.mxu0 0.0
  %3711 = vmatprep.subr.mxu0 0.0
  %3712 = vmatpush2.msra.mxu0 0.0
  %3713 = vmatprep.subr.mxu0 0.0
  %3714 = vmatpush2.msra.mxu0 0.0
  %3715 = vmatprep.subr.mxu0 0.0
  %3716 = vmatpush2.msra.mxu0 0.0
  %3717 = vmatprep.subr.mxu0 0.0
  %3718 = vmatpush2.msra.mxu0 0.0
  %3719 = vmatprep.subr.mxu0 0.0
  %3720 = vmatpush2.msra.mxu0 0.0
  %3721 = vmatprep.subr.mxu0 0.0
  %3722 = vmatpush2.msra.mxu0 0.0
  %3723 = vmatprep.subr.mxu0 0.0
  %3724 = vmatpush2.msra.mxu0 0.0
  %3725 = vmatprep.subr.mxu0 0.0
  %3726 = vmatpush2.msra.mxu0 0.0
  %3727 = vmatprep.subr.mxu0 0.0
  %3728 = vmatpush2.msra.mxu0 0.0
  %3729 = vmatprep.subr.mxu0 0.0
  %3730 = vmatpush2.msra.mxu0 0.0
  %3731 = vmatprep.subr.mxu0 0.0
  %3732 = vmatpush2.msra.mxu0 0.0
  %3733 = vmatprep.subr.mxu0 0.0
  %3734 = vmatpush2.msra.mxu0 0.0
  %3735 = vmatprep.subr.mxu0 0.0
  %3736 = vmatpush2.msra.mxu0 0.0
  %3737 = vmatprep.mubr.f32.mxu0 0.0
  %3738 = vmatmul.mubr.f32.gmra.mxu0 %v3671
  %v3739 = vpop.f32.mrf.mxu0
  %v3740 = vadd.f32 %v3669, %v3739
  %v3741 = vpop.f32.mrf.mxu0
  %3742 = vdwg.mxu0
  %v3743 = vadd.f32 %v3740, 3.0
  %v3744 = vmax.f32 %v3743, 0.0
  %v3745 = vmin.f32 %v3744, 6.0
  %v3746 = vmul.f32 %v3745, 0.16666667
  %3748 = vrot.lane.b32.xlu0 %v3746, 32
  %v3749 = vpop.permute.xlu0 %3748
  %3751 = vrot.lane.b32.xlu0 %v3746, 64
  %v3752 = vpop.permute.xlu0 %3751
  %3754 = vrot.lane.b32.xlu0 %v3746, 96
  %v3755 = vpop.permute.xlu0 %3754
  %v3757 = vsel %vm514, %v3746, %v3749
  %v3758 = vsel %vm1504, %v3757, %v3752
  %v3759 = vsel %vm603, %v3758, %v3755
  %v3760 = vlaneseq
  %v3761 = vshrl.u32 %v3760, 7
  %v3762 = vsub.s32 0, %v3761
  %v3763 = vrot.slane %v3759, %v3762
  %v3764 = vmul.f32 %v3348, %v3763
  %v3765 = vmul.f32 %v3349, %v3763
  %v3766 = vmul.f32 %v3350, %v3763
  %v3767 = vmul.f32 %v3351, %v3763
  %v3768 = vmul.f32 %v3352, %v3763
  %v3769 = vmul.f32 %v3353, %v3763
  %v3770 = vmul.f32 %v3354, %v3763
  %v3771 = vmul.f32 %v3355, %v3763
  %v3780 = vrot.slane %v3764, 7
  %v3781 = vrot.slane %v3765, 7
  %v3782 = vrot.slane %v3766, 7
  %v3783 = vrot.slane %v3767, 7
  %v3784 = vrot.slane %v3768, 7
  %v3785 = vsel %vm469, %v3780, %v3784
  %v3786 = vrot.slane %v3769, 7
  %v3787 = vsel %vm469, %v3781, %v3786
  %v3788 = vrot.slane %v3770, 7
  %v3789 = vsel %vm469, %v3782, %v3788
  %v3790 = vrot.slane %v3771, 7
  %v3791 = vsel %vm469, %v3783, %v3790
  %v3800 = vsel %vm469, 0.0, %v3780
  %v3801 = vsel %vm469, 0.0, %v3781
  %v3802 = vsel %vm469, 0.0, %v3782
  %v3803 = vsel %vm469, 0.0, %v3783
  %3808 = vrot.lane.b32.xlu0 %v3800, 32
  %v3809 = vpop.permute.xlu0 %3808
  %3810 = vrot.lane.b32.xlu0 %v3801, 32
  %v3811 = vpop.permute.xlu0 %3810
  %3812 = vrot.lane.b32.xlu0 %v3802, 32
  %v3813 = vpop.permute.xlu0 %3812
  %3814 = vrot.lane.b32.xlu0 %v3803, 32
  %v3815 = vpop.permute.xlu0 %3814
  %3816 = vrot.lane.b32.xlu0 %v3785, 32
  %v3817 = vpop.permute.xlu0 %3816
  %3818 = vrot.lane.b32.xlu0 %v3787, 32
  %v3819 = vpop.permute.xlu0 %3818
  %3820 = vrot.lane.b32.xlu0 %v3789, 32
  %v3821 = vpop.permute.xlu0 %3820
  %3822 = vrot.lane.b32.xlu0 %v3791, 32
  %v3823 = vpop.permute.xlu0 %3822
  %v3824 = vsel %vm514, %v3809, %v3811
  %v3825 = vsel %vm514, %v3811, %v3813
  %v3826 = vsel %vm514, %v3813, %v3815
  %v3827 = vsel %vm514, %v3817, %v3819
  %v3828 = vsel %vm514, %v3819, %v3821
  %v3829 = vsel %vm514, %v3821, %v3823
  %v3838 = vsel %vm514, 0.0, %v3809
  %v3839 = vsel %vm514, 0.0, %v3817
  %v3840 = vmul.f32 %v3838, %v1590
  %v3841 = vmul.f32 %v3824, %v1594
  %v3842 = vmul.f32 %v3825, %v1598
  %v3843 = vmul.f32 %v3826, %v1602
  %v3844 = vmul.f32 %v3839, %v1590
  %v3845 = vmul.f32 %v3827, %v1594
  %v3846 = vmul.f32 %v3828, %v1598
  %v3847 = vmul.f32 %v3829, %v1602
  %v3848 = vmul.f32 %v3800, %v1614
  %v3849 = vmul.f32 %v3801, %v1618
  %v3850 = vmul.f32 %v3802, %v1622
  %v3851 = vmul.f32 %v3803, %v1626
  %v3852 = vmul.f32 %v3785, %v1614
  %v3853 = vmul.f32 %v3787, %v1618
  %v3854 = vmul.f32 %v3789, %v1622
  %v3855 = vmul.f32 %v3791, %v1626
  %v3856 = vadd.f32 %v3840, %v3848
  %v3857 = vadd.f32 %v3841, %v3849
  %v3858 = vadd.f32 %v3842, %v3850
  %v3859 = vadd.f32 %v3843, %v3851
  %v3860 = vadd.f32 %v3844, %v3852
  %v3861 = vadd.f32 %v3845, %v3853
  %v3862 = vadd.f32 %v3846, %v3854
  %v3863 = vadd.f32 %v3847, %v3855
  %3864 = vrot.lane.b32.xlu0 %v3800, 96
  %v3865 = vpop.permute.xlu0 %3864
  %3866 = vrot.lane.b32.xlu0 %v3801, 96
  %v3867 = vpop.permute.xlu0 %3866
  %3868 = vrot.lane.b32.xlu0 %v3802, 96
  %v3869 = vpop.permute.xlu0 %3868
  %3870 = vrot.lane.b32.xlu0 %v3803, 96
  %v3871 = vpop.permute.xlu0 %3870
  %3872 = vrot.lane.b32.xlu0 %v3785, 96
  %v3873 = vpop.permute.xlu0 %3872
  %3874 = vrot.lane.b32.xlu0 %v3787, 96
  %v3875 = vpop.permute.xlu0 %3874
  %3876 = vrot.lane.b32.xlu0 %v3789, 96
  %v3877 = vpop.permute.xlu0 %3876
  %3878 = vrot.lane.b32.xlu0 %v3791, 96
  %v3879 = vpop.permute.xlu0 %3878
  %v3880 = vsel %vm603, %v3865, %v3867
  %v3881 = vsel %vm603, %v3867, %v3869
  %v3882 = vsel %vm603, %v3869, %v3871
  %v3883 = vsel %vm603, %v3873, %v3875
  %v3884 = vsel %vm603, %v3875, %v3877
  %v3885 = vsel %vm603, %v3877, %v3879
  %v3894 = vsel %vm603, %v3871, 0.0
  %v3895 = vsel %vm603, %v3879, 0.0
  %v3896 = vmul.f32 %v3880, %v1678
  %v3897 = vmul.f32 %v3881, %v1682
  %v3898 = vmul.f32 %v3882, %v1686
  %v3899 = vmul.f32 %v3894, %v1690
  %v3900 = vmul.f32 %v3883, %v1678
  %v3901 = vmul.f32 %v3884, %v1682
  %v3902 = vmul.f32 %v3885, %v1686
  %v3903 = vmul.f32 %v3895, %v1690
  %v3904 = vadd.f32 %v3856, %v3896
  %v3905 = vadd.f32 %v3857, %v3897
  %v3906 = vadd.f32 %v3858, %v3898
  %v3907 = vadd.f32 %v3859, %v3899
  %v3908 = vadd.f32 %v3860, %v3900
  %v3909 = vadd.f32 %v3861, %v3901
  %v3910 = vadd.f32 %v3862, %v3902
  %v3911 = vadd.f32 %v3863, %v3903
  %3912 = vrot.lane.b32.xlu0 %v3764, 32
  %v3913 = vpop.permute.xlu0 %3912
  %3914 = vrot.lane.b32.xlu0 %v3765, 32
  %v3915 = vpop.permute.xlu0 %3914
  %3916 = vrot.lane.b32.xlu0 %v3766, 32
  %v3917 = vpop.permute.xlu0 %3916
  %3918 = vrot.lane.b32.xlu0 %v3767, 32
  %v3919 = vpop.permute.xlu0 %3918
  %3920 = vrot.lane.b32.xlu0 %v3768, 32
  %v3921 = vpop.permute.xlu0 %3920
  %3922 = vrot.lane.b32.xlu0 %v3769, 32
  %v3923 = vpop.permute.xlu0 %3922
  %3924 = vrot.lane.b32.xlu0 %v3770, 32
  %v3925 = vpop.permute.xlu0 %3924
  %3926 = vrot.lane.b32.xlu0 %v3771, 32
  %v3927 = vpop.permute.xlu0 %3926
  %v3928 = vsel %vm514, %v3913, %v3915
  %v3929 = vsel %vm514, %v3915, %v3917
  %v3930 = vsel %vm514, %v3917, %v3919
  %v3931 = vsel %vm514, %v3921, %v3923
  %v3932 = vsel %vm514, %v3923, %v3925
  %v3933 = vsel %vm514, %v3925, %v3927
  %v3942 = vsel %vm514, 0.0, %v3913
  %v3943 = vsel %vm514, 0.0, %v3921
  %v3944 = vmul.f32 %v3942, %v1742
  %v3945 = vmul.f32 %v3928, %v1746
  %v3946 = vmul.f32 %v3929, %v1750
  %v3947 = vmul.f32 %v3930, %v1754
  %v3948 = vmul.f32 %v3943, %v1742
  %v3949 = vmul.f32 %v3931, %v1746
  %v3950 = vmul.f32 %v3932, %v1750
  %v3951 = vmul.f32 %v3933, %v1754
  %v3952 = vadd.f32 %v3904, %v3944
  %v3953 = vadd.f32 %v3905, %v3945
  %v3954 = vadd.f32 %v3906, %v3946
  %v3955 = vadd.f32 %v3907, %v3947
  %v3956 = vadd.f32 %v3908, %v3948
  %v3957 = vadd.f32 %v3909, %v3949
  %v3958 = vadd.f32 %v3910, %v3950
  %v3959 = vadd.f32 %v3911, %v3951
  %v3960 = vmul.f32 %v3764, %v1774
  %v3961 = vmul.f32 %v3765, %v1778
  %v3962 = vmul.f32 %v3766, %v1782
  %v3963 = vmul.f32 %v3767, %v1786
  %v3964 = vmul.f32 %v3768, %v1774
  %v3965 = vmul.f32 %v3769, %v1778
  %v3966 = vmul.f32 %v3770, %v1782
  %v3967 = vmul.f32 %v3771, %v1786
  %v3968 = vadd.f32 %v3952, %v3960
  %v3969 = vadd.f32 %v3953, %v3961
  %v3970 = vadd.f32 %v3954, %v3962
  %v3971 = vadd.f32 %v3955, %v3963
  %v3972 = vadd.f32 %v3956, %v3964
  %v3973 = vadd.f32 %v3957, %v3965
  %v3974 = vadd.f32 %v3958, %v3966
  %v3975 = vadd.f32 %v3959, %v3967
  %3976 = vrot.lane.b32.xlu0 %v3764, 96
  %v3977 = vpop.permute.xlu0 %3976
  %3978 = vrot.lane.b32.xlu0 %v3765, 96
  %v3979 = vpop.permute.xlu0 %3978
  %3980 = vrot.lane.b32.xlu0 %v3766, 96
  %v3981 = vpop.permute.xlu0 %3980
  %3982 = vrot.lane.b32.xlu0 %v3767, 96
  %v3983 = vpop.permute.xlu0 %3982
  %3984 = vrot.lane.b32.xlu0 %v3768, 96
  %v3985 = vpop.permute.xlu0 %3984
  %3986 = vrot.lane.b32.xlu0 %v3769, 96
  %v3987 = vpop.permute.xlu0 %3986
  %3988 = vrot.lane.b32.xlu0 %v3770, 96
  %v3989 = vpop.permute.xlu0 %3988
  %3990 = vrot.lane.b32.xlu0 %v3771, 96
  %v3991 = vpop.permute.xlu0 %3990
  %v3992 = vsel %vm603, %v3977, %v3979
  %v3993 = vsel %vm603, %v3979, %v3981
  %v3994 = vsel %vm603, %v3981, %v3983
  %v3995 = vsel %vm603, %v3985, %v3987
  %v3996 = vsel %vm603, %v3987, %v3989
  %v3997 = vsel %vm603, %v3989, %v3991
  %v4006 = vsel %vm603, %v3983, 0.0
  %v4007 = vsel %vm603, %v3991, 0.0
  %v4008 = vmul.f32 %v3992, %v1838
  %v4009 = vmul.f32 %v3993, %v1842
  %v4010 = vmul.f32 %v3994, %v1846
  %v4011 = vmul.f32 %v4006, %v1850
  %v4012 = vmul.f32 %v3995, %v1838
  %v4013 = vmul.f32 %v3996, %v1842
  %v4014 = vmul.f32 %v3997, %v1846
  %v4015 = vmul.f32 %v4007, %v1850
  %v4016 = vadd.f32 %v3968, %v4008
  %v4017 = vadd.f32 %v3969, %v4009
  %v4018 = vadd.f32 %v3970, %v4010
  %v4019 = vadd.f32 %v3971, %v4011
  %v4020 = vadd.f32 %v3972, %v4012
  %v4021 = vadd.f32 %v3973, %v4013
  %v4022 = vadd.f32 %v3974, %v4014
  %v4023 = vadd.f32 %v3975, %v4015
  %v4024 = vrot.slane %v3764, 1
  %v4025 = vrot.slane %v3768, 1
  %v4026 = vsel %vm812, %v4024, %v4025
  %v4027 = vrot.slane %v3765, 1
  %v4028 = vrot.slane %v3769, 1
  %v4029 = vsel %vm812, %v4027, %v4028
  %v4030 = vrot.slane %v3766, 1
  %v4031 = vrot.slane %v3770, 1
  %v4032 = vsel %vm812, %v4030, %v4031
  %v4033 = vrot.slane %v3767, 1
  %v4034 = vrot.slane %v3771, 1
  %v4035 = vsel %vm812, %v4033, %v4034
  %v4044 = vsel %vm812, %v4025, 0.0
  %v4045 = vsel %vm812, %v4028, 0.0
  %v4046 = vsel %vm812, %v4031, 0.0
  %v4047 = vsel %vm812, %v4034, 0.0
  %4052 = vrot.lane.b32.xlu0 %v4026, 32
  %v4053 = vpop.permute.xlu0 %4052
  %4054 = vrot.lane.b32.xlu0 %v4029, 32
  %v4055 = vpop.permute.xlu0 %4054
  %4056 = vrot.lane.b32.xlu0 %v4032, 32
  %v4057 = vpop.permute.xlu0 %4056
  %4058 = vrot.lane.b32.xlu0 %v4035, 32
  %v4059 = vpop.permute.xlu0 %4058
  %4060 = vrot.lane.b32.xlu0 %v4044, 32
  %v4061 = vpop.permute.xlu0 %4060
  %4062 = vrot.lane.b32.xlu0 %v4045, 32
  %v4063 = vpop.permute.xlu0 %4062
  %4064 = vrot.lane.b32.xlu0 %v4046, 32
  %v4065 = vpop.permute.xlu0 %4064
  %4066 = vrot.lane.b32.xlu0 %v4047, 32
  %v4067 = vpop.permute.xlu0 %4066
  %v4068 = vsel %vm514, %v4053, %v4055
  %v4069 = vsel %vm514, %v4055, %v4057
  %v4070 = vsel %vm514, %v4057, %v4059
  %v4071 = vsel %vm514, %v4061, %v4063
  %v4072 = vsel %vm514, %v4063, %v4065
  %v4073 = vsel %vm514, %v4065, %v4067
  %v4082 = vsel %vm514, 0.0, %v4053
  %v4083 = vsel %vm514, 0.0, %v4061
  %v4084 = vmul.f32 %v4082, %v1930
  %v4085 = vmul.f32 %v4068, %v1934
  %v4086 = vmul.f32 %v4069, %v1938
  %v4087 = vmul.f32 %v4070, %v1942
  %v4088 = vmul.f32 %v4083, %v1930
  %v4089 = vmul.f32 %v4071, %v1934
  %v4090 = vmul.f32 %v4072, %v1938
  %v4091 = vmul.f32 %v4073, %v1942
  %v4092 = vadd.f32 %v4016, %v4084
  %v4093 = vadd.f32 %v4017, %v4085
  %v4094 = vadd.f32 %v4018, %v4086
  %v4095 = vadd.f32 %v4019, %v4087
  %v4096 = vadd.f32 %v4020, %v4088
  %v4097 = vadd.f32 %v4021, %v4089
  %v4098 = vadd.f32 %v4022, %v4090
  %v4099 = vadd.f32 %v4023, %v4091
  %v4100 = vmul.f32 %v4026, %v1962
  %v4101 = vmul.f32 %v4029, %v1966
  %v4102 = vmul.f32 %v4032, %v1970
  %v4103 = vmul.f32 %v4035, %v1974
  %v4104 = vmul.f32 %v4044, %v1962
  %v4105 = vmul.f32 %v4045, %v1966
  %v4106 = vmul.f32 %v4046, %v1970
  %v4107 = vmul.f32 %v4047, %v1974
  %v4108 = vadd.f32 %v4092, %v4100
  %v4109 = vadd.f32 %v4093, %v4101
  %v4110 = vadd.f32 %v4094, %v4102
  %v4111 = vadd.f32 %v4095, %v4103
  %v4112 = vadd.f32 %v4096, %v4104
  %v4113 = vadd.f32 %v4097, %v4105
  %v4114 = vadd.f32 %v4098, %v4106
  %v4115 = vadd.f32 %v4099, %v4107
  %4116 = vrot.lane.b32.xlu0 %v4026, 96
  %v4117 = vpop.permute.xlu0 %4116
  %4118 = vrot.lane.b32.xlu0 %v4029, 96
  %v4119 = vpop.permute.xlu0 %4118
  %4120 = vrot.lane.b32.xlu0 %v4032, 96
  %v4121 = vpop.permute.xlu0 %4120
  %4122 = vrot.lane.b32.xlu0 %v4035, 96
  %v4123 = vpop.permute.xlu0 %4122
  %4124 = vrot.lane.b32.xlu0 %v4044, 96
  %v4125 = vpop.permute.xlu0 %4124
  %4126 = vrot.lane.b32.xlu0 %v4045, 96
  %v4127 = vpop.permute.xlu0 %4126
  %4128 = vrot.lane.b32.xlu0 %v4046, 96
  %v4129 = vpop.permute.xlu0 %4128
  %4130 = vrot.lane.b32.xlu0 %v4047, 96
  %v4131 = vpop.permute.xlu0 %4130
  %v4132 = vsel %vm603, %v4117, %v4119
  %v4133 = vsel %vm603, %v4119, %v4121
  %v4134 = vsel %vm603, %v4121, %v4123
  %v4135 = vsel %vm603, %v4125, %v4127
  %v4136 = vsel %vm603, %v4127, %v4129
  %v4137 = vsel %vm603, %v4129, %v4131
  %v4146 = vsel %vm603, %v4123, 0.0
  %v4147 = vsel %vm603, %v4131, 0.0
  %v4148 = vmul.f32 %v4132, %v2026
  %v4149 = vmul.f32 %v4133, %v2030
  %v4150 = vmul.f32 %v4134, %v2034
  %v4151 = vmul.f32 %v4146, %v2038
  %v4152 = vmul.f32 %v4135, %v2026
  %v4153 = vmul.f32 %v4136, %v2030
  %v4154 = vmul.f32 %v4137, %v2034
  %v4155 = vmul.f32 %v4147, %v2038
  %v4156 = vadd.f32 %v4108, %v4148
  %v4157 = vadd.f32 %v4109, %v4149
  %v4158 = vadd.f32 %v4110, %v4150
  %v4159 = vadd.f32 %v4111, %v4151
  %v4160 = vadd.f32 %v4112, %v4152
  %v4161 = vadd.f32 %v4113, %v4153
  %v4162 = vadd.f32 %v4114, %v4154
  %v4163 = vadd.f32 %v4115, %v4155
  %v4164 = vld [vmem:[%s13] sm:$0xf]
  %v4166 = vlaneseq
  %v4167 = vshrl.u32 %v4166, 7
  %v4168 = vsub.s32 0, %v4167
  %v4169 = vrot.slane %v4164, %v4168
  %v4170 = vlaneseq
  %v4171 = vshrl.u32 %v4170, 7
  %v4172 = vsub.s32 1, %v4171
  %v4173 = vrot.slane %v4164, %v4172
  %v4174 = vlaneseq
  %v4175 = vshrl.u32 %v4174, 7
  %v4176 = vsub.s32 2, %v4175
  %v4177 = vrot.slane %v4164, %v4176
  %v4178 = vlaneseq
  %v4179 = vshrl.u32 %v4178, 7
  %v4180 = vsub.s32 3, %v4179
  %v4181 = vrot.slane %v4164, %v4180
  %v4186 = vmul.f32 %v4156, %v4169
  %v4187 = vmul.f32 %v4157, %v4173
  %v4188 = vmul.f32 %v4158, %v4177
  %v4189 = vmul.f32 %v4159, %v4181
  %v4190 = vmul.f32 %v4160, %v4169
  %v4191 = vmul.f32 %v4161, %v4173
  %v4192 = vmul.f32 %v4162, %v4177
  %v4193 = vmul.f32 %v4163, %v4181
  %v4194 = vld [vmem:[%s14] sm:$0xf]
  %v4196 = vlaneseq
  %v4197 = vshrl.u32 %v4196, 7
  %v4198 = vsub.s32 0, %v4197
  %v4199 = vrot.slane %v4194, %v4198
  %v4200 = vlaneseq
  %v4201 = vshrl.u32 %v4200, 7
  %v4202 = vsub.s32 1, %v4201
  %v4203 = vrot.slane %v4194, %v4202
  %v4204 = vlaneseq
  %v4205 = vshrl.u32 %v4204, 7
  %v4206 = vsub.s32 2, %v4205
  %v4207 = vrot.slane %v4194, %v4206
  %v4208 = vlaneseq
  %v4209 = vshrl.u32 %v4208, 7
  %v4210 = vsub.s32 3, %v4209
  %v4211 = vrot.slane %v4194, %v4210
  %v4216 = vadd.f32 %v4186, %v4199
  %v4217 = vadd.f32 %v4187, %v4203
  %v4218 = vadd.f32 %v4188, %v4207
  %v4219 = vadd.f32 %v4189, %v4211
  %v4220 = vadd.f32 %v4190, %v4199
  %v4221 = vadd.f32 %v4191, %v4203
  %v4222 = vadd.f32 %v4192, %v4207
  %v4223 = vadd.f32 %v4193, %v4211
  %v4224 = vadd.f32 %v4216, 3.0
  %v4225 = vadd.f32 %v4217, 3.0
  %v4226 = vadd.f32 %v4218, 3.0
  %v4227 = vadd.f32 %v4219, 3.0
  %v4228 = vadd.f32 %v4220, 3.0
  %v4229 = vadd.f32 %v4221, 3.0
  %v4230 = vadd.f32 %v4222, 3.0
  %v4231 = vadd.f32 %v4223, 3.0
  %v4232 = vmax.f32 %v4224, 0.0
  %v4233 = vmax.f32 %v4225, 0.0
  %v4234 = vmax.f32 %v4226, 0.0
  %v4235 = vmax.f32 %v4227, 0.0
  %v4236 = vmax.f32 %v4228, 0.0
  %v4237 = vmax.f32 %v4229, 0.0
  %v4238 = vmax.f32 %v4230, 0.0
  %v4239 = vmax.f32 %v4231, 0.0
  %v4240 = vmin.f32 %v4232, 6.0
  %v4241 = vmin.f32 %v4233, 6.0
  %v4242 = vmin.f32 %v4234, 6.0
  %v4243 = vmin.f32 %v4235, 6.0
  %v4244 = vmin.f32 %v4236, 6.0
  %v4245 = vmin.f32 %v4237, 6.0
  %v4246 = vmin.f32 %v4238, 6.0
  %v4247 = vmin.f32 %v4239, 6.0
  %v4248 = vmul.f32 %v4216, %v4240
  %v4249 = vmul.f32 %v4217, %v4241
  %v4250 = vmul.f32 %v4218, %v4242
  %v4251 = vmul.f32 %v4219, %v4243
  %v4252 = vmul.f32 %v4220, %v4244
  %v4253 = vmul.f32 %v4221, %v4245
  %v4254 = vmul.f32 %v4222, %v4246
  %v4255 = vmul.f32 %v4223, %v4247
  %v4256 = vmul.f32 %v4248, 0.16666667
  %v4257 = vmul.f32 %v4249, 0.16666667
  %v4258 = vmul.f32 %v4250, 0.16666667
  %v4259 = vmul.f32 %v4251, 0.16666667
  %v4260 = vmul.f32 %v4252, 0.16666667
  %v4261 = vmul.f32 %v4253, 0.16666667
  %v4262 = vmul.f32 %v4254, 0.16666667
  %v4263 = vmul.f32 %v4255, 0.16666667
  %v4264 = vld [vmem:[%s15] sm:$0xff]
  %v4265 = vld [vmem:[%s15 + $0x8] sm:$0xff]
  %v4266 = vld [vmem:[%s15 + $0x10] sm:$0xff]
  %v4267 = vld [vmem:[%s15 + $0x18] sm:$0xff]
  %v4268 = vld [vmem:[%s15 + $0x20] sm:$0xff]
  %v4269 = vld [vmem:[%s15 + $0x28] sm:$0xff]
  %v4270 = vld [vmem:[%s15 + $0x30] sm:$0xff]
  %v4271 = vld [vmem:[%s15 + $0x38] sm:$0xff]
  %v4272 = vld [vmem:[%s15 + $0x40] sm:$0xff]
  %v4273 = vld [vmem:[%s15 + $0x48] sm:$0xff]
  %v4274 = vld [vmem:[%s15 + $0x50] sm:$0xff]
  %v4275 = vld [vmem:[%s15 + $0x58] sm:$0xff]
  %v4276 = vld [vmem:[%s15 + $0x60] sm:$0xff]
  %v4277 = vld [vmem:[%s15 + $0x68] sm:$0xff]
  %v4278 = vld [vmem:[%s15 + $0x70] sm:$0xff]
  %v4279 = vld [vmem:[%s15 + $0x78] sm:$0xff]
  %v4280 = vld [vmem:[%s15 + $0x80] sm:$0xff]
  %v4281 = vld [vmem:[%s15 + $0x88] sm:$0xff]
  %v4282 = vld [vmem:[%s15 + $0x90] sm:$0xff]
  %v4283 = vld [vmem:[%s15 + $0x98] sm:$0xff]
  %v4284 = vld [vmem:[%s15 + $0xa0] sm:$0xff]
  %v4285 = vld [vmem:[%s15 + $0xa8] sm:$0xff]
  %v4286 = vld [vmem:[%s15 + $0xb0] sm:$0xff]
  %v4287 = vld [vmem:[%s15 + $0xb8] sm:$0xff]
  %v4288 = vld [vmem:[%s15 + $0xc0] sm:$0xff]
  %v4289 = vld [vmem:[%s15 + $0xc8] sm:$0xff]
  %v4290 = vld [vmem:[%s15 + $0xd0] sm:$0xff]
  %v4291 = vld [vmem:[%s15 + $0xd8] sm:$0xff]
  %v4292 = vld [vmem:[%s15 + $0xe0] sm:$0xff]
  %v4293 = vld [vmem:[%s15 + $0xe8] sm:$0xff]
  %v4294 = vld [vmem:[%s15 + $0xf0] sm:$0xff]
  %v4295 = vld [vmem:[%s15 + $0xf8] sm:$0xff]
  %v4296 = vld [vmem:[%s15 + $0x100] sm:$0xff]
  %v4297 = vld [vmem:[%s15 + $0x108] sm:$0xff]
  %v4298 = vld [vmem:[%s15 + $0x110] sm:$0xff]
  %v4299 = vld [vmem:[%s15 + $0x118] sm:$0xff]
  %v4300 = vld [vmem:[%s15 + $0x120] sm:$0xff]
  %v4301 = vld [vmem:[%s15 + $0x128] sm:$0xff]
  %v4302 = vld [vmem:[%s15 + $0x130] sm:$0xff]
  %v4303 = vld [vmem:[%s15 + $0x138] sm:$0xff]
  %v4304 = vld [vmem:[%s15 + $0x140] sm:$0xff]
  %v4305 = vld [vmem:[%s15 + $0x148] sm:$0xff]
  %v4306 = vld [vmem:[%s15 + $0x150] sm:$0xff]
  %v4307 = vld [vmem:[%s15 + $0x158] sm:$0xff]
  %v4308 = vld [vmem:[%s15 + $0x160] sm:$0xff]
  %v4309 = vld [vmem:[%s15 + $0x168] sm:$0xff]
  %v4310 = vld [vmem:[%s15 + $0x170] sm:$0xff]
  %v4311 = vld [vmem:[%s15 + $0x178] sm:$0xff]
  %v4312 = vld [vmem:[%s15 + $0x180] sm:$0xff]
  %v4313 = vld [vmem:[%s15 + $0x188] sm:$0xff]
  %v4314 = vld [vmem:[%s15 + $0x190] sm:$0xff]
  %v4315 = vld [vmem:[%s15 + $0x198] sm:$0xff]
  %v4316 = vld [vmem:[%s15 + $0x1a0] sm:$0xff]
  %v4317 = vld [vmem:[%s15 + $0x1a8] sm:$0xff]
  %v4318 = vld [vmem:[%s15 + $0x1b0] sm:$0xff]
  %v4319 = vld [vmem:[%s15 + $0x1b8] sm:$0xff]
  %v4320 = vld [vmem:[%s15 + $0x1c0] sm:$0xff]
  %v4321 = vld [vmem:[%s15 + $0x1c8] sm:$0xff]
  %v4322 = vld [vmem:[%s15 + $0x1d0] sm:$0xff]
  %v4323 = vld [vmem:[%s15 + $0x1d8] sm:$0xff]
  %v4324 = vld [vmem:[%s15 + $0x1e0] sm:$0xff]
  %v4325 = vld [vmem:[%s15 + $0x1e8] sm:$0xff]
  %v4326 = vld [vmem:[%s15 + $0x1f0] sm:$0xff]
  %v4327 = vld [vmem:[%s15 + $0x1f8] sm:$0xff]
  %v4328 = vld [vmem:[%s15 + $0x200] sm:$0xff]
  %v4329 = vld [vmem:[%s15 + $0x208] sm:$0xff]
  %v4330 = vld [vmem:[%s15 + $0x210] sm:$0xff]
  %v4331 = vld [vmem:[%s15 + $0x218] sm:$0xff]
  %v4332 = vld [vmem:[%s15 + $0x220] sm:$0xff]
  %v4333 = vld [vmem:[%s15 + $0x228] sm:$0xff]
  %v4334 = vld [vmem:[%s15 + $0x230] sm:$0xff]
  %v4335 = vld [vmem:[%s15 + $0x238] sm:$0xff]
  %v4336 = vld [vmem:[%s15 + $0x240] sm:$0xff]
  %v4337 = vld [vmem:[%s15 + $0x248] sm:$0xff]
  %v4338 = vld [vmem:[%s15 + $0x250] sm:$0xff]
  %v4339 = vld [vmem:[%s15 + $0x258] sm:$0xff]
  %v4340 = vld [vmem:[%s15 + $0x260] sm:$0xff]
  %v4341 = vld [vmem:[%s15 + $0x268] sm:$0xff]
  %v4342 = vld [vmem:[%s15 + $0x270] sm:$0xff]
  %v4343 = vld [vmem:[%s15 + $0x278] sm:$0xff]
  %v4344 = vld [vmem:[%s15 + $0x280] sm:$0xff]
  %v4345 = vld [vmem:[%s15 + $0x288] sm:$0xff]
  %v4346 = vld [vmem:[%s15 + $0x290] sm:$0xff]
  %v4347 = vld [vmem:[%s15 + $0x298] sm:$0xff]
  %v4348 = vld [vmem:[%s15 + $0x2a0] sm:$0xff]
  %v4349 = vld [vmem:[%s15 + $0x2a8] sm:$0xff]
  %v4350 = vld [vmem:[%s15 + $0x2b0] sm:$0xff]
  %v4351 = vld [vmem:[%s15 + $0x2b8] sm:$0xff]
  %v4352 = vld [vmem:[%s15 + $0x2c0] sm:$0xff]
  %v4353 = vld [vmem:[%s15 + $0x2c8] sm:$0xff]
  %v4354 = vld [vmem:[%s15 + $0x2d0] sm:$0xff]
  %v4355 = vld [vmem:[%s15 + $0x2d8] sm:$0xff]
  %v4356 = vld [vmem:[%s15 + $0x2e0] sm:$0xff]
  %v4357 = vld [vmem:[%s15 + $0x2e8] sm:$0xff]
  %v4358 = vld [vmem:[%s15 + $0x2f0] sm:$0xff]
  %v4359 = vld [vmem:[%s15 + $0x2f8] sm:$0xff]
  %v4360 = vld [vmem:[%s15 + $0x300] sm:$0xff]
  %v4361 = vld [vmem:[%s15 + $0x308] sm:$0xff]
  %v4362 = vld [vmem:[%s15 + $0x310] sm:$0xff]
  %v4363 = vld [vmem:[%s15 + $0x318] sm:$0xff]
  %v4364 = vld [vmem:[%s15 + $0x320] sm:$0xff]
  %v4365 = vld [vmem:[%s15 + $0x328] sm:$0xff]
  %v4366 = vld [vmem:[%s15 + $0x330] sm:$0xff]
  %v4367 = vld [vmem:[%s15 + $0x338] sm:$0xff]
  %v4368 = vld [vmem:[%s15 + $0x340] sm:$0xff]
  %v4369 = vld [vmem:[%s15 + $0x348] sm:$0xff]
  %v4370 = vld [vmem:[%s15 + $0x350] sm:$0xff]
  %v4371 = vld [vmem:[%s15 + $0x358] sm:$0xff]
  %v4372 = vld [vmem:[%s15 + $0x360] sm:$0xff]
  %v4373 = vld [vmem:[%s15 + $0x368] sm:$0xff]
  %v4374 = vld [vmem:[%s15 + $0x370] sm:$0xff]
  %v4375 = vld [vmem:[%s15 + $0x378] sm:$0xff]
  %v4376 = vld [vmem:[%s15 + $0x380] sm:$0xff]
  %v4377 = vld [vmem:[%s15 + $0x388] sm:$0xff]
  %v4378 = vld [vmem:[%s15 + $0x390] sm:$0xff]
  %v4379 = vld [vmem:[%s15 + $0x398] sm:$0xff]
  %v4380 = vld [vmem:[%s15 + $0x3a0] sm:$0xff]
  %v4381 = vld [vmem:[%s15 + $0x3a8] sm:$0xff]
  %v4382 = vld [vmem:[%s15 + $0x3b0] sm:$0xff]
  %v4383 = vld [vmem:[%s15 + $0x3b8] sm:$0xff]
  %v4384 = vld [vmem:[%s15 + $0x3c0] sm:$0xff]
  %v4385 = vld [vmem:[%s15 + $0x3c8] sm:$0xff]
  %v4386 = vld [vmem:[%s15 + $0x3d0] sm:$0xff]
  %v4387 = vld [vmem:[%s15 + $0x3d8] sm:$0xff]
  %v4388 = vld [vmem:[%s15 + $0x3e0] sm:$0xff]
  %v4389 = vld [vmem:[%s15 + $0x3e8] sm:$0xff]
  %v4390 = vld [vmem:[%s15 + $0x3f0] sm:$0xff]
  %v4391 = vld [vmem:[%s15 + $0x3f8] sm:$0xff]
  %4392 = vmatprep.subr.mxu0 %v4295
  %4393 = vmatpush1.msra.mxu0 %v4294
  %4394 = vmatprep.subr.mxu0 %v4293
  %4395 = vmatpush1.msra.mxu0 %v4292
  %4396 = vmatprep.subr.mxu0 %v4291
  %4397 = vmatpush1.msra.mxu0 %v4290
  %4398 = vmatprep.subr.mxu0 %v4289
  %4399 = vmatpush1.msra.mxu0 %v4288
  %4400 = vmatprep.subr.mxu0 %v4287
  %4401 = vmatpush1.msra.mxu0 %v4286
  %4402 = vmatprep.subr.mxu0 %v4285
  %4403 = vmatpush1.msra.mxu0 %v4284
  %4404 = vmatprep.subr.mxu0 %v4283
  %4405 = vmatpush1.msra.mxu0 %v4282
  %4406 = vmatprep.subr.mxu0 %v4281
  %4407 = vmatpush1.msra.mxu0 %v4280
  %4408 = vmatprep.subr.mxu0 %v4279
  %4409 = vmatpush1.msra.mxu0 %v4278
  %4410 = vmatprep.subr.mxu0 %v4277
  %4411 = vmatpush1.msra.mxu0 %v4276
  %4412 = vmatprep.subr.mxu0 %v4275
  %4413 = vmatpush1.msra.mxu0 %v4274
  %4414 = vmatprep.subr.mxu0 %v4273
  %4415 = vmatpush1.msra.mxu0 %v4272
  %4416 = vmatprep.subr.mxu0 %v4271
  %4417 = vmatpush1.msra.mxu0 %v4270
  %4418 = vmatprep.subr.mxu0 %v4269
  %4419 = vmatpush1.msra.mxu0 %v4268
  %4420 = vmatprep.subr.mxu0 %v4267
  %4421 = vmatpush1.msra.mxu0 %v4266
  %4422 = vmatprep.subr.mxu0 %v4265
  %4423 = vmatpush1.msra.mxu0 %v4264
  %4424 = vmatprep.subr.mxu0 %v4327
  %4425 = vmatpush2.msra.mxu0 %v4326
  %4426 = vmatprep.subr.mxu0 %v4325
  %4427 = vmatpush2.msra.mxu0 %v4324
  %4428 = vmatprep.subr.mxu0 %v4323
  %4429 = vmatpush2.msra.mxu0 %v4322
  %4430 = vmatprep.subr.mxu0 %v4321
  %4431 = vmatpush2.msra.mxu0 %v4320
  %4432 = vmatprep.subr.mxu0 %v4319
  %4433 = vmatpush2.msra.mxu0 %v4318
  %4434 = vmatprep.subr.mxu0 %v4317
  %4435 = vmatpush2.msra.mxu0 %v4316
  %4436 = vmatprep.subr.mxu0 %v4315
  %4437 = vmatpush2.msra.mxu0 %v4314
  %4438 = vmatprep.subr.mxu0 %v4313
  %4439 = vmatpush2.msra.mxu0 %v4312
  %4440 = vmatprep.subr.mxu0 %v4311
  %4441 = vmatpush2.msra.mxu0 %v4310
  %4442 = vmatprep.subr.mxu0 %v4309
  %4443 = vmatpush2.msra.mxu0 %v4308
  %4444 = vmatprep.subr.mxu0 %v4307
  %4445 = vmatpush2.msra.mxu0 %v4306
  %4446 = vmatprep.subr.mxu0 %v4305
  %4447 = vmatpush2.msra.mxu0 %v4304
  %4448 = vmatprep.subr.mxu0 %v4303
  %4449 = vmatpush2.msra.mxu0 %v4302
  %4450 = vmatprep.subr.mxu0 %v4301
  %4451 = vmatpush2.msra.mxu0 %v4300
  %4452 = vmatprep.subr.mxu0 %v4299
  %4453 = vmatpush2.msra.mxu0 %v4298
  %4454 = vmatprep.subr.mxu0 %v4297
  %4455 = vmatpush2.msra.mxu0 %v4296
  %4456 = vmatprep.mubr.f32.mxu0 %v4257
  %4457 = vmatmul.mubr.f32.gmra.mxu0 %v4256
  %v4458 = vpop.f32.mrf.mxu0
  %v4459 = vadd.f32 0.0, %v4458
  %v4460 = vpop.f32.mrf.mxu0
  %v4461 = vadd.f32 0.0, %v4460
  %4462 = vmatprep.mubr.f32.mxu0 %v4261
  %4463 = vmatmul.mubr.f32.gmra.mxu0 %v4260
  %v4464 = vpop.f32.mrf.mxu0
  %v4465 = vadd.f32 0.0, %v4464
  %v4466 = vpop.f32.mrf.mxu0
  %v4467 = vadd.f32 0.0, %v4466
  %4468 = vdwg.mxu0
  %4469 = vmatprep.subr.mxu0 %v4359
  %4470 = vmatpush1.msra.mxu0 %v4358
  %4471 = vmatprep.subr.mxu0 %v4357
  %4472 = vmatpush1.msra.mxu0 %v4356
  %4473 = vmatprep.subr.mxu0 %v4355
  %4474 = vmatpush1.msra.mxu0 %v4354
  %4475 = vmatprep.subr.mxu0 %v4353
  %4476 = vmatpush1.msra.mxu0 %v4352
  %4477 = vmatprep.subr.mxu0 %v4351
  %4478 = vmatpush1.msra.mxu0 %v4350
  %4479 = vmatprep.subr.mxu0 %v4349
  %4480 = vmatpush1.msra.mxu0 %v4348
  %4481 = vmatprep.subr.mxu0 %v4347
  %4482 = vmatpush1.msra.mxu0 %v4346
  %4483 = vmatprep.subr.mxu0 %v4345
  %4484 = vmatpush1.msra.mxu0 %v4344
  %4485 = vmatprep.subr.mxu0 %v4343
  %4486 = vmatpush1.msra.mxu0 %v4342
  %4487 = vmatprep.subr.mxu0 %v4341
  %4488 = vmatpush1.msra.mxu0 %v4340
  %4489 = vmatprep.subr.mxu0 %v4339
  %4490 = vmatpush1.msra.mxu0 %v4338
  %4491 = vmatprep.subr.mxu0 %v4337
  %4492 = vmatpush1.msra.mxu0 %v4336
  %4493 = vmatprep.subr.mxu0 %v4335
  %4494 = vmatpush1.msra.mxu0 %v4334
  %4495 = vmatprep.subr.mxu0 %v4333
  %4496 = vmatpush1.msra.mxu0 %v4332
  %4497 = vmatprep.subr.mxu0 %v4331
  %4498 = vmatpush1.msra.mxu0 %v4330
  %4499 = vmatprep.subr.mxu0 %v4329
  %4500 = vmatpush1.msra.mxu0 %v4328
  %4501 = vmatprep.subr.mxu0 %v4391
  %4502 = vmatpush2.msra.mxu0 %v4390
  %4503 = vmatprep.subr.mxu0 %v4389
  %4504 = vmatpush2.msra.mxu0 %v4388
  %4505 = vmatprep.subr.mxu0 %v4387
  %4506 = vmatpush2.msra.mxu0 %v4386
  %4507 = vmatprep.subr.mxu0 %v4385
  %4508 = vmatpush2.msra.mxu0 %v4384
  %4509 = vmatprep.subr.mxu0 %v4383
  %4510 = vmatpush2.msra.mxu0 %v4382
  %4511 = vmatprep.subr.mxu0 %v4381
  %4512 = vmatpush2.msra.mxu0 %v4380
  %4513 = vmatprep.subr.mxu0 %v4379
  %4514 = vmatpush2.msra.mxu0 %v4378
  %4515 = vmatprep.subr.mxu0 %v4377
  %4516 = vmatpush2.msra.mxu0 %v4376
  %4517 = vmatprep.subr.mxu0 %v4375
  %4518 = vmatpush2.msra.mxu0 %v4374
  %4519 = vmatprep.subr.mxu0 %v4373
  %4520 = vmatpush2.msra.mxu0 %v4372
  %4521 = vmatprep.subr.mxu0 %v4371
  %4522 = vmatpush2.msra.mxu0 %v4370
  %4523 = vmatprep.subr.mxu0 %v4369
  %4524 = vmatpush2.msra.mxu0 %v4368
  %4525 = vmatprep.subr.mxu0 %v4367
  %4526 = vmatpush2.msra.mxu0 %v4366
  %4527 = vmatprep.subr.mxu0 %v4365
  %4528 = vmatpush2.msra.mxu0 %v4364
  %4529 = vmatprep.subr.mxu0 %v4363
  %4530 = vmatpush2.msra.mxu0 %v4362
  %4531 = vmatprep.subr.mxu0 %v4361
  %4532 = vmatpush2.msra.mxu0 %v4360
  %4533 = vmatprep.mubr.f32.mxu0 %v4259
  %4534 = vmatmul.mubr.f32.gmra.mxu0 %v4258
  %v4535 = vpop.f32.mrf.mxu0
  %v4536 = vadd.f32 %v4459, %v4535
  %v4537 = vpop.f32.mrf.mxu0
  %v4538 = vadd.f32 %v4461, %v4537
  %4539 = vmatprep.mubr.f32.mxu0 %v4263
  %4540 = vmatmul.mubr.f32.gmra.mxu0 %v4262
  %v4541 = vpop.f32.mrf.mxu0
  %v4542 = vadd.f32 %v4465, %v4541
  %v4543 = vpop.f32.mrf.mxu0
  %v4544 = vadd.f32 %v4467, %v4543
  %4545 = vdwg.mxu0
  %v4546 = vld [vmem:[%s16] sm:$0x3]
  %v4548 = vlaneseq
  %v4549 = vshrl.u32 %v4548, 7
  %v4550 = vsub.s32 0, %v4549
  %v4551 = vrot.slane %v4546, %v4550
  %v4552 = vlaneseq
  %v4553 = vshrl.u32 %v4552, 7
  %v4554 = vsub.s32 1, %v4553
  %v4555 = vrot.slane %v4546, %v4554
  %v4558 = vmul.f32 %v4536, %v4551
  %v4559 = vmul.f32 %v4538, %v4555
  %v4560 = vmul.f32 %v4542, %v4551
  %v4561 = vmul.f32 %v4544, %v4555
  %v4562 = vld [vmem:[%s17] sm:$0x3]
  %v4564 = vlaneseq
  %v4565 = vshrl.u32 %v4564, 7
  %v4566 = vsub.s32 0, %v4565
  %v4567 = vrot.slane %v4562, %v4566
  %v4568 = vlaneseq
  %v4569 = vshrl.u32 %v4568, 7
  %v4570 = vsub.s32 1, %v4569
  %v4571 = vrot.slane %v4562, %v4570
  %v4574 = vadd.f32 %v4558, %v4567
  %v4575 = vadd.f32 %v4559, %v4571
  %v4576 = vadd.f32 %v4560, %v4567
  %v4577 = vadd.f32 %v4561, %v4571
  %v4578 = vadd.f32 %v4574, %v2478
  %v4579 = vadd.f32 %v4575, %v2479
  %v4580 = vadd.f32 %v4576, %v2480
  %v4581 = vadd.f32 %v4577, %v2481
  %s4582 = scalar_lea.vmem %s18, 32
  %4583 = vst [vmem:[%s4582] sm:$0xff] %v4578
  %4584 = vst [vmem:[%s4582 + $0x8] sm:$0xff] %v4579
  %4585 = vst [vmem:[%s4582 + $0x10] sm:$0xff] %v4580
  %4586 = vst [vmem:[%s4582 + $0x18] sm:$0xff] %v4581
  // Predicated region
  $region74: #{bneck_pallas.1} parent=0 // pred_check
    _
  $region75: #{bneck_pallas.1} parent=0 // pred_check_branch
    %4588 = sbr.rel (0) target = $region77
  $region76: #{bneck_pallas.1} parent=0 // pred_region
    _
  $region77: #{bneck_pallas.1} parent=0 // pred_fallthru
    _
  // Predicated region
  $region78: #{bneck_pallas.1} parent=0 // pred_check
    _
  $region79: #{bneck_pallas.1} parent=0 // pred_check_branch
    %4590 = sbr.rel (0) target = $region81
  $region80: #{bneck_pallas.1} parent=0 // pred_region
    _
  $region81: #{bneck_pallas.1} parent=0 // pred_fallthru
    _

</llo_original>
